<compile_context>
chip_gen: v7x
topology: tpu7x:2x2x1
jax: 0.10.0
libtpu: 0.0.40
codegen_flags: <defaults>
</compile_context>

<pallas_src>
import numpy as np
import jax
import jax.numpy as jnp
from jax.experimental import pallas as pl
from jax.experimental.pallas import tpu as pltpu

# ---- constants mirroring the torch module ----
IS_ARG_TYPE = 0

# ---- small synthetic configuration consistent with the module ----
VOCAB_SIZE = 100
WORD_EMBED_SIZE = 32      # E
LSTM_HIDDEN = 128         # fixed at 128 in the module (bidirectional -> 256)
HIDDEN_DIM = 32           # hidden_dim == entity_dim == relation_dim (TransE, no doubling)
FEAT_DIM = 34             # id2features width (hard-coded 34 in word_layer)
NENTITY_RAW = 5
NENTITY_SYM = 10
NRELATION = 3
GAMMA = 12.0
EPSILON = 2.0
EMB_RANGE = (GAMMA + EPSILON) / HIDDEN_DIM
B = 2                     # batch of triples
T = 8                     # padded token-sequence length in id2text
BP = 8                    # batch rows per grid step = one full sublane tile


# ---------------------------------------------------------------------------
# Fused kernel (one batch chunk of BP triples):
#   BiLSTM (packed-sequence semantics) + time-mean
#   -> word_layer Linear + ReLU (split-K)
#   -> TransE score  gamma - ||h + r - t||_1
# ---------------------------------------------------------------------------
def fused_kge_kernel(x_ref,        # (T, BP, E)    f32  time-major token embeddings (chunk)
                     lens_ref,     # (2*BP, 1)     f32  [lens ; lens] for the chunk
                     invt_ref,     # (1, 1)        f32  exact 1 / max(seq_len) over batch
                     thr_ref,      # (T, 2*BP, 1)  f32  per-step time thresholds [s ; T-1-s]
                     diag_ref,     # (2*BP, 2*H)   f32  0/1 block-diagonal selector
                     feats_ref,    # (BP, 34)      f32
                     wih_ref,      # (E, 8*H)      bf16 [wih_fwd | wih_bwd]  gates (i,f,o,g)
                     bih_ref,      # (1, 8*H)      f32
                     whh_ref,      # (2*H, 4*H)    bf16 [whh_fwd ; whh_bwd]  gates (i,f,o,g)
                     wl_lstm_ref,  # (2*H, D)      bf16 word_layer rows for the lstm-mean part
                     wl_feat_ref,  # (34, D)       f32  word_layer rows for the feature part
                     wl_b_ref,     # (1, D)        f32
                     tail_ref,     # (BP, D)       f32
                     rel_ref,      # (BP, D)       f32
                     o_ref,        # (BP, 1)       f32  score
                     gx_ref):      # scratch VMEM (T, BP, 8*H) f32
    T_, BPk, E = x_ref.shape
    H = whh_ref.shape[0] // 2
    H3 = 3 * H
    H4 = 4 * H

    # ---- hoisted input projection: both directions + biases in ONE bf16 MXU matmul ----
    x2d = x_ref[...].reshape(T_ * BPk, E).astype(jnp.bfloat16)          # (T*BP, E)
    gx = (jnp.dot(x2d, wih_ref[...], preferred_element_type=jnp.float32)
          + bih_ref[...])                                               # (T*BP, 8H) f32
    gx_ref[...] = gx.reshape(T_, BPk, 2 * H4)                           # stage in VMEM

    lens2 = lens_ref[...]                                               # (2BP, 1)
    diag = diag_ref[...]                                                # (2BP, 2H) 0/1

    zeros = jnp.zeros((2 * BPk, H), jnp.float32)
    h = zeros                    # rows [:BP] forward state, rows [BP:] backward state
    c = zeros
    acc = zeros                  # masked time-sum of the direction outputs

    # Fully unrolled static loop (T_ is a trace-time constant); forward time tf = s,
    # backward time tb = T-1-s processed together in one fused step.
    for s in range(T_):
        tf = s
        tb = T_ - 1 - s

        # fused recurrent matmul: [[h_f,0],[0,h_b]] @ [whh_f ; whh_b]  (K = 2H = 256)
        lhs = (jnp.concatenate([h, h], axis=1) * diag).astype(jnp.bfloat16)     # (2BP, 2H)
        rec = jnp.dot(lhs, whh_ref[...], preferred_element_type=jnp.float32)    # (2BP, 4H)

        # sublane-aligned (8,128)-tiled loads of the staged gate pre-activations
        gx_t = jnp.concatenate([gx_ref[tf, :, 0:H4],
                                gx_ref[tb, :, H4:2 * H4]], axis=0)              # (2BP, 4H)
        g = rec + gx_t

        # gate order (i,f,o,g): one sigmoid slab + one tanh slab for BOTH directions
        sig = jax.nn.sigmoid(g[:, 0:H3])
        gg = jnp.tanh(g[:, H3:H4])
        i_g = sig[:, 0:H]
        f_g = sig[:, H:2 * H]
        o_g = sig[:, 2 * H:H3]

        c_new = f_g * c + i_g * gg
        h_new = o_g * jnp.tanh(c_new)

        # packed-sequence semantics: state only advances while t < len
        m = lens2 > thr_ref[s]                                                  # (2BP, 1)
        h = jnp.where(m, h_new, h)
        c = jnp.where(m, c_new, c)
        acc = acc + jnp.where(m, h_new, 0.0)    # padded positions contribute 0 to the mean

    # torch.mean over the pad_packed length == max(seq_len) of the whole batch (exact)
    mean = acc * invt_ref[...]                                                  # (2BP, H)
    mean_cat = jnp.concatenate([mean[0:BPk], mean[BPk:2 * BPk]],
                               axis=1).astype(jnp.bfloat16)                     # (BP, 2H)

    # ---- word_layer Linear + ReLU (split-K: bf16 K=256 lstm part + f32 K=34 features) ----
    head = (jnp.dot(mean_cat, wl_lstm_ref[...], preferred_element_type=jnp.float32)
            + jnp.dot(feats_ref[...], wl_feat_ref[...], preferred_element_type=jnp.float32)
            + wl_b_ref[...])
    head = jnp.maximum(head, 0.0)                                               # (BP, D)

    # ---- TransE (single mode): gamma - || h + r - t ||_1 (gamma baked as constant) ----
    diff = head + rel_ref[...] - tail_ref[...]
    o_ref[...] = GAMMA - jnp.sum(jnp.abs(diff), axis=-1, keepdims=True)


# ---------------------------------------------------------------------------
# Full forward (mode='single', relation_type == IS_ARG_TYPE, model='TransE')
# ---------------------------------------------------------------------------
def _reorder_gates(w):
    """Reorder the 4H gate axis from torch order (i,f,g,o) to kernel order (i,f,o,g)."""
    Hh = LSTM_HIDDEN
    return jnp.concatenate([w[..., 0:2 * Hh],
                            w[..., 3 * Hh:4 * Hh],
                            w[..., 2 * Hh:3 * Hh]], axis=-1)


@jax.jit
def kge_forward_single(params, sample, id2text, seq_lengths, id2features):
    Bsz = sample.shape[0]
    G = -(-Bsz // BP)            # cdiv
    PB = G * BP
    pad = PB - Bsz
    H = LSTM_HIDDEN
    E = WORD_EMBED_SIZE
    D = HIDDEN_DIM

    # glue gathers (embedding / index_select), exactly as the torch module does
    head_idx = sample[:, 0]
    tokens = id2text[head_idx]                                   # (B, T) int32
    lens = seq_lengths[head_idx].astype(jnp.float32)             # (B,)
    feats = id2features[head_idx]                                # (B, 34)
    x_emb = params["word_embeds"][tokens]                        # (B, T, E)
    tail = params["entity_embedding"][sample[:, 2] - NENTITY_RAW]    # (B, D)
    relation = params["relation_embedding"][sample[:, 1]]            # (B, D)

    # exact 1 / max(seq_len) of the whole batch (pad_packed + torch.mean over T_max)
    inv_tmax = (1.0 / jnp.max(lens)).reshape(1, 1)

    # pad batch rows to a full sublane tile (BP=8); padded rows have len=0 (fully masked)
    def padb(a):
        return jnp.pad(a, ((0, pad),) + ((0, 0),) * (a.ndim - 1))

    x_tm = jnp.transpose(padb(x_emb), (1, 0, 2))                 # (T, PB, E) time-major
    lens_p = padb(lens[:, None])                                 # (PB, 1)
    lens_dup = jnp.concatenate([lens_p.reshape(G, BP, 1)] * 2,
                               axis=1).reshape(G * 2 * BP, 1)    # [lens ; lens] per chunk
    feats_p = padb(feats)
    tail_p = padb(tail)
    rel_p = padb(relation)

    # data-independent kernel constants (step thresholds + block-diagonal selector)
    thr_np = np.empty((T, 2 * BP, 1), np.float32)
    for s in range(T):
        thr_np[s, :BP, 0] = s
        thr_np[s, BP:, 0] = T - 1 - s
    diag_np = np.zeros((2 * BP, 2 * H), np.float32)
    diag_np[:BP, :H] = 1.0
    diag_np[BP:, H:] = 1.0

    # pack + gate-reorder weights once; bf16 for MXU operands (f32 accumulation in-kernel)
    wih_cat = jnp.concatenate([_reorder_gates(params["wih_f"]),
                               _reorder_gates(params["wih_b"])], axis=1).astype(jnp.bfloat16)
    bih_cat = jnp.concatenate([_reorder_gates(params["b_f"]),
                               _reorder_gates(params["b_b"])], axis=1)
    whh_cat = jnp.concatenate([_reorder_gates(params["whh_f"]),
                               _reorder_gates(params["whh_b"])], axis=0).astype(jnp.bfloat16)
    wl_lstm = params["word_layer_w"][:2 * H].astype(jnp.bfloat16)    # (2H, D) lstm part
    wl_feat = params["word_layer_w"][2 * H:]                         # (34, D) feature part
    wl_b = params["word_layer_b"]                                    # (1, D)

    grid_spec = pltpu.PrefetchScalarGridSpec(
        num_scalar_prefetch=0,
        grid=(G,),
        in_specs=[
            pl.BlockSpec((T, BP, E), lambda g: (0, g, 0)),            # x (per-chunk)
            pl.BlockSpec((2 * BP, 1), lambda g: (g, 0)),              # lens (dup per chunk)
            pl.BlockSpec((1, 1), lambda g: (0, 0)),                   # 1/max(len)
            pl.BlockSpec((T, 2 * BP, 1), lambda g: (0, 0, 0)),        # step thresholds
            pl.BlockSpec((2 * BP, 2 * H), lambda g: (0, 0)),          # block-diag selector
            pl.BlockSpec((BP, FEAT_DIM), lambda g: (g, 0)),           # feats (per-chunk)
            pl.BlockSpec((E, 8 * H), lambda g: (0, 0)),               # wih   (resident)
            pl.BlockSpec((1, 8 * H), lambda g: (0, 0)),               # bih   (resident)
            pl.BlockSpec((2 * H, 4 * H), lambda g: (0, 0)),           # whh   (resident)
            pl.BlockSpec((2 * H, D), lambda g: (0, 0)),               # word_layer (lstm)
            pl.BlockSpec((FEAT_DIM, D), lambda g: (0, 0)),            # word_layer (feats)
            pl.BlockSpec((1, D), lambda g: (0, 0)),                   # word_layer bias
            pl.BlockSpec((BP, D), lambda g: (g, 0)),                  # tail (per-chunk)
            pl.BlockSpec((BP, D), lambda g: (g, 0)),                  # relation (per-chunk)
        ],
        out_specs=pl.BlockSpec((BP, 1), lambda g: (g, 0)),
        scratch_shapes=[pltpu.VMEM((T, BP, 8 * H), jnp.float32)],
    )

    scores = pl.pallas_call(
        fused_kge_kernel,
        out_shape=jax.ShapeDtypeStruct((PB, 1), jnp.float32),
        grid_spec=grid_spec,
        compiler_params=pltpu.CompilerParams(
            dimension_semantics=("parallel",)),      # batch chunks shard across TCs (v7x)
    )(x_tm, lens_dup, inv_tmax, jnp.asarray(thr_np), jnp.asarray(diag_np), feats_p,
      wih_cat, bih_cat, whh_cat, wl_lstm, wl_feat, wl_b, tail_p, rel_p)

    return scores[:Bsz]                               # (B, 1), matching torch 'single' mode


# ---------------------------------------------------------------------------
# Pure-JAX f32 reference (same math, no Pallas) for a sanity check
# ---------------------------------------------------------------------------
def ref_forward(params, sample, id2text, seq_lengths, id2features):
    head_idx = sample[:, 0]
    tokens = id2text[head_idx]
    lens = seq_lengths[head_idx].astype(jnp.float32)
    feats = id2features[head_idx]
    x = params["word_embeds"][tokens]                           # (B, T, E)
    H = LSTM_HIDDEN

    def run(wih, whh, b, reverse):
        h = jnp.zeros((B, H)); c = jnp.zeros((B, H)); acc = jnp.zeros((B, H))
        order = range(T - 1, -1, -1) if reverse else range(T)
        for t in order:
            x_t = x[:, t, :]
            g = x_t @ wih + h @ whh + b
            i = jax.nn.sigmoid(g[:, :H]); f = jax.nn.sigmoid(g[:, H:2 * H])
            gg = jnp.tanh(g[:, 2 * H:3 * H]); o = jax.nn.sigmoid(g[:, 3 * H:])
            c_new = f * c + i * gg
            h_new = o * jnp.tanh(c_new)
            m = (float(t) < lens).astype(jnp.float32)[:, None]
            h = m * h_new + (1 - m) * h
            c = m * c_new + (1 - m) * c
            acc = acc + m * h_new
        return acc

    acc_f = run(params["wih_f"], params["whh_f"], params["b_f"], False)
    acc_b = run(params["wih_b"], params["whh_b"], params["b_b"], True)
    lstm_mean = jnp.concatenate([acc_f, acc_b], axis=1) / jnp.max(lens)
    ent_in = jnp.concatenate([lstm_mean, feats], axis=1)
    head = jnp.maximum(ent_in @ params["word_layer_w"] + params["word_layer_b"], 0.0)
    tail = params["entity_embedding"][sample[:, 2] - NENTITY_RAW]
    relation = params["relation_embedding"][sample[:, 1]]
    return GAMMA - jnp.sum(jnp.abs(head + relation - tail), axis=-1, keepdims=True)


# ---------------------------------------------------------------------------
if __name__ == "__main__":
    key = jax.random.PRNGKey(0)
    ks = jax.random.split(key, 16)
    H = LSTM_HIDDEN
    k_lstm = 1.0 / np.sqrt(H)

    params = {
        "word_embeds": jax.random.normal(ks[0], (VOCAB_SIZE, WORD_EMBED_SIZE), jnp.float32),
        "wih_f": jax.random.uniform(ks[1], (WORD_EMBED_SIZE, 4 * H), jnp.float32, -k_lstm, k_lstm),
        "whh_f": jax.random.uniform(ks[2], (H, 4 * H), jnp.float32, -k_lstm, k_lstm),
        "b_f": jax.random.uniform(ks[3], (1, 4 * H), jnp.float32, -k_lstm, k_lstm),
        "wih_b": jax.random.uniform(ks[4], (WORD_EMBED_SIZE, 4 * H), jnp.float32, -k_lstm, k_lstm),
        "whh_b": jax.random.uniform(ks[5], (H, 4 * H), jnp.float32, -k_lstm, k_lstm),
        "b_b": jax.random.uniform(ks[6], (1, 4 * H), jnp.float32, -k_lstm, k_lstm),
        "word_layer_w": jax.random.uniform(ks[7], (2 * H + FEAT_DIM, HIDDEN_DIM),
                                           jnp.float32, -0.05, 0.05),
        "word_layer_b": jax.random.uniform(ks[8], (1, HIDDEN_DIM), jnp.float32, -0.05, 0.05),
        "entity_embedding": jax.random.uniform(ks[9], (NENTITY_SYM, HIDDEN_DIM),
                                               jnp.float32, -EMB_RANGE, EMB_RANGE),
        "relation_embedding": jax.random.uniform(ks[10], (NRELATION, HIDDEN_DIM),
                                                 jnp.float32, -EMB_RANGE, EMB_RANGE),
    }

    # synthetic "dataset" tensors
    id2text = jax.random.randint(ks[11], (NENTITY_RAW, T), 0, VOCAB_SIZE, jnp.int32)
    seq_lengths = jnp.array([6, 4, 8, 3, 5], jnp.int32)
    id2features = jax.random.normal(ks[12], (NENTITY_RAW, FEAT_DIM), jnp.float32)

    # batch of triples: (head_raw_entity, IS_ARG_TYPE, symbolic tail entity)
    sample = jnp.array([[0, IS_ARG_TYPE, NENTITY_RAW + 1],
                        [1, IS_ARG_TYPE, NENTITY_RAW + 3]], jnp.int32)

    score = kge_forward_single(params, sample, id2text, seq_lengths, id2features)
    score = jax.block_until_ready(score)

    # f32 reference; kernel uses bf16 MXU operands (f32 accumulation), hence the tolerance.
    ref = ref_forward(params, sample, id2text, seq_lengths, id2features)
    np.testing.assert_allclose(np.asarray(score), np.asarray(ref), rtol=1e-2, atol=2e-2)

    print("KERNEL_OK")
</pallas_src>

<mosaic_0001>
module attributes {stable_mosaic.version = 11 : i64} {
  func.func @fused_kge_kernel(%arg0: i32, %arg1: memref<8x8x32xf32, #tpu.memory_space<vmem>>, %arg2: memref<16x1xf32, #tpu.memory_space<vmem>>, %arg3: memref<1x1xf32, #tpu.memory_space<vmem>>, %arg4: memref<8x16x1xf32, #tpu.memory_space<vmem>>, %arg5: memref<16x256xf32, #tpu.memory_space<vmem>>, %arg6: memref<8x34xf32, #tpu.memory_space<vmem>>, %arg7: memref<32x1024xbf16, #tpu.memory_space<vmem>>, %arg8: memref<1x1024xf32, #tpu.memory_space<vmem>>, %arg9: memref<256x512xbf16, #tpu.memory_space<vmem>>, %arg10: memref<256x32xbf16, #tpu.memory_space<vmem>>, %arg11: memref<34x32xf32, #tpu.memory_space<vmem>>, %arg12: memref<1x32xf32, #tpu.memory_space<vmem>>, %arg13: memref<8x32xf32, #tpu.memory_space<vmem>>, %arg14: memref<8x32xf32, #tpu.memory_space<vmem>>, %arg15: memref<8x1xf32, #tpu.memory_space<vmem>>, %arg16: memref<8x8x1024xf32, #tpu.memory_space<vmem>>) attributes {dimension_semantics = [#tpu.dimension_semantics<parallel>], iteration_bounds = array<i64: 1>, scalar_prefetch = 0 : i64, scratch_operands = 1 : i64, tpu.core_type = #tpu.core_type<tc>, window_params = [{transform_indices = @transform_0, window_bounds = array<i64: 8, 8, 32>}, {transform_indices = @transform_1, window_bounds = array<i64: 16, 1>}, {pipeline_mode = #tpu.pipeline_mode<synchronous>, transform_indices = @transform_2, window_bounds = array<i64: 1, 1>}, {pipeline_mode = #tpu.pipeline_mode<synchronous>, transform_indices = @transform_3, window_bounds = array<i64: 8, 16, 1>}, {pipeline_mode = #tpu.pipeline_mode<synchronous>, transform_indices = @transform_4, window_bounds = array<i64: 16, 256>}, {transform_indices = @transform_5, window_bounds = array<i64: 8, 34>}, {pipeline_mode = #tpu.pipeline_mode<synchronous>, transform_indices = @transform_6, window_bounds = array<i64: 32, 1024>}, {pipeline_mode = #tpu.pipeline_mode<synchronous>, transform_indices = @transform_7, window_bounds = array<i64: 1, 1024>}, {pipeline_mode = #tpu.pipeline_mode<synchronous>, transform_indices = @transform_8, window_bounds = array<i64: 256, 512>}, {pipeline_mode = #tpu.pipeline_mode<synchronous>, transform_indices = @transform_9, window_bounds = array<i64: 256, 32>}, {pipeline_mode = #tpu.pipeline_mode<synchronous>, transform_indices = @transform_10, window_bounds = array<i64: 34, 32>}, {pipeline_mode = #tpu.pipeline_mode<synchronous>, transform_indices = @transform_11, window_bounds = array<i64: 1, 32>}, {transform_indices = @transform_12, window_bounds = array<i64: 8, 32>}, {transform_indices = @transform_13, window_bounds = array<i64: 8, 32>}, {transform_indices = @transform_14, window_bounds = array<i64: 8, 1>}]} {
    %c0 = arith.constant 0 : index
    %c0_0 = arith.constant 0 : index
    %c0_1 = arith.constant 0 : index
    %0 = vector.load %arg1[%c0, %c0_0, %c0_1] : memref<8x8x32xf32, #tpu.memory_space<vmem>>, vector<8x8x32xf32>
    %1 = vector.shape_cast %0 : vector<8x8x32xf32> to vector<64x32xf32>
    %2 = arith.truncf %1 : vector<64x32xf32> to vector<64x32xbf16>
    %c0_2 = arith.constant 0 : index
    %c0_3 = arith.constant 0 : index
    %3 = vector.load %arg7[%c0_2, %c0_3] : memref<32x1024xbf16, #tpu.memory_space<vmem>>, vector<32x1024xbf16>
    %cst = arith.constant dense<0.000000e+00> : vector<64x1024xf32>
    %4 = tpu.matmul %2, %3, %cst {dimension_numbers = #tpu.dot_dimension_numbers<[1], [0], [0], [1], [0, 0, 1, 1], [], []>} : vector<64x32xbf16>, vector<32x1024xbf16>, vector<64x1024xf32> -> vector<64x1024xf32>
    %c0_4 = arith.constant 0 : index
    %c0_5 = arith.constant 0 : index
    %5 = vector.load %arg8[%c0_4, %c0_5] : memref<1x1024xf32, #tpu.memory_space<vmem>>, vector<1x1024xf32>
    %6 = vector.broadcast %5 : vector<1x1024xf32> to vector<64x1024xf32>
    %7 = arith.addf %4, %6 : vector<64x1024xf32>
    %8 = vector.shape_cast %7 : vector<64x1024xf32> to vector<8x8x1024xf32>
    %c0_6 = arith.constant 0 : index
    %c0_7 = arith.constant 0 : index
    %c0_8 = arith.constant 0 : index
    %9 = vector.load %arg16[%c0_6, %c0_7, %c0_8] : memref<8x8x1024xf32, #tpu.memory_space<vmem>>, vector<8x8x1024xf32>
    tpu.vector_store %arg16[%c0_6, %c0_7, %c0_8], %8 {strides = array<i32>} : memref<8x8x1024xf32, #tpu.memory_space<vmem>>, vector<8x8x1024xf32>,
    %c0_9 = arith.constant 0 : index
    %c0_10 = arith.constant 0 : index
    %10 = vector.load %arg2[%c0_9, %c0_10] : memref<16x1xf32, #tpu.memory_space<vmem>>, vector<16x1xf32>
    %c0_11 = arith.constant 0 : index
    %c0_12 = arith.constant 0 : index
    %11 = vector.load %arg5[%c0_11, %c0_12] : memref<16x256xf32, #tpu.memory_space<vmem>>, vector<16x256xf32>
    %cst_13 = arith.constant 0.000000e+00 : f32
    %12 = vector.broadcast %cst_13 : f32 to vector<16x128xf32>
    %13 = tpu.concatenate %12, %12 in 1 : vector<16x128xf32>, vector<16x128xf32> -> vector<16x256xf32>
    %14 = arith.mulf %13, %11 : vector<16x256xf32>
    %15 = arith.truncf %14 : vector<16x256xf32> to vector<16x256xbf16>
    %c0_14 = arith.constant 0 : index
    %c0_15 = arith.constant 0 : index
    %16 = vector.load %arg9[%c0_14, %c0_15] : memref<256x512xbf16, #tpu.memory_space<vmem>>, vector<256x512xbf16>
    %cst_16 = arith.constant dense<0.000000e+00> : vector<16x512xf32>
    %17 = tpu.matmul %15, %16, %cst_16 {dimension_numbers = #tpu.dot_dimension_numbers<[1], [0], [0], [1], [0, 0, 1, 1], [], []>} : vector<16x256xbf16>, vector<256x512xbf16>, vector<16x512xf32> -> vector<16x512xf32>
    %c0_17 = arith.constant 0 : index
    %c0_18 = arith.constant 0 : index
    %c0_19 = arith.constant 0 : index
    %18 = vector.load %arg16[%c0_17, %c0_18, %c0_19] : memref<8x8x1024xf32, #tpu.memory_space<vmem>>, vector<1x8x512xf32>
    %19 = vector.shape_cast %18 : vector<1x8x512xf32> to vector<8x512xf32>
    %c7 = arith.constant 7 : index
    %c0_20 = arith.constant 0 : index
    %c512 = arith.constant 512 : index
    %20 = vector.load %arg16[%c7, %c0_20, %c512] : memref<8x8x1024xf32, #tpu.memory_space<vmem>>, vector<1x8x512xf32>
    %21 = vector.shape_cast %20 : vector<1x8x512xf32> to vector<8x512xf32>
    %22 = tpu.concatenate %19, %21 in 0 : vector<8x512xf32>, vector<8x512xf32> -> vector<16x512xf32>
    %23 = arith.addf %17, %22 : vector<16x512xf32>
    %24 = vector.extract_strided_slice %23 {offsets = [0, 0], sizes = [16, 384], strides = [1, 1]} : vector<16x512xf32> to vector<16x384xf32>
    %25 = arith.negf %24 : vector<16x384xf32>
    %26 = math.exp %25 : vector<16x384xf32>
    %cst_21 = arith.constant 1.000000e+00 : f32
    %27 = vector.broadcast %cst_21 : f32 to vector<16x384xf32>
    %28 = arith.addf %27, %26 : vector<16x384xf32>
    %29 = arith.divf %27, %28 : vector<16x384xf32>
    %30 = vector.extract_strided_slice %23 {offsets = [0, 384], sizes = [16, 128], strides = [1, 1]} : vector<16x512xf32> to vector<16x128xf32>
    %31 = math.tanh %30 : vector<16x128xf32>
    %32 = vector.extract_strided_slice %29 {offsets = [0, 0], sizes = [16, 128], strides = [1, 1]} : vector<16x384xf32> to vector<16x128xf32>
    %33 = vector.extract_strided_slice %29 {offsets = [0, 128], sizes = [16, 128], strides = [1, 1]} : vector<16x384xf32> to vector<16x128xf32>
    %34 = vector.extract_strided_slice %29 {offsets = [0, 256], sizes = [16, 128], strides = [1, 1]} : vector<16x384xf32> to vector<16x128xf32>
    %35 = arith.mulf %33, %12 : vector<16x128xf32>
    %36 = arith.mulf %32, %31 : vector<16x128xf32>
    %37 = arith.addf %35, %36 : vector<16x128xf32>
    %38 = math.tanh %37 : vector<16x128xf32>
    %39 = arith.mulf %34, %38 : vector<16x128xf32>
    %c0_22 = arith.constant 0 : index
    %c0_23 = arith.constant 0 : index
    %c0_24 = arith.constant 0 : index
    %40 = vector.load %arg4[%c0_22, %c0_23, %c0_24] : memref<8x16x1xf32, #tpu.memory_space<vmem>>, vector<1x16x1xf32>
    %41 = vector.shape_cast %40 : vector<1x16x1xf32> to vector<16x1xf32>
    %42 = arith.cmpf ogt, %10, %41 : vector<16x1xf32>
    %43 = vector.shape_cast %42 : vector<16x1xi1> to vector<16x1xi1>
    %44 = vector.broadcast %43 : vector<16x1xi1> to vector<16x128xi1>
    %45 = arith.select %44, %39, %12 : vector<16x128xi1>, vector<16x128xf32>
    %46 = vector.shape_cast %42 : vector<16x1xi1> to vector<16x1xi1>
    %47 = vector.broadcast %46 : vector<16x1xi1> to vector<16x128xi1>
    %48 = arith.select %47, %37, %12 : vector<16x128xi1>, vector<16x128xf32>
    %cst_25 = arith.constant 0.000000e+00 : f32
    %49 = vector.shape_cast %42 : vector<16x1xi1> to vector<16x1xi1>
    %50 = vector.broadcast %49 : vector<16x1xi1> to vector<16x128xi1>
    %51 = vector.broadcast %cst_25 : f32 to vector<16x128xf32>
    %52 = arith.select %50, %39, %51 : vector<16x128xi1>, vector<16x128xf32>
    %53 = arith.addf %12, %52 : vector<16x128xf32>
    %54 = tpu.concatenate %45, %45 in 1 : vector<16x128xf32>, vector<16x128xf32> -> vector<16x256xf32>
    %55 = arith.mulf %54, %11 : vector<16x256xf32>
    %56 = arith.truncf %55 : vector<16x256xf32> to vector<16x256xbf16>
    %c0_26 = arith.constant 0 : index
    %c0_27 = arith.constant 0 : index
    %57 = vector.load %arg9[%c0_26, %c0_27] : memref<256x512xbf16, #tpu.memory_space<vmem>>, vector<256x512xbf16>
    %cst_28 = arith.constant dense<0.000000e+00> : vector<16x512xf32>
    %58 = tpu.matmul %56, %57, %cst_28 {dimension_numbers = #tpu.dot_dimension_numbers<[1], [0], [0], [1], [0, 0, 1, 1], [], []>} : vector<16x256xbf16>, vector<256x512xbf16>, vector<16x512xf32> -> vector<16x512xf32>
    %c1 = arith.constant 1 : index
    %c0_29 = arith.constant 0 : index
    %c0_30 = arith.constant 0 : index
    %59 = vector.load %arg16[%c1, %c0_29, %c0_30] : memref<8x8x1024xf32, #tpu.memory_space<vmem>>, vector<1x8x512xf32>
    %60 = vector.shape_cast %59 : vector<1x8x512xf32> to vector<8x512xf32>
    %c6 = arith.constant 6 : index
    %c0_31 = arith.constant 0 : index
    %c512_32 = arith.constant 512 : index
    %61 = vector.load %arg16[%c6, %c0_31, %c512_32] : memref<8x8x1024xf32, #tpu.memory_space<vmem>>, vector<1x8x512xf32>
    %62 = vector.shape_cast %61 : vector<1x8x512xf32> to vector<8x512xf32>
    %63 = tpu.concatenate %60, %62 in 0 : vector<8x512xf32>, vector<8x512xf32> -> vector<16x512xf32>
    %64 = arith.addf %58, %63 : vector<16x512xf32>
    %65 = vector.extract_strided_slice %64 {offsets = [0, 0], sizes = [16, 384], strides = [1, 1]} : vector<16x512xf32> to vector<16x384xf32>
    %66 = arith.negf %65 : vector<16x384xf32>
    %67 = math.exp %66 : vector<16x384xf32>
    %cst_33 = arith.constant 1.000000e+00 : f32
    %68 = vector.broadcast %cst_33 : f32 to vector<16x384xf32>
    %69 = arith.addf %68, %67 : vector<16x384xf32>
    %70 = arith.divf %68, %69 : vector<16x384xf32>
    %71 = vector.extract_strided_slice %64 {offsets = [0, 384], sizes = [16, 128], strides = [1, 1]} : vector<16x512xf32> to vector<16x128xf32>
    %72 = math.tanh %71 : vector<16x128xf32>
    %73 = vector.extract_strided_slice %70 {offsets = [0, 0], sizes = [16, 128], strides = [1, 1]} : vector<16x384xf32> to vector<16x128xf32>
    %74 = vector.extract_strided_slice %70 {offsets = [0, 128], sizes = [16, 128], strides = [1, 1]} : vector<16x384xf32> to vector<16x128xf32>
    %75 = vector.extract_strided_slice %70 {offsets = [0, 256], sizes = [16, 128], strides = [1, 1]} : vector<16x384xf32> to vector<16x128xf32>
    %76 = arith.mulf %74, %48 : vector<16x128xf32>
    %77 = arith.mulf %73, %72 : vector<16x128xf32>
    %78 = arith.addf %76, %77 : vector<16x128xf32>
    %79 = math.tanh %78 : vector<16x128xf32>
    %80 = arith.mulf %75, %79 : vector<16x128xf32>
    %c1_34 = arith.constant 1 : index
    %c0_35 = arith.constant 0 : index
    %c0_36 = arith.constant 0 : index
    %81 = vector.load %arg4[%c1_34, %c0_35, %c0_36] : memref<8x16x1xf32, #tpu.memory_space<vmem>>, vector<1x16x1xf32>
    %82 = vector.shape_cast %81 : vector<1x16x1xf32> to vector<16x1xf32>
    %83 = arith.cmpf ogt, %10, %82 : vector<16x1xf32>
    %84 = vector.shape_cast %83 : vector<16x1xi1> to vector<16x1xi1>
    %85 = vector.broadcast %84 : vector<16x1xi1> to vector<16x128xi1>
    %86 = arith.select %85, %80, %45 : vector<16x128xi1>, vector<16x128xf32>
    %87 = vector.shape_cast %83 : vector<16x1xi1> to vector<16x1xi1>
    %88 = vector.broadcast %87 : vector<16x1xi1> to vector<16x128xi1>
    %89 = arith.select %88, %78, %48 : vector<16x128xi1>, vector<16x128xf32>
    %cst_37 = arith.constant 0.000000e+00 : f32
    %90 = vector.shape_cast %83 : vector<16x1xi1> to vector<16x1xi1>
    %91 = vector.broadcast %90 : vector<16x1xi1> to vector<16x128xi1>
    %92 = vector.broadcast %cst_37 : f32 to vector<16x128xf32>
    %93 = arith.select %91, %80, %92 : vector<16x128xi1>, vector<16x128xf32>
    %94 = arith.addf %53, %93 : vector<16x128xf32>
    %95 = tpu.concatenate %86, %86 in 1 : vector<16x128xf32>, vector<16x128xf32> -> vector<16x256xf32>
    %96 = arith.mulf %95, %11 : vector<16x256xf32>
    %97 = arith.truncf %96 : vector<16x256xf32> to vector<16x256xbf16>
    %c0_38 = arith.constant 0 : index
    %c0_39 = arith.constant 0 : index
    %98 = vector.load %arg9[%c0_38, %c0_39] : memref<256x512xbf16, #tpu.memory_space<vmem>>, vector<256x512xbf16>
    %cst_40 = arith.constant dense<0.000000e+00> : vector<16x512xf32>
    %99 = tpu.matmul %97, %98, %cst_40 {dimension_numbers = #tpu.dot_dimension_numbers<[1], [0], [0], [1], [0, 0, 1, 1], [], []>} : vector<16x256xbf16>, vector<256x512xbf16>, vector<16x512xf32> -> vector<16x512xf32>
    %c2 = arith.constant 2 : index
    %c0_41 = arith.constant 0 : index
    %c0_42 = arith.constant 0 : index
    %100 = vector.load %arg16[%c2, %c0_41, %c0_42] : memref<8x8x1024xf32, #tpu.memory_space<vmem>>, vector<1x8x512xf32>
    %101 = vector.shape_cast %100 : vector<1x8x512xf32> to vector<8x512xf32>
    %c5 = arith.constant 5 : index
    %c0_43 = arith.constant 0 : index
    %c512_44 = arith.constant 512 : index
    %102 = vector.load %arg16[%c5, %c0_43, %c512_44] : memref<8x8x1024xf32, #tpu.memory_space<vmem>>, vector<1x8x512xf32>
    %103 = vector.shape_cast %102 : vector<1x8x512xf32> to vector<8x512xf32>
    %104 = tpu.concatenate %101, %103 in 0 : vector<8x512xf32>, vector<8x512xf32> -> vector<16x512xf32>
    %105 = arith.addf %99, %104 : vector<16x512xf32>
    %106 = vector.extract_strided_slice %105 {offsets = [0, 0], sizes = [16, 384], strides = [1, 1]} : vector<16x512xf32> to vector<16x384xf32>
    %107 = arith.negf %106 : vector<16x384xf32>
    %108 = math.exp %107 : vector<16x384xf32>
    %cst_45 = arith.constant 1.000000e+00 : f32
    %109 = vector.broadcast %cst_45 : f32 to vector<16x384xf32>
    %110 = arith.addf %109, %108 : vector<16x384xf32>
    %111 = arith.divf %109, %110 : vector<16x384xf32>
    %112 = vector.extract_strided_slice %105 {offsets = [0, 384], sizes = [16, 128], strides = [1, 1]} : vector<16x512xf32> to vector<16x128xf32>
    %113 = math.tanh %112 : vector<16x128xf32>
    %114 = vector.extract_strided_slice %111 {offsets = [0, 0], sizes = [16, 128], strides = [1, 1]} : vector<16x384xf32> to vector<16x128xf32>
    %115 = vector.extract_strided_slice %111 {offsets = [0, 128], sizes = [16, 128], strides = [1, 1]} : vector<16x384xf32> to vector<16x128xf32>
    %116 = vector.extract_strided_slice %111 {offsets = [0, 256], sizes = [16, 128], strides = [1, 1]} : vector<16x384xf32> to vector<16x128xf32>
    %117 = arith.mulf %115, %89 : vector<16x128xf32>
    %118 = arith.mulf %114, %113 : vector<16x128xf32>
    %119 = arith.addf %117, %118 : vector<16x128xf32>
    %120 = math.tanh %119 : vector<16x128xf32>
    %121 = arith.mulf %116, %120 : vector<16x128xf32>
    %c2_46 = arith.constant 2 : index
    %c0_47 = arith.constant 0 : index
    %c0_48 = arith.constant 0 : index
    %122 = vector.load %arg4[%c2_46, %c0_47, %c0_48] : memref<8x16x1xf32, #tpu.memory_space<vmem>>, vector<1x16x1xf32>
    %123 = vector.shape_cast %122 : vector<1x16x1xf32> to vector<16x1xf32>
    %124 = arith.cmpf ogt, %10, %123 : vector<16x1xf32>
    %125 = vector.shape_cast %124 : vector<16x1xi1> to vector<16x1xi1>
    %126 = vector.broadcast %125 : vector<16x1xi1> to vector<16x128xi1>
    %127 = arith.select %126, %121, %86 : vector<16x128xi1>, vector<16x128xf32>
    %128 = vector.shape_cast %124 : vector<16x1xi1> to vector<16x1xi1>
    %129 = vector.broadcast %128 : vector<16x1xi1> to vector<16x128xi1>
    %130 = arith.select %129, %119, %89 : vector<16x128xi1>, vector<16x128xf32>
    %cst_49 = arith.constant 0.000000e+00 : f32
    %131 = vector.shape_cast %124 : vector<16x1xi1> to vector<16x1xi1>
    %132 = vector.broadcast %131 : vector<16x1xi1> to vector<16x128xi1>
    %133 = vector.broadcast %cst_49 : f32 to vector<16x128xf32>
    %134 = arith.select %132, %121, %133 : vector<16x128xi1>, vector<16x128xf32>
    %135 = arith.addf %94, %134 : vector<16x128xf32>
    %136 = tpu.concatenate %127, %127 in 1 : vector<16x128xf32>, vector<16x128xf32> -> vector<16x256xf32>
    %137 = arith.mulf %136, %11 : vector<16x256xf32>
    %138 = arith.truncf %137 : vector<16x256xf32> to vector<16x256xbf16>
    %c0_50 = arith.constant 0 : index
    %c0_51 = arith.constant 0 : index
    %139 = vector.load %arg9[%c0_50, %c0_51] : memref<256x512xbf16, #tpu.memory_space<vmem>>, vector<256x512xbf16>
    %cst_52 = arith.constant dense<0.000000e+00> : vector<16x512xf32>
    %140 = tpu.matmul %138, %139, %cst_52 {dimension_numbers = #tpu.dot_dimension_numbers<[1], [0], [0], [1], [0, 0, 1, 1], [], []>} : vector<16x256xbf16>, vector<256x512xbf16>, vector<16x512xf32> -> vector<16x512xf32>
    %c3 = arith.constant 3 : index
    %c0_53 = arith.constant 0 : index
    %c0_54 = arith.constant 0 : index
    %141 = vector.load %arg16[%c3, %c0_53, %c0_54] : memref<8x8x1024xf32, #tpu.memory_space<vmem>>, vector<1x8x512xf32>
    %142 = vector.shape_cast %141 : vector<1x8x512xf32> to vector<8x512xf32>
    %c4 = arith.constant 4 : index
    %c0_55 = arith.constant 0 : index
    %c512_56 = arith.constant 512 : index
    %143 = vector.load %arg16[%c4, %c0_55, %c512_56] : memref<8x8x1024xf32, #tpu.memory_space<vmem>>, vector<1x8x512xf32>
    %144 = vector.shape_cast %143 : vector<1x8x512xf32> to vector<8x512xf32>
    %145 = tpu.concatenate %142, %144 in 0 : vector<8x512xf32>, vector<8x512xf32> -> vector<16x512xf32>
    %146 = arith.addf %140, %145 : vector<16x512xf32>
    %147 = vector.extract_strided_slice %146 {offsets = [0, 0], sizes = [16, 384], strides = [1, 1]} : vector<16x512xf32> to vector<16x384xf32>
    %148 = arith.negf %147 : vector<16x384xf32>
    %149 = math.exp %148 : vector<16x384xf32>
    %cst_57 = arith.constant 1.000000e+00 : f32
    %150 = vector.broadcast %cst_57 : f32 to vector<16x384xf32>
    %151 = arith.addf %150, %149 : vector<16x384xf32>
    %152 = arith.divf %150, %151 : vector<16x384xf32>
    %153 = vector.extract_strided_slice %146 {offsets = [0, 384], sizes = [16, 128], strides = [1, 1]} : vector<16x512xf32> to vector<16x128xf32>
    %154 = math.tanh %153 : vector<16x128xf32>
    %155 = vector.extract_strided_slice %152 {offsets = [0, 0], sizes = [16, 128], strides = [1, 1]} : vector<16x384xf32> to vector<16x128xf32>
    %156 = vector.extract_strided_slice %152 {offsets = [0, 128], sizes = [16, 128], strides = [1, 1]} : vector<16x384xf32> to vector<16x128xf32>
    %157 = vector.extract_strided_slice %152 {offsets = [0, 256], sizes = [16, 128], strides = [1, 1]} : vector<16x384xf32> to vector<16x128xf32>
    %158 = arith.mulf %156, %130 : vector<16x128xf32>
    %159 = arith.mulf %155, %154 : vector<16x128xf32>
    %160 = arith.addf %158, %159 : vector<16x128xf32>
    %161 = math.tanh %160 : vector<16x128xf32>
    %162 = arith.mulf %157, %161 : vector<16x128xf32>
    %c3_58 = arith.constant 3 : index
    %c0_59 = arith.constant 0 : index
    %c0_60 = arith.constant 0 : index
    %163 = vector.load %arg4[%c3_58, %c0_59, %c0_60] : memref<8x16x1xf32, #tpu.memory_space<vmem>>, vector<1x16x1xf32>
    %164 = vector.shape_cast %163 : vector<1x16x1xf32> to vector<16x1xf32>
    %165 = arith.cmpf ogt, %10, %164 : vector<16x1xf32>
    %166 = vector.shape_cast %165 : vector<16x1xi1> to vector<16x1xi1>
    %167 = vector.broadcast %166 : vector<16x1xi1> to vector<16x128xi1>
    %168 = arith.select %167, %162, %127 : vector<16x128xi1>, vector<16x128xf32>
    %169 = vector.shape_cast %165 : vector<16x1xi1> to vector<16x1xi1>
    %170 = vector.broadcast %169 : vector<16x1xi1> to vector<16x128xi1>
    %171 = arith.select %170, %160, %130 : vector<16x128xi1>, vector<16x128xf32>
    %cst_61 = arith.constant 0.000000e+00 : f32
    %172 = vector.shape_cast %165 : vector<16x1xi1> to vector<16x1xi1>
    %173 = vector.broadcast %172 : vector<16x1xi1> to vector<16x128xi1>
    %174 = vector.broadcast %cst_61 : f32 to vector<16x128xf32>
    %175 = arith.select %173, %162, %174 : vector<16x128xi1>, vector<16x128xf32>
    %176 = arith.addf %135, %175 : vector<16x128xf32>
    %177 = tpu.concatenate %168, %168 in 1 : vector<16x128xf32>, vector<16x128xf32> -> vector<16x256xf32>
    %178 = arith.mulf %177, %11 : vector<16x256xf32>
    %179 = arith.truncf %178 : vector<16x256xf32> to vector<16x256xbf16>
    %c0_62 = arith.constant 0 : index
    %c0_63 = arith.constant 0 : index
    %180 = vector.load %arg9[%c0_62, %c0_63] : memref<256x512xbf16, #tpu.memory_space<vmem>>, vector<256x512xbf16>
    %cst_64 = arith.constant dense<0.000000e+00> : vector<16x512xf32>
    %181 = tpu.matmul %179, %180, %cst_64 {dimension_numbers = #tpu.dot_dimension_numbers<[1], [0], [0], [1], [0, 0, 1, 1], [], []>} : vector<16x256xbf16>, vector<256x512xbf16>, vector<16x512xf32> -> vector<16x512xf32>
    %c4_65 = arith.constant 4 : index
    %c0_66 = arith.constant 0 : index
    %c0_67 = arith.constant 0 : index
    %182 = vector.load %arg16[%c4_65, %c0_66, %c0_67] : memref<8x8x1024xf32, #tpu.memory_space<vmem>>, vector<1x8x512xf32>
    %183 = vector.shape_cast %182 : vector<1x8x512xf32> to vector<8x512xf32>
    %c3_68 = arith.constant 3 : index
    %c0_69 = arith.constant 0 : index
    %c512_70 = arith.constant 512 : index
    %184 = vector.load %arg16[%c3_68, %c0_69, %c512_70] : memref<8x8x1024xf32, #tpu.memory_space<vmem>>, vector<1x8x512xf32>
    %185 = vector.shape_cast %184 : vector<1x8x512xf32> to vector<8x512xf32>
    %186 = tpu.concatenate %183, %185 in 0 : vector<8x512xf32>, vector<8x512xf32> -> vector<16x512xf32>
    %187 = arith.addf %181, %186 : vector<16x512xf32>
    %188 = vector.extract_strided_slice %187 {offsets = [0, 0], sizes = [16, 384], strides = [1, 1]} : vector<16x512xf32> to vector<16x384xf32>
    %189 = arith.negf %188 : vector<16x384xf32>
    %190 = math.exp %189 : vector<16x384xf32>
    %cst_71 = arith.constant 1.000000e+00 : f32
    %191 = vector.broadcast %cst_71 : f32 to vector<16x384xf32>
    %192 = arith.addf %191, %190 : vector<16x384xf32>
    %193 = arith.divf %191, %192 : vector<16x384xf32>
    %194 = vector.extract_strided_slice %187 {offsets = [0, 384], sizes = [16, 128], strides = [1, 1]} : vector<16x512xf32> to vector<16x128xf32>
    %195 = math.tanh %194 : vector<16x128xf32>
    %196 = vector.extract_strided_slice %193 {offsets = [0, 0], sizes = [16, 128], strides = [1, 1]} : vector<16x384xf32> to vector<16x128xf32>
    %197 = vector.extract_strided_slice %193 {offsets = [0, 128], sizes = [16, 128], strides = [1, 1]} : vector<16x384xf32> to vector<16x128xf32>
    %198 = vector.extract_strided_slice %193 {offsets = [0, 256], sizes = [16, 128], strides = [1, 1]} : vector<16x384xf32> to vector<16x128xf32>
    %199 = arith.mulf %197, %171 : vector<16x128xf32>
    %200 = arith.mulf %196, %195 : vector<16x128xf32>
    %201 = arith.addf %199, %200 : vector<16x128xf32>
    %202 = math.tanh %201 : vector<16x128xf32>
    %203 = arith.mulf %198, %202 : vector<16x128xf32>
    %c4_72 = arith.constant 4 : index
    %c0_73 = arith.constant 0 : index
    %c0_74 = arith.constant 0 : index
    %204 = vector.load %arg4[%c4_72, %c0_73, %c0_74] : memref<8x16x1xf32, #tpu.memory_space<vmem>>, vector<1x16x1xf32>
    %205 = vector.shape_cast %204 : vector<1x16x1xf32> to vector<16x1xf32>
    %206 = arith.cmpf ogt, %10, %205 : vector<16x1xf32>
    %207 = vector.shape_cast %206 : vector<16x1xi1> to vector<16x1xi1>
    %208 = vector.broadcast %207 : vector<16x1xi1> to vector<16x128xi1>
    %209 = arith.select %208, %203, %168 : vector<16x128xi1>, vector<16x128xf32>
    %210 = vector.shape_cast %206 : vector<16x1xi1> to vector<16x1xi1>
    %211 = vector.broadcast %210 : vector<16x1xi1> to vector<16x128xi1>
    %212 = arith.select %211, %201, %171 : vector<16x128xi1>, vector<16x128xf32>
    %cst_75 = arith.constant 0.000000e+00 : f32
    %213 = vector.shape_cast %206 : vector<16x1xi1> to vector<16x1xi1>
    %214 = vector.broadcast %213 : vector<16x1xi1> to vector<16x128xi1>
    %215 = vector.broadcast %cst_75 : f32 to vector<16x128xf32>
    %216 = arith.select %214, %203, %215 : vector<16x128xi1>, vector<16x128xf32>
    %217 = arith.addf %176, %216 : vector<16x128xf32>
    %218 = tpu.concatenate %209, %209 in 1 : vector<16x128xf32>, vector<16x128xf32> -> vector<16x256xf32>
    %219 = arith.mulf %218, %11 : vector<16x256xf32>
    %220 = arith.truncf %219 : vector<16x256xf32> to vector<16x256xbf16>
    %c0_76 = arith.constant 0 : index
    %c0_77 = arith.constant 0 : index
    %221 = vector.load %arg9[%c0_76, %c0_77] : memref<256x512xbf16, #tpu.memory_space<vmem>>, vector<256x512xbf16>
    %cst_78 = arith.constant dense<0.000000e+00> : vector<16x512xf32>
    %222 = tpu.matmul %220, %221, %cst_78 {dimension_numbers = #tpu.dot_dimension_numbers<[1], [0], [0], [1], [0, 0, 1, 1], [], []>} : vector<16x256xbf16>, vector<256x512xbf16>, vector<16x512xf32> -> vector<16x512xf32>
    %c5_79 = arith.constant 5 : index
    %c0_80 = arith.constant 0 : index
    %c0_81 = arith.constant 0 : index
    %223 = vector.load %arg16[%c5_79, %c0_80, %c0_81] : memref<8x8x1024xf32, #tpu.memory_space<vmem>>, vector<1x8x512xf32>
    %224 = vector.shape_cast %223 : vector<1x8x512xf32> to vector<8x512xf32>
    %c2_82 = arith.constant 2 : index
    %c0_83 = arith.constant 0 : index
    %c512_84 = arith.constant 512 : index
    %225 = vector.load %arg16[%c2_82, %c0_83, %c512_84] : memref<8x8x1024xf32, #tpu.memory_space<vmem>>, vector<1x8x512xf32>
    %226 = vector.shape_cast %225 : vector<1x8x512xf32> to vector<8x512xf32>
    %227 = tpu.concatenate %224, %226 in 0 : vector<8x512xf32>, vector<8x512xf32> -> vector<16x512xf32>
    %228 = arith.addf %222, %227 : vector<16x512xf32>
    %229 = vector.extract_strided_slice %228 {offsets = [0, 0], sizes = [16, 384], strides = [1, 1]} : vector<16x512xf32> to vector<16x384xf32>
    %230 = arith.negf %229 : vector<16x384xf32>
    %231 = math.exp %230 : vector<16x384xf32>
    %cst_85 = arith.constant 1.000000e+00 : f32
    %232 = vector.broadcast %cst_85 : f32 to vector<16x384xf32>
    %233 = arith.addf %232, %231 : vector<16x384xf32>
    %234 = arith.divf %232, %233 : vector<16x384xf32>
    %235 = vector.extract_strided_slice %228 {offsets = [0, 384], sizes = [16, 128], strides = [1, 1]} : vector<16x512xf32> to vector<16x128xf32>
    %236 = math.tanh %235 : vector<16x128xf32>
    %237 = vector.extract_strided_slice %234 {offsets = [0, 0], sizes = [16, 128], strides = [1, 1]} : vector<16x384xf32> to vector<16x128xf32>
    %238 = vector.extract_strided_slice %234 {offsets = [0, 128], sizes = [16, 128], strides = [1, 1]} : vector<16x384xf32> to vector<16x128xf32>
    %239 = vector.extract_strided_slice %234 {offsets = [0, 256], sizes = [16, 128], strides = [1, 1]} : vector<16x384xf32> to vector<16x128xf32>
    %240 = arith.mulf %238, %212 : vector<16x128xf32>
    %241 = arith.mulf %237, %236 : vector<16x128xf32>
    %242 = arith.addf %240, %241 : vector<16x128xf32>
    %243 = math.tanh %242 : vector<16x128xf32>
    %244 = arith.mulf %239, %243 : vector<16x128xf32>
    %c5_86 = arith.constant 5 : index
    %c0_87 = arith.constant 0 : index
    %c0_88 = arith.constant 0 : index
    %245 = vector.load %arg4[%c5_86, %c0_87, %c0_88] : memref<8x16x1xf32, #tpu.memory_space<vmem>>, vector<1x16x1xf32>
    %246 = vector.shape_cast %245 : vector<1x16x1xf32> to vector<16x1xf32>
    %247 = arith.cmpf ogt, %10, %246 : vector<16x1xf32>
    %248 = vector.shape_cast %247 : vector<16x1xi1> to vector<16x1xi1>
    %249 = vector.broadcast %248 : vector<16x1xi1> to vector<16x128xi1>
    %250 = arith.select %249, %244, %209 : vector<16x128xi1>, vector<16x128xf32>
    %251 = vector.shape_cast %247 : vector<16x1xi1> to vector<16x1xi1>
    %252 = vector.broadcast %251 : vector<16x1xi1> to vector<16x128xi1>
    %253 = arith.select %252, %242, %212 : vector<16x128xi1>, vector<16x128xf32>
    %cst_89 = arith.constant 0.000000e+00 : f32
    %254 = vector.shape_cast %247 : vector<16x1xi1> to vector<16x1xi1>
    %255 = vector.broadcast %254 : vector<16x1xi1> to vector<16x128xi1>
    %256 = vector.broadcast %cst_89 : f32 to vector<16x128xf32>
    %257 = arith.select %255, %244, %256 : vector<16x128xi1>, vector<16x128xf32>
    %258 = arith.addf %217, %257 : vector<16x128xf32>
    %259 = tpu.concatenate %250, %250 in 1 : vector<16x128xf32>, vector<16x128xf32> -> vector<16x256xf32>
    %260 = arith.mulf %259, %11 : vector<16x256xf32>
    %261 = arith.truncf %260 : vector<16x256xf32> to vector<16x256xbf16>
    %c0_90 = arith.constant 0 : index
    %c0_91 = arith.constant 0 : index
    %262 = vector.load %arg9[%c0_90, %c0_91] : memref<256x512xbf16, #tpu.memory_space<vmem>>, vector<256x512xbf16>
    %cst_92 = arith.constant dense<0.000000e+00> : vector<16x512xf32>
    %263 = tpu.matmul %261, %262, %cst_92 {dimension_numbers = #tpu.dot_dimension_numbers<[1], [0], [0], [1], [0, 0, 1, 1], [], []>} : vector<16x256xbf16>, vector<256x512xbf16>, vector<16x512xf32> -> vector<16x512xf32>
    %c6_93 = arith.constant 6 : index
    %c0_94 = arith.constant 0 : index
    %c0_95 = arith.constant 0 : index
    %264 = vector.load %arg16[%c6_93, %c0_94, %c0_95] : memref<8x8x1024xf32, #tpu.memory_space<vmem>>, vector<1x8x512xf32>
    %265 = vector.shape_cast %264 : vector<1x8x512xf32> to vector<8x512xf32>
    %c1_96 = arith.constant 1 : index
    %c0_97 = arith.constant 0 : index
    %c512_98 = arith.constant 512 : index
    %266 = vector.load %arg16[%c1_96, %c0_97, %c512_98] : memref<8x8x1024xf32, #tpu.memory_space<vmem>>, vector<1x8x512xf32>
    %267 = vector.shape_cast %266 : vector<1x8x512xf32> to vector<8x512xf32>
    %268 = tpu.concatenate %265, %267 in 0 : vector<8x512xf32>, vector<8x512xf32> -> vector<16x512xf32>
    %269 = arith.addf %263, %268 : vector<16x512xf32>
    %270 = vector.extract_strided_slice %269 {offsets = [0, 0], sizes = [16, 384], strides = [1, 1]} : vector<16x512xf32> to vector<16x384xf32>
    %271 = arith.negf %270 : vector<16x384xf32>
    %272 = math.exp %271 : vector<16x384xf32>
    %cst_99 = arith.constant 1.000000e+00 : f32
    %273 = vector.broadcast %cst_99 : f32 to vector<16x384xf32>
    %274 = arith.addf %273, %272 : vector<16x384xf32>
    %275 = arith.divf %273, %274 : vector<16x384xf32>
    %276 = vector.extract_strided_slice %269 {offsets = [0, 384], sizes = [16, 128], strides = [1, 1]} : vector<16x512xf32> to vector<16x128xf32>
    %277 = math.tanh %276 : vector<16x128xf32>
    %278 = vector.extract_strided_slice %275 {offsets = [0, 0], sizes = [16, 128], strides = [1, 1]} : vector<16x384xf32> to vector<16x128xf32>
    %279 = vector.extract_strided_slice %275 {offsets = [0, 128], sizes = [16, 128], strides = [1, 1]} : vector<16x384xf32> to vector<16x128xf32>
    %280 = vector.extract_strided_slice %275 {offsets = [0, 256], sizes = [16, 128], strides = [1, 1]} : vector<16x384xf32> to vector<16x128xf32>
    %281 = arith.mulf %279, %253 : vector<16x128xf32>
    %282 = arith.mulf %278, %277 : vector<16x128xf32>
    %283 = arith.addf %281, %282 : vector<16x128xf32>
    %284 = math.tanh %283 : vector<16x128xf32>
    %285 = arith.mulf %280, %284 : vector<16x128xf32>
    %c6_100 = arith.constant 6 : index
    %c0_101 = arith.constant 0 : index
    %c0_102 = arith.constant 0 : index
    %286 = vector.load %arg4[%c6_100, %c0_101, %c0_102] : memref<8x16x1xf32, #tpu.memory_space<vmem>>, vector<1x16x1xf32>
    %287 = vector.shape_cast %286 : vector<1x16x1xf32> to vector<16x1xf32>
    %288 = arith.cmpf ogt, %10, %287 : vector<16x1xf32>
    %289 = vector.shape_cast %288 : vector<16x1xi1> to vector<16x1xi1>
    %290 = vector.broadcast %289 : vector<16x1xi1> to vector<16x128xi1>
    %291 = arith.select %290, %285, %250 : vector<16x128xi1>, vector<16x128xf32>
    %292 = vector.shape_cast %288 : vector<16x1xi1> to vector<16x1xi1>
    %293 = vector.broadcast %292 : vector<16x1xi1> to vector<16x128xi1>
    %294 = arith.select %293, %283, %253 : vector<16x128xi1>, vector<16x128xf32>
    %cst_103 = arith.constant 0.000000e+00 : f32
    %295 = vector.shape_cast %288 : vector<16x1xi1> to vector<16x1xi1>
    %296 = vector.broadcast %295 : vector<16x1xi1> to vector<16x128xi1>
    %297 = vector.broadcast %cst_103 : f32 to vector<16x128xf32>
    %298 = arith.select %296, %285, %297 : vector<16x128xi1>, vector<16x128xf32>
    %299 = arith.addf %258, %298 : vector<16x128xf32>
    %300 = tpu.concatenate %291, %291 in 1 : vector<16x128xf32>, vector<16x128xf32> -> vector<16x256xf32>
    %301 = arith.mulf %300, %11 : vector<16x256xf32>
    %302 = arith.truncf %301 : vector<16x256xf32> to vector<16x256xbf16>
    %c0_104 = arith.constant 0 : index
    %c0_105 = arith.constant 0 : index
    %303 = vector.load %arg9[%c0_104, %c0_105] : memref<256x512xbf16, #tpu.memory_space<vmem>>, vector<256x512xbf16>
    %cst_106 = arith.constant dense<0.000000e+00> : vector<16x512xf32>
    %304 = tpu.matmul %302, %303, %cst_106 {dimension_numbers = #tpu.dot_dimension_numbers<[1], [0], [0], [1], [0, 0, 1, 1], [], []>} : vector<16x256xbf16>, vector<256x512xbf16>, vector<16x512xf32> -> vector<16x512xf32>
    %c7_107 = arith.constant 7 : index
    %c0_108 = arith.constant 0 : index
    %c0_109 = arith.constant 0 : index
    %305 = vector.load %arg16[%c7_107, %c0_108, %c0_109] : memref<8x8x1024xf32, #tpu.memory_space<vmem>>, vector<1x8x512xf32>
    %306 = vector.shape_cast %305 : vector<1x8x512xf32> to vector<8x512xf32>
    %c0_110 = arith.constant 0 : index
    %c0_111 = arith.constant 0 : index
    %c512_112 = arith.constant 512 : index
    %307 = vector.load %arg16[%c0_110, %c0_111, %c512_112] : memref<8x8x1024xf32, #tpu.memory_space<vmem>>, vector<1x8x512xf32>
    %308 = vector.shape_cast %307 : vector<1x8x512xf32> to vector<8x512xf32>
    %309 = tpu.concatenate %306, %308 in 0 : vector<8x512xf32>, vector<8x512xf32> -> vector<16x512xf32>
    %310 = arith.addf %304, %309 : vector<16x512xf32>
    %311 = vector.extract_strided_slice %310 {offsets = [0, 0], sizes = [16, 384], strides = [1, 1]} : vector<16x512xf32> to vector<16x384xf32>
    %312 = arith.negf %311 : vector<16x384xf32>
    %313 = math.exp %312 : vector<16x384xf32>
    %cst_113 = arith.constant 1.000000e+00 : f32
    %314 = vector.broadcast %cst_113 : f32 to vector<16x384xf32>
    %315 = arith.addf %314, %313 : vector<16x384xf32>
    %316 = arith.divf %314, %315 : vector<16x384xf32>
    %317 = vector.extract_strided_slice %310 {offsets = [0, 384], sizes = [16, 128], strides = [1, 1]} : vector<16x512xf32> to vector<16x128xf32>
    %318 = math.tanh %317 : vector<16x128xf32>
    %319 = vector.extract_strided_slice %316 {offsets = [0, 0], sizes = [16, 128], strides = [1, 1]} : vector<16x384xf32> to vector<16x128xf32>
    %320 = vector.extract_strided_slice %316 {offsets = [0, 128], sizes = [16, 128], strides = [1, 1]} : vector<16x384xf32> to vector<16x128xf32>
    %321 = vector.extract_strided_slice %316 {offsets = [0, 256], sizes = [16, 128], strides = [1, 1]} : vector<16x384xf32> to vector<16x128xf32>
    %322 = arith.mulf %320, %294 : vector<16x128xf32>
    %323 = arith.mulf %319, %318 : vector<16x128xf32>
    %324 = arith.addf %322, %323 : vector<16x128xf32>
    %325 = math.tanh %324 : vector<16x128xf32>
    %326 = arith.mulf %321, %325 : vector<16x128xf32>
    %c7_114 = arith.constant 7 : index
    %c0_115 = arith.constant 0 : index
    %c0_116 = arith.constant 0 : index
    %327 = vector.load %arg4[%c7_114, %c0_115, %c0_116] : memref<8x16x1xf32, #tpu.memory_space<vmem>>, vector<1x16x1xf32>
    %328 = vector.shape_cast %327 : vector<1x16x1xf32> to vector<16x1xf32>
    %329 = arith.cmpf ogt, %10, %328 : vector<16x1xf32>
    %cst_117 = arith.constant 0.000000e+00 : f32
    %330 = vector.shape_cast %329 : vector<16x1xi1> to vector<16x1xi1>
    %331 = vector.broadcast %330 : vector<16x1xi1> to vector<16x128xi1>
    %332 = vector.broadcast %cst_117 : f32 to vector<16x128xf32>
    %333 = arith.select %331, %326, %332 : vector<16x128xi1>, vector<16x128xf32>
    %334 = arith.addf %299, %333 : vector<16x128xf32>
    %c0_118 = arith.constant 0 : index
    %c0_119 = arith.constant 0 : index
    %335 = vector.load %arg3[%c0_118, %c0_119] : memref<1x1xf32, #tpu.memory_space<vmem>>, vector<1x1xf32>
    %336 = vector.broadcast %335 : vector<1x1xf32> to vector<16x128xf32>
    %337 = arith.mulf %334, %336 : vector<16x128xf32>
    %338 = vector.extract_strided_slice %337 {offsets = [0, 0], sizes = [8, 128], strides = [1, 1]} : vector<16x128xf32> to vector<8x128xf32>
    %339 = vector.extract_strided_slice %337 {offsets = [8, 0], sizes = [8, 128], strides = [1, 1]} : vector<16x128xf32> to vector<8x128xf32>
    %340 = tpu.concatenate %338, %339 in 1 : vector<8x128xf32>, vector<8x128xf32> -> vector<8x256xf32>
    %341 = arith.truncf %340 : vector<8x256xf32> to vector<8x256xbf16>
    %c0_120 = arith.constant 0 : index
    %c0_121 = arith.constant 0 : index
    %342 = vector.load %arg10[%c0_120, %c0_121] : memref<256x32xbf16, #tpu.memory_space<vmem>>, vector<256x32xbf16>
    %cst_122 = arith.constant dense<0.000000e+00> : vector<8x32xf32>
    %343 = tpu.matmul %341, %342, %cst_122 {dimension_numbers = #tpu.dot_dimension_numbers<[1], [0], [0], [1], [0, 0, 1, 1], [], []>} : vector<8x256xbf16>, vector<256x32xbf16>, vector<8x32xf32> -> vector<8x32xf32>
    %c0_123 = arith.constant 0 : index
    %c0_124 = arith.constant 0 : index
    %344 = vector.load %arg6[%c0_123, %c0_124] : memref<8x34xf32, #tpu.memory_space<vmem>>, vector<8x34xf32>
    %c0_125 = arith.constant 0 : index
    %c0_126 = arith.constant 0 : index
    %345 = vector.load %arg11[%c0_125, %c0_126] : memref<34x32xf32, #tpu.memory_space<vmem>>, vector<34x32xf32>
    %cst_127 = arith.constant dense<0.000000e+00> : vector<8x32xf32>
    %346 = tpu.matmul %344, %345, %cst_127 {dimension_numbers = #tpu.dot_dimension_numbers<[1], [0], [0], [1], [0, 0, 1, 1], [], []>} : vector<8x34xf32>, vector<34x32xf32>, vector<8x32xf32> -> vector<8x32xf32>
    %347 = arith.addf %343, %346 : vector<8x32xf32>
    %c0_128 = arith.constant 0 : index
    %c0_129 = arith.constant 0 : index
    %348 = vector.load %arg12[%c0_128, %c0_129] : memref<1x32xf32, #tpu.memory_space<vmem>>, vector<1x32xf32>
    %349 = vector.broadcast %348 : vector<1x32xf32> to vector<8x32xf32>
    %350 = arith.addf %347, %349 : vector<8x32xf32>
    %cst_130 = arith.constant 0.000000e+00 : f32
    %351 = vector.broadcast %cst_130 : f32 to vector<8x32xf32>
    %352 = arith.maximumf %350, %351 : vector<8x32xf32>
    %c0_131 = arith.constant 0 : index
    %c0_132 = arith.constant 0 : index
    %353 = vector.load %arg14[%c0_131, %c0_132] : memref<8x32xf32, #tpu.memory_space<vmem>>, vector<8x32xf32>
    %354 = arith.addf %352, %353 : vector<8x32xf32>
    %c0_133 = arith.constant 0 : index
    %c0_134 = arith.constant 0 : index
    %355 = vector.load %arg13[%c0_133, %c0_134] : memref<8x32xf32, #tpu.memory_space<vmem>>, vector<8x32xf32>
    %356 = arith.subf %354, %355 : vector<8x32xf32>
    %357 = math.absf %356 : vector<8x32xf32>
    %cst_135 = arith.constant dense<0.000000e+00> : vector<8xf32>
    %358 = vector.multi_reduction <add>, %357, %cst_135 [1] : vector<8x32xf32> to vector<8xf32>
    %359 = vector.shape_cast %358 : vector<8xf32> to vector<8x1xf32>
    %cst_136 = arith.constant 1.200000e+01 : f32
    %360 = vector.broadcast %cst_136 : f32 to vector<8x1xf32>
    %361 = arith.subf %360, %359 : vector<8x1xf32>
    %c0_137 = arith.constant 0 : index
    %c0_138 = arith.constant 0 : index
    %362 = vector.load %arg15[%c0_137, %c0_138] : memref<8x1xf32, #tpu.memory_space<vmem>>, vector<8x1xf32>
    tpu.vector_store %arg15[%c0_137, %c0_138], %361 {strides = array<i32>} : memref<8x1xf32, #tpu.memory_space<vmem>>, vector<8x1xf32>,
    return
  }
  func.func @transform_0(%arg0: i32) -> (i32, i32, i32) {
    %c0_i32 = arith.constant 0 : i32
    %c0_i32_0 = arith.constant 0 : i32
    %c0_i32_1 = arith.constant 0 : i32
    return %c0_i32, %arg0, %c0_i32_0 : i32, i32, i32
  }
  func.func @transform_1(%arg0: i32) -> (i32, i32) {
    %c0_i32 = arith.constant 0 : i32
    %c0_i32_0 = arith.constant 0 : i32
    return %arg0, %c0_i32 : i32, i32
  }
  func.func @transform_2(%arg0: i32) -> (i32, i32) {
    %c0_i32 = arith.constant 0 : i32
    %c0_i32_0 = arith.constant 0 : i32
    %c0_i32_1 = arith.constant 0 : i32
    return %c0_i32, %c0_i32_0 : i32, i32
  }
  func.func @transform_3(%arg0: i32) -> (i32, i32, i32) {
    %c0_i32 = arith.constant 0 : i32
    %c0_i32_0 = arith.constant 0 : i32
    %c0_i32_1 = arith.constant 0 : i32
    %c0_i32_2 = arith.constant 0 : i32
    return %c0_i32, %c0_i32_0, %c0_i32_1 : i32, i32, i32
  }
  func.func @transform_4(%arg0: i32) -> (i32, i32) {
    %c0_i32 = arith.constant 0 : i32
    %c0_i32_0 = arith.constant 0 : i32
    %c0_i32_1 = arith.constant 0 : i32
    return %c0_i32, %c0_i32_0 : i32, i32
  }
  func.func @transform_5(%arg0: i32) -> (i32, i32) {
    %c0_i32 = arith.constant 0 : i32
    %c0_i32_0 = arith.constant 0 : i32
    return %arg0, %c0_i32 : i32, i32
  }
  func.func @transform_6(%arg0: i32) -> (i32, i32) {
    %c0_i32 = arith.constant 0 : i32
    %c0_i32_0 = arith.constant 0 : i32
    %c0_i32_1 = arith.constant 0 : i32
    return %c0_i32, %c0_i32_0 : i32, i32
  }
  func.func @transform_7(%arg0: i32) -> (i32, i32) {
    %c0_i32 = arith.constant 0 : i32
    %c0_i32_0 = arith.constant 0 : i32
    %c0_i32_1 = arith.constant 0 : i32
    return %c0_i32, %c0_i32_0 : i32, i32
  }
  func.func @transform_8(%arg0: i32) -> (i32, i32) {
    %c0_i32 = arith.constant 0 : i32
    %c0_i32_0 = arith.constant 0 : i32
    %c0_i32_1 = arith.constant 0 : i32
    return %c0_i32, %c0_i32_0 : i32, i32
  }
  func.func @transform_9(%arg0: i32) -> (i32, i32) {
    %c0_i32 = arith.constant 0 : i32
    %c0_i32_0 = arith.constant 0 : i32
    %c0_i32_1 = arith.constant 0 : i32
    return %c0_i32, %c0_i32_0 : i32, i32
  }
  func.func @transform_10(%arg0: i32) -> (i32, i32) {
    %c0_i32 = arith.constant 0 : i32
    %c0_i32_0 = arith.constant 0 : i32
    %c0_i32_1 = arith.constant 0 : i32
    return %c0_i32, %c0_i32_0 : i32, i32
  }
  func.func @transform_11(%arg0: i32) -> (i32, i32) {
    %c0_i32 = arith.constant 0 : i32
    %c0_i32_0 = arith.constant 0 : i32
    %c0_i32_1 = arith.constant 0 : i32
    return %c0_i32, %c0_i32_0 : i32, i32
  }
  func.func @transform_12(%arg0: i32) -> (i32, i32) {
    %c0_i32 = arith.constant 0 : i32
    %c0_i32_0 = arith.constant 0 : i32
    return %arg0, %c0_i32 : i32, i32
  }
  func.func @transform_13(%arg0: i32) -> (i32, i32) {
    %c0_i32 = arith.constant 0 : i32
    %c0_i32_0 = arith.constant 0 : i32
    return %arg0, %c0_i32 : i32, i32
  }
  func.func @transform_14(%arg0: i32) -> (i32, i32) {
    %c0_i32 = arith.constant 0 : i32
    %c0_i32_0 = arith.constant 0 : i32
    return %arg0, %c0_i32 : i32, i32
  }
}

</mosaic_0001>

<llo_original>
// kernel: kge_forward_single.1
$region0: #{kge_forward_single.1}
  #allocation0 [shape = 'u32[]', space=smem, size = 0x4, offset = 0x4, fixed_abs, tag = 'smem constant byte address 0x4 - core index']
  #allocation1 [shape = 'u32[144,128]{1,0:T(1,128)}', space=vmem, size = 0x12000, scoped, tag = 'internal scratch']
  #allocation2 [shape = 'f32[8,8,1024]{2,1,0:T(8,128)}', space=vmem, size = 0x40000, scoped, tag = 'scratch operand']
  #allocation3 [shape = 'f32[1,1]{1,0:T(1,128)S(1)}', space=vmem, size = 0x200, scoped, tag = 'scoped memory for kge_forward_single.1']
  %s0 = inlined_call_operand.vmem [shape: f32[8,8,32], index: 0, kind: input, shape index: {}]
  %s1 = inlined_call_operand.vmem [shape: f32[16,1], index: 1, kind: input, shape index: {}]
  %s2 = inlined_call_operand.<no memory space> [shape: f32[1,1], index: 2, kind: input, shape index: {}]
  %s3 = inlined_call_operand.vmem [shape: f32[8,16,1], index: 3, kind: input, shape index: {}]
  %s4 = inlined_call_operand.vmem [shape: f32[16,256], index: 4, kind: input, shape index: {}]
  %s5 = inlined_call_operand.vmem [shape: f32[8,34], index: 5, kind: input, shape index: {}]
  %s6 = inlined_call_operand.vmem [shape: bf16[32,1024], index: 6, kind: input, shape index: {}]
  %s7 = inlined_call_operand.vmem [shape: f32[1,1024], index: 7, kind: input, shape index: {}]
  %s8 = inlined_call_operand.vmem [shape: bf16[256,512], index: 8, kind: input, shape index: {}]
  %s9 = inlined_call_operand.vmem [shape: bf16[256,32], index: 9, kind: input, shape index: {}]
  %s10 = inlined_call_operand.vmem [shape: f32[34,32], index: 10, kind: input, shape index: {}]
  %s11 = inlined_call_operand.vmem [shape: f32[1,32], index: 11, kind: input, shape index: {}]
  %s12 = inlined_call_operand.vmem [shape: f32[8,32], index: 12, kind: input, shape index: {}]
  %s13 = inlined_call_operand.vmem [shape: f32[8,32], index: 13, kind: input, shape index: {}]
  %s14 = inlined_call_operand.vmem [shape: f32[8,1], index: 14, kind: output, shape index: {}]
  %s15 = sld [smem:[#allocation0]]
  $region66: #{kge_forward_single.1} parent=0
    _
  %s17 = ssub.s32 1, %s15
  %s18 = scalar_select 0, %s17, %s15
  %v19 = vstv %s2
  %20 = vst [vmem:[#allocation3] sm:$0x1] %v19
  // Predicated region
  $region2: #{kge_forward_single.1} parent=0 // pred_check
    _
  $region3: #{kge_forward_single.1} parent=0 // pred_check_branch
    %22 = sbr.rel (0) target = $region5
  $region4: #{kge_forward_single.1} parent=0 // pred_region
    _
  $region5: #{kge_forward_single.1} parent=0 // pred_fallthru
    _
  // Predicated region
  $region6: #{kge_forward_single.1} parent=0 // pred_check
    _
  $region7: #{kge_forward_single.1} parent=0 // pred_check_branch
    %24 = sbr.rel (0) target = $region9
  $region8: #{kge_forward_single.1} parent=0 // pred_region
    _
  $region9: #{kge_forward_single.1} parent=0 // pred_fallthru
    _
  // Predicated region
  $region10: #{kge_forward_single.1} parent=0 // pred_check
    _
  $region11: #{kge_forward_single.1} parent=0 // pred_check_branch
    %26 = sbr.rel (0) target = $region13
  $region12: #{kge_forward_single.1} parent=0 // pred_region
    _
  $region13: #{kge_forward_single.1} parent=0 // pred_fallthru
    _
  // Predicated region
  $region14: #{kge_forward_single.1} parent=0 // pred_check
    _
  $region15: #{kge_forward_single.1} parent=0 // pred_check_branch
    %28 = sbr.rel (0) target = $region17
  $region16: #{kge_forward_single.1} parent=0 // pred_region
    _
  $region17: #{kge_forward_single.1} parent=0 // pred_fallthru
    _
  // Predicated region
  $region18: #{kge_forward_single.1} parent=0 // pred_check
    _
  $region19: #{kge_forward_single.1} parent=0 // pred_check_branch
    %30 = sbr.rel (0) target = $region21
  $region20: #{kge_forward_single.1} parent=0 // pred_region
    _
  $region21: #{kge_forward_single.1} parent=0 // pred_fallthru
    _
  // Predicated region
  $region22: #{kge_forward_single.1} parent=0 // pred_check
    _
  $region23: #{kge_forward_single.1} parent=0 // pred_check_branch
    %32 = sbr.rel (0) target = $region25
  $region24: #{kge_forward_single.1} parent=0 // pred_region
    _
  $region25: #{kge_forward_single.1} parent=0 // pred_fallthru
    _
  // Predicated region
  $region26: #{kge_forward_single.1} parent=0 // pred_check
    _
  $region27: #{kge_forward_single.1} parent=0 // pred_check_branch
    %34 = sbr.rel (0) target = $region29
  $region28: #{kge_forward_single.1} parent=0 // pred_region
    _
  $region29: #{kge_forward_single.1} parent=0 // pred_fallthru
    _
  // Predicated region
  $region30: #{kge_forward_single.1} parent=0 // pred_check
    _
  $region31: #{kge_forward_single.1} parent=0 // pred_check_branch
    %36 = sbr.rel (0) target = $region33
  $region32: #{kge_forward_single.1} parent=0 // pred_region
    _
  $region33: #{kge_forward_single.1} parent=0 // pred_fallthru
    _
  // Predicated region
  $region34: #{kge_forward_single.1} parent=0 // pred_check
    _
  $region35: #{kge_forward_single.1} parent=0 // pred_check_branch
    %38 = sbr.rel (0) target = $region37
  $region36: #{kge_forward_single.1} parent=0 // pred_region
    _
  $region37: #{kge_forward_single.1} parent=0 // pred_fallthru
    _
  // Predicated region
  $region38: #{kge_forward_single.1} parent=0 // pred_check
    _
  $region39: #{kge_forward_single.1} parent=0 // pred_check_branch
    %40 = sbr.rel (0) target = $region41
  $region40: #{kge_forward_single.1} parent=0 // pred_region
    _
  $region41: #{kge_forward_single.1} parent=0 // pred_fallthru
    _
  // Predicated region
  $region42: #{kge_forward_single.1} parent=0 // pred_check
    _
  $region43: #{kge_forward_single.1} parent=0 // pred_check_branch
    %42 = sbr.rel (0) target = $region45
  $region44: #{kge_forward_single.1} parent=0 // pred_region
    _
  $region45: #{kge_forward_single.1} parent=0 // pred_fallthru
    _
  // Predicated region
  $region46: #{kge_forward_single.1} parent=0 // pred_check
    _
  $region47: #{kge_forward_single.1} parent=0 // pred_check_branch
    %44 = sbr.rel (0) target = $region49
  $region48: #{kge_forward_single.1} parent=0 // pred_region
    _
  $region49: #{kge_forward_single.1} parent=0 // pred_fallthru
    _
  // Predicated region
  $region50: #{kge_forward_single.1} parent=0 // pred_check
    _
  $region51: #{kge_forward_single.1} parent=0 // pred_check_branch
    %46 = sbr.rel (0) target = $region53
  $region52: #{kge_forward_single.1} parent=0 // pred_region
    _
  $region53: #{kge_forward_single.1} parent=0 // pred_fallthru
    _
  // Predicated region
  $region54: #{kge_forward_single.1} parent=0 // pred_check
    _
  $region55: #{kge_forward_single.1} parent=0 // pred_check_branch
    %48 = sbr.rel (0) target = $region57
  $region56: #{kge_forward_single.1} parent=0 // pred_region
    _
  $region57: #{kge_forward_single.1} parent=0 // pred_fallthru
    _
  %v50 = vld [vmem:[%s0] sm:$0xff]
  %v51 = vld [vmem:[%s0 + $0x8] sm:$0xff]
  %v52 = vld [vmem:[%s0 + $0x10] sm:$0xff]
  %v53 = vld [vmem:[%s0 + $0x18] sm:$0xff]
  %v54 = vld [vmem:[%s0 + $0x20] sm:$0xff]
  %v55 = vld [vmem:[%s0 + $0x28] sm:$0xff]
  %v56 = vld [vmem:[%s0 + $0x30] sm:$0xff]
  %v57 = vld [vmem:[%s0 + $0x38] sm:$0xff]
  %v58 = vpack.c.bf16 %v51, %v50
  %v59 = vpack.c.bf16 %v53, %v52
  %v60 = vpack.c.bf16 %v55, %v54
  %v61 = vpack.c.bf16 %v57, %v56
  %v62 = vld [vmem:[%s6] sm:$0xff]
  %v63 = vld [vmem:[%s6 + $0x8] sm:$0xff]
  %v64 = vld [vmem:[%s6 + $0x10] sm:$0xff]
  %v65 = vld [vmem:[%s6 + $0x18] sm:$0xff]
  %v66 = vld [vmem:[%s6 + $0x20] sm:$0xff]
  %v67 = vld [vmem:[%s6 + $0x28] sm:$0xff]
  %v68 = vld [vmem:[%s6 + $0x30] sm:$0xff]
  %v69 = vld [vmem:[%s6 + $0x38] sm:$0xff]
  %v70 = vld [vmem:[%s6 + $0x40] sm:$0xff]
  %v71 = vld [vmem:[%s6 + $0x48] sm:$0xff]
  %v72 = vld [vmem:[%s6 + $0x50] sm:$0xff]
  %v73 = vld [vmem:[%s6 + $0x58] sm:$0xff]
  %v74 = vld [vmem:[%s6 + $0x60] sm:$0xff]
  %v75 = vld [vmem:[%s6 + $0x68] sm:$0xff]
  %v76 = vld [vmem:[%s6 + $0x70] sm:$0xff]
  %v77 = vld [vmem:[%s6 + $0x78] sm:$0xff]
  %v78 = vld [vmem:[%s7] sm:$0xff]
  %v80 = vlaneseq
  %v81 = vshrl.u32 %v80, 7
  %v82 = vsub.s32 0, %v81
  %v83 = vrot.slane %v78, %v82
  %v84 = vlaneseq
  %v85 = vshrl.u32 %v84, 7
  %v86 = vsub.s32 1, %v85
  %v87 = vrot.slane %v78, %v86
  %v88 = vlaneseq
  %v89 = vshrl.u32 %v88, 7
  %v90 = vsub.s32 2, %v89
  %v91 = vrot.slane %v78, %v90
  %v92 = vlaneseq
  %v93 = vshrl.u32 %v92, 7
  %v94 = vsub.s32 3, %v93
  %v95 = vrot.slane %v78, %v94
  %v96 = vlaneseq
  %v97 = vshrl.u32 %v96, 7
  %v98 = vsub.s32 4, %v97
  %v99 = vrot.slane %v78, %v98
  %v100 = vlaneseq
  %v101 = vshrl.u32 %v100, 7
  %v102 = vsub.s32 5, %v101
  %v103 = vrot.slane %v78, %v102
  %v104 = vlaneseq
  %v105 = vshrl.u32 %v104, 7
  %v106 = vsub.s32 6, %v105
  %v107 = vrot.slane %v78, %v106
  %v108 = vlaneseq
  %v109 = vshrl.u32 %v108, 7
  %v110 = vsub.s32 7, %v109
  %v111 = vrot.slane %v78, %v110
  %v136 = vunpack.c.l.b16 %v62
  %v137 = vunpack.c.h.b16 %v62
  %v138 = vunpack.c.l.b16 %v63
  %v139 = vunpack.c.h.b16 %v63
  %v140 = vunpack.c.l.b16 %v64
  %v141 = vunpack.c.h.b16 %v64
  %v142 = vunpack.c.l.b16 %v65
  %v143 = vunpack.c.h.b16 %v65
  %v144 = vunpack.c.l.b16 %v66
  %v145 = vunpack.c.h.b16 %v66
  %v146 = vunpack.c.l.b16 %v67
  %v147 = vunpack.c.h.b16 %v67
  %v148 = vunpack.c.l.b16 %v68
  %v149 = vunpack.c.h.b16 %v68
  %v150 = vunpack.c.l.b16 %v69
  %v151 = vunpack.c.h.b16 %v69
  %v152 = vunpack.c.l.b16 %v70
  %v153 = vunpack.c.h.b16 %v70
  %v154 = vunpack.c.l.b16 %v71
  %v155 = vunpack.c.h.b16 %v71
  %v156 = vunpack.c.l.b16 %v72
  %v157 = vunpack.c.h.b16 %v72
  %v158 = vunpack.c.l.b16 %v73
  %v159 = vunpack.c.h.b16 %v73
  %v160 = vunpack.c.l.b16 %v74
  %v161 = vunpack.c.h.b16 %v74
  %v162 = vunpack.c.l.b16 %v75
  %v163 = vunpack.c.h.b16 %v75
  %v164 = vunpack.c.l.b16 %v76
  %v165 = vunpack.c.h.b16 %v76
  %v166 = vunpack.c.l.b16 %v77
  %v167 = vunpack.c.h.b16 %v77
  %v168 = vpack.c.b16 %v144, %v136
  %v169 = vpack.c.b16 %v145, %v137
  %v170 = vpack.c.b16 %v146, %v138
  %v171 = vpack.c.b16 %v147, %v139
  %v172 = vpack.c.b16 %v148, %v140
  %v173 = vpack.c.b16 %v149, %v141
  %v174 = vpack.c.b16 %v150, %v142
  %v175 = vpack.c.b16 %v151, %v143
  %v176 = vpack.c.b16 %v160, %v152
  %v177 = vpack.c.b16 %v161, %v153
  %v178 = vpack.c.b16 %v162, %v154
  %v179 = vpack.c.b16 %v163, %v155
  %v180 = vpack.c.b16 %v164, %v156
  %v181 = vpack.c.b16 %v165, %v157
  %v182 = vpack.c.b16 %v166, %v158
  %v183 = vpack.c.b16 %v167, %v159
  %vm200 = vcmask 261120
  %v202 = vsel %vm200, %v58, 0
  %v205 = vsel %vm200, %v59, 0
  %v208 = vsel %vm200, %v60, 0
  %v211 = vsel %vm200, %v61, 0
  %213 = vmatprep.subr.bf16.mxu0 %v169
  %214 = vmatpush1.bf16.msra.mxu0 %v168
  %215 = vmatprep.subr.bf16.mxu0 %v177
  %216 = vmatpush1.bf16.msra.mxu0 %v176
  %217 = vmatprep.subr.bf16.mxu0 0
  %218 = vmatpush1.bf16.msra.mxu0 0
  %219 = vmatprep.subr.bf16.mxu0 0
  %220 = vmatpush1.bf16.msra.mxu0 0
  %221 = vmatprep.subr.bf16.mxu0 0
  %222 = vmatpush1.bf16.msra.mxu0 0
  %223 = vmatprep.subr.bf16.mxu0 0
  %224 = vmatpush1.bf16.msra.mxu0 0
  %225 = vmatprep.subr.bf16.mxu0 0
  %226 = vmatpush1.bf16.msra.mxu0 0
  %227 = vmatprep.subr.bf16.mxu0 0
  %228 = vmatpush1.bf16.msra.mxu0 0
  %229 = vmatprep.subr.bf16.mxu0 0
  %230 = vmatpush1.bf16.msra.mxu0 0
  %231 = vmatprep.subr.bf16.mxu0 0
  %232 = vmatpush1.bf16.msra.mxu0 0
  %233 = vmatprep.subr.bf16.mxu0 0
  %234 = vmatpush1.bf16.msra.mxu0 0
  %235 = vmatprep.subr.bf16.mxu0 0
  %236 = vmatpush1.bf16.msra.mxu0 0
  %237 = vmatprep.subr.bf16.mxu0 0
  %238 = vmatpush1.bf16.msra.mxu0 0
  %239 = vmatprep.subr.bf16.mxu0 0
  %240 = vmatpush1.bf16.msra.mxu0 0
  %241 = vmatprep.subr.bf16.mxu0 0
  %242 = vmatpush1.bf16.msra.mxu0 0
  %243 = vmatprep.subr.bf16.mxu0 0
  %244 = vmatpush1.bf16.msra.mxu0 0
  %245 = vmatprep.mubr.bf16.mxu0 0
  %246 = vmatmul.mubr.bf16.gmra.mrb[0].mxu0 %v202
  %v247 = vpop.f32.mrb[0].mxu0
  %v248 = vadd.f32 %v83, %v247
  %v249 = vpop.f32.mrb[0].mxu0
  %v250 = vadd.f32 %v87, %v249
  %v251 = vpop.f32.mrb[0].mxu0
  %v252 = vadd.f32 %v83, %v251
  %v253 = vpop.f32.mrb[0].mxu0
  %v254 = vadd.f32 %v87, %v253
  %255 = vmatprep.mubr.bf16.mxu0 0
  %256 = vmatmul.mubr.bf16.gmra.mrb[0].mxu0 %v205
  %v257 = vpop.f32.mrb[0].mxu0
  %v258 = vadd.f32 %v83, %v257
  %v259 = vpop.f32.mrb[0].mxu0
  %v260 = vadd.f32 %v87, %v259
  %v261 = vpop.f32.mrb[0].mxu0
  %v262 = vadd.f32 %v83, %v261
  %v263 = vpop.f32.mrb[0].mxu0
  %v264 = vadd.f32 %v87, %v263
  %265 = vmatprep.mubr.bf16.mxu0 0
  %266 = vmatmul.mubr.bf16.gmra.mrb[0].mxu0 %v208
  %v267 = vpop.f32.mrb[0].mxu0
  %v268 = vadd.f32 %v83, %v267
  %v269 = vpop.f32.mrb[0].mxu0
  %v270 = vadd.f32 %v87, %v269
  %v271 = vpop.f32.mrb[0].mxu0
  %v272 = vadd.f32 %v83, %v271
  %v273 = vpop.f32.mrb[0].mxu0
  %v274 = vadd.f32 %v87, %v273
  %275 = vmatprep.mubr.bf16.mxu0 0
  %276 = vmatmul.mubr.bf16.gmra.mrb[0].mxu0 %v211
  %v277 = vpop.f32.mrb[0].mxu0
  %v278 = vadd.f32 %v83, %v277
  %v279 = vpop.f32.mrb[0].mxu0
  %v280 = vadd.f32 %v87, %v279
  %v281 = vpop.f32.mrb[0].mxu0
  %v282 = vadd.f32 %v83, %v281
  %v283 = vpop.f32.mrb[0].mxu0
  %v284 = vadd.f32 %v87, %v283
  %285 = vdwg.mxu0
  %286 = vmatprep.subr.bf16.mxu0 %v171
  %287 = vmatpush1.bf16.msra.mxu0 %v170
  %288 = vmatprep.subr.bf16.mxu0 %v179
  %289 = vmatpush1.bf16.msra.mxu0 %v178
  %290 = vmatprep.subr.bf16.mxu0 0
  %291 = vmatpush1.bf16.msra.mxu0 0
  %292 = vmatprep.subr.bf16.mxu0 0
  %293 = vmatpush1.bf16.msra.mxu0 0
  %294 = vmatprep.subr.bf16.mxu0 0
  %295 = vmatpush1.bf16.msra.mxu0 0
  %296 = vmatprep.subr.bf16.mxu0 0
  %297 = vmatpush1.bf16.msra.mxu0 0
  %298 = vmatprep.subr.bf16.mxu0 0
  %299 = vmatpush1.bf16.msra.mxu0 0
  %300 = vmatprep.subr.bf16.mxu0 0
  %301 = vmatpush1.bf16.msra.mxu0 0
  %302 = vmatprep.subr.bf16.mxu0 0
  %303 = vmatpush1.bf16.msra.mxu0 0
  %304 = vmatprep.subr.bf16.mxu0 0
  %305 = vmatpush1.bf16.msra.mxu0 0
  %306 = vmatprep.subr.bf16.mxu0 0
  %307 = vmatpush1.bf16.msra.mxu0 0
  %308 = vmatprep.subr.bf16.mxu0 0
  %309 = vmatpush1.bf16.msra.mxu0 0
  %310 = vmatprep.subr.bf16.mxu0 0
  %311 = vmatpush1.bf16.msra.mxu0 0
  %312 = vmatprep.subr.bf16.mxu0 0
  %313 = vmatpush1.bf16.msra.mxu0 0
  %314 = vmatprep.subr.bf16.mxu0 0
  %315 = vmatpush1.bf16.msra.mxu0 0
  %316 = vmatprep.subr.bf16.mxu0 0
  %317 = vmatpush1.bf16.msra.mxu0 0
  %318 = vmatprep.mubr.bf16.mxu0 0
  %319 = vmatmul.mubr.bf16.gmra.mrb[0].mxu0 %v202
  %v320 = vpop.f32.mrb[0].mxu0
  %v321 = vadd.f32 %v91, %v320
  %v322 = vpop.f32.mrb[0].mxu0
  %v323 = vadd.f32 %v95, %v322
  %v324 = vpop.f32.mrb[0].mxu0
  %v325 = vadd.f32 %v91, %v324
  %v326 = vpop.f32.mrb[0].mxu0
  %v327 = vadd.f32 %v95, %v326
  %328 = vmatprep.mubr.bf16.mxu0 0
  %329 = vmatmul.mubr.bf16.gmra.mrb[0].mxu0 %v205
  %v330 = vpop.f32.mrb[0].mxu0
  %v331 = vadd.f32 %v91, %v330
  %v332 = vpop.f32.mrb[0].mxu0
  %v333 = vadd.f32 %v95, %v332
  %v334 = vpop.f32.mrb[0].mxu0
  %v335 = vadd.f32 %v91, %v334
  %v336 = vpop.f32.mrb[0].mxu0
  %v337 = vadd.f32 %v95, %v336
  %338 = vmatprep.mubr.bf16.mxu0 0
  %339 = vmatmul.mubr.bf16.gmra.mrb[0].mxu0 %v208
  %v340 = vpop.f32.mrb[0].mxu0
  %v341 = vadd.f32 %v91, %v340
  %v342 = vpop.f32.mrb[0].mxu0
  %v343 = vadd.f32 %v95, %v342
  %v344 = vpop.f32.mrb[0].mxu0
  %v345 = vadd.f32 %v91, %v344
  %v346 = vpop.f32.mrb[0].mxu0
  %v347 = vadd.f32 %v95, %v346
  %348 = vmatprep.mubr.bf16.mxu0 0
  %349 = vmatmul.mubr.bf16.gmra.mrb[0].mxu0 %v211
  %v350 = vpop.f32.mrb[0].mxu0
  %v351 = vadd.f32 %v91, %v350
  %v352 = vpop.f32.mrb[0].mxu0
  %v353 = vadd.f32 %v95, %v352
  %v354 = vpop.f32.mrb[0].mxu0
  %v355 = vadd.f32 %v91, %v354
  %v356 = vpop.f32.mrb[0].mxu0
  %v357 = vadd.f32 %v95, %v356
  %358 = vdwg.mxu0
  %359 = vmatprep.subr.bf16.mxu0 %v173
  %360 = vmatpush1.bf16.msra.mxu0 %v172
  %361 = vmatprep.subr.bf16.mxu0 %v181
  %362 = vmatpush1.bf16.msra.mxu0 %v180
  %363 = vmatprep.subr.bf16.mxu0 0
  %364 = vmatpush1.bf16.msra.mxu0 0
  %365 = vmatprep.subr.bf16.mxu0 0
  %366 = vmatpush1.bf16.msra.mxu0 0
  %367 = vmatprep.subr.bf16.mxu0 0
  %368 = vmatpush1.bf16.msra.mxu0 0
  %369 = vmatprep.subr.bf16.mxu0 0
  %370 = vmatpush1.bf16.msra.mxu0 0
  %371 = vmatprep.subr.bf16.mxu0 0
  %372 = vmatpush1.bf16.msra.mxu0 0
  %373 = vmatprep.subr.bf16.mxu0 0
  %374 = vmatpush1.bf16.msra.mxu0 0
  %375 = vmatprep.subr.bf16.mxu0 0
  %376 = vmatpush1.bf16.msra.mxu0 0
  %377 = vmatprep.subr.bf16.mxu0 0
  %378 = vmatpush1.bf16.msra.mxu0 0
  %379 = vmatprep.subr.bf16.mxu0 0
  %380 = vmatpush1.bf16.msra.mxu0 0
  %381 = vmatprep.subr.bf16.mxu0 0
  %382 = vmatpush1.bf16.msra.mxu0 0
  %383 = vmatprep.subr.bf16.mxu0 0
  %384 = vmatpush1.bf16.msra.mxu0 0
  %385 = vmatprep.subr.bf16.mxu0 0
  %386 = vmatpush1.bf16.msra.mxu0 0
  %387 = vmatprep.subr.bf16.mxu0 0
  %388 = vmatpush1.bf16.msra.mxu0 0
  %389 = vmatprep.subr.bf16.mxu0 0
  %390 = vmatpush1.bf16.msra.mxu0 0
  %391 = vmatprep.mubr.bf16.mxu0 0
  %392 = vmatmul.mubr.bf16.gmra.mrb[0].mxu0 %v202
  %v393 = vpop.f32.mrb[0].mxu0
  %v394 = vadd.f32 %v99, %v393
  %v395 = vpop.f32.mrb[0].mxu0
  %v396 = vadd.f32 %v103, %v395
  %v397 = vpop.f32.mrb[0].mxu0
  %v398 = vadd.f32 %v99, %v397
  %v399 = vpop.f32.mrb[0].mxu0
  %v400 = vadd.f32 %v103, %v399
  %401 = vmatprep.mubr.bf16.mxu0 0
  %402 = vmatmul.mubr.bf16.gmra.mrb[0].mxu0 %v205
  %v403 = vpop.f32.mrb[0].mxu0
  %v404 = vadd.f32 %v99, %v403
  %v405 = vpop.f32.mrb[0].mxu0
  %v406 = vadd.f32 %v103, %v405
  %v407 = vpop.f32.mrb[0].mxu0
  %v408 = vadd.f32 %v99, %v407
  %v409 = vpop.f32.mrb[0].mxu0
  %v410 = vadd.f32 %v103, %v409
  %411 = vmatprep.mubr.bf16.mxu0 0
  %412 = vmatmul.mubr.bf16.gmra.mrb[0].mxu0 %v208
  %v413 = vpop.f32.mrb[0].mxu0
  %v414 = vadd.f32 %v99, %v413
  %v415 = vpop.f32.mrb[0].mxu0
  %v416 = vadd.f32 %v103, %v415
  %v417 = vpop.f32.mrb[0].mxu0
  %v418 = vadd.f32 %v99, %v417
  %v419 = vpop.f32.mrb[0].mxu0
  %v420 = vadd.f32 %v103, %v419
  %421 = vmatprep.mubr.bf16.mxu0 0
  %422 = vmatmul.mubr.bf16.gmra.mrb[0].mxu0 %v211
  %v423 = vpop.f32.mrb[0].mxu0
  %v424 = vadd.f32 %v99, %v423
  %v425 = vpop.f32.mrb[0].mxu0
  %v426 = vadd.f32 %v103, %v425
  %v427 = vpop.f32.mrb[0].mxu0
  %v428 = vadd.f32 %v99, %v427
  %v429 = vpop.f32.mrb[0].mxu0
  %v430 = vadd.f32 %v103, %v429
  %431 = vdwg.mxu0
  %432 = vmatprep.subr.bf16.mxu0 %v175
  %433 = vmatpush1.bf16.msra.mxu0 %v174
  %434 = vmatprep.subr.bf16.mxu0 %v183
  %435 = vmatpush1.bf16.msra.mxu0 %v182
  %436 = vmatprep.subr.bf16.mxu0 0
  %437 = vmatpush1.bf16.msra.mxu0 0
  %438 = vmatprep.subr.bf16.mxu0 0
  %439 = vmatpush1.bf16.msra.mxu0 0
  %440 = vmatprep.subr.bf16.mxu0 0
  %441 = vmatpush1.bf16.msra.mxu0 0
  %442 = vmatprep.subr.bf16.mxu0 0
  %443 = vmatpush1.bf16.msra.mxu0 0
  %444 = vmatprep.subr.bf16.mxu0 0
  %445 = vmatpush1.bf16.msra.mxu0 0
  %446 = vmatprep.subr.bf16.mxu0 0
  %447 = vmatpush1.bf16.msra.mxu0 0
  %448 = vmatprep.subr.bf16.mxu0 0
  %449 = vmatpush1.bf16.msra.mxu0 0
  %450 = vmatprep.subr.bf16.mxu0 0
  %451 = vmatpush1.bf16.msra.mxu0 0
  %452 = vmatprep.subr.bf16.mxu0 0
  %453 = vmatpush1.bf16.msra.mxu0 0
  %454 = vmatprep.subr.bf16.mxu0 0
  %455 = vmatpush1.bf16.msra.mxu0 0
  %456 = vmatprep.subr.bf16.mxu0 0
  %457 = vmatpush1.bf16.msra.mxu0 0
  %458 = vmatprep.subr.bf16.mxu0 0
  %459 = vmatpush1.bf16.msra.mxu0 0
  %460 = vmatprep.subr.bf16.mxu0 0
  %461 = vmatpush1.bf16.msra.mxu0 0
  %462 = vmatprep.subr.bf16.mxu0 0
  %463 = vmatpush1.bf16.msra.mxu0 0
  %464 = vmatprep.mubr.bf16.mxu0 0
  %465 = vmatmul.mubr.bf16.gmra.mrb[0].mxu0 %v202
  %v466 = vpop.f32.mrb[0].mxu0
  %v467 = vadd.f32 %v107, %v466
  %v468 = vpop.f32.mrb[0].mxu0
  %v469 = vadd.f32 %v111, %v468
  %v470 = vpop.f32.mrb[0].mxu0
  %v471 = vadd.f32 %v107, %v470
  %v472 = vpop.f32.mrb[0].mxu0
  %v473 = vadd.f32 %v111, %v472
  %474 = vmatprep.mubr.bf16.mxu0 0
  %475 = vmatmul.mubr.bf16.gmra.mrb[0].mxu0 %v205
  %v476 = vpop.f32.mrb[0].mxu0
  %v477 = vadd.f32 %v107, %v476
  %v478 = vpop.f32.mrb[0].mxu0
  %v479 = vadd.f32 %v111, %v478
  %v480 = vpop.f32.mrb[0].mxu0
  %v481 = vadd.f32 %v107, %v480
  %v482 = vpop.f32.mrb[0].mxu0
  %v483 = vadd.f32 %v111, %v482
  %484 = vmatprep.mubr.bf16.mxu0 0
  %485 = vmatmul.mubr.bf16.gmra.mrb[0].mxu0 %v208
  %v486 = vpop.f32.mrb[0].mxu0
  %v487 = vadd.f32 %v107, %v486
  %v488 = vpop.f32.mrb[0].mxu0
  %v489 = vadd.f32 %v111, %v488
  %v490 = vpop.f32.mrb[0].mxu0
  %v491 = vadd.f32 %v107, %v490
  %v492 = vpop.f32.mrb[0].mxu0
  %v493 = vadd.f32 %v111, %v492
  %494 = vmatprep.mubr.bf16.mxu0 0
  %495 = vmatmul.mubr.bf16.gmra.mrb[0].mxu0 %v211
  %v496 = vpop.f32.mrb[0].mxu0
  %v497 = vadd.f32 %v107, %v496
  %v498 = vpop.f32.mrb[0].mxu0
  %v499 = vadd.f32 %v111, %v498
  %v500 = vpop.f32.mrb[0].mxu0
  %v501 = vadd.f32 %v107, %v500
  %v502 = vpop.f32.mrb[0].mxu0
  %v503 = vadd.f32 %v111, %v502
  %504 = vdwg.mxu0
  %505 = vst [vmem:[#allocation2] sm:$0xff] %v248
  %506 = vst [vmem:[#allocation2 + $0x8] sm:$0xff] %v250
  %507 = vst [vmem:[#allocation2 + $0x10] sm:$0xff] %v321
  %508 = vst [vmem:[#allocation2 + $0x18] sm:$0xff] %v323
  %509 = vst [vmem:[#allocation2 + $0x20] sm:$0xff] %v394
  %510 = vst [vmem:[#allocation2 + $0x28] sm:$0xff] %v396
  %511 = vst [vmem:[#allocation2 + $0x30] sm:$0xff] %v467
  %512 = vst [vmem:[#allocation2 + $0x38] sm:$0xff] %v469
  %513 = vst [vmem:[#allocation2 + $0x40] sm:$0xff] %v252
  %514 = vst [vmem:[#allocation2 + $0x48] sm:$0xff] %v254
  %515 = vst [vmem:[#allocation2 + $0x50] sm:$0xff] %v325
  %516 = vst [vmem:[#allocation2 + $0x58] sm:$0xff] %v327
  %517 = vst [vmem:[#allocation2 + $0x60] sm:$0xff] %v398
  %518 = vst [vmem:[#allocation2 + $0x68] sm:$0xff] %v400
  %519 = vst [vmem:[#allocation2 + $0x70] sm:$0xff] %v471
  %520 = vst [vmem:[#allocation2 + $0x78] sm:$0xff] %v473
  %521 = vst [vmem:[#allocation2 + $0x80] sm:$0xff] %v258
  %522 = vst [vmem:[#allocation2 + $0x88] sm:$0xff] %v260
  %523 = vst [vmem:[#allocation2 + $0x90] sm:$0xff] %v331
  %524 = vst [vmem:[#allocation2 + $0x98] sm:$0xff] %v333
  %525 = vst [vmem:[#allocation2 + $0xa0] sm:$0xff] %v404
  %526 = vst [vmem:[#allocation2 + $0xa8] sm:$0xff] %v406
  %527 = vst [vmem:[#allocation2 + $0xb0] sm:$0xff] %v477
  %528 = vst [vmem:[#allocation2 + $0xb8] sm:$0xff] %v479
  %529 = vst [vmem:[#allocation2 + $0xc0] sm:$0xff] %v262
  %530 = vst [vmem:[#allocation2 + $0xc8] sm:$0xff] %v264
  %531 = vst [vmem:[#allocation2 + $0xd0] sm:$0xff] %v335
  %532 = vst [vmem:[#allocation2 + $0xd8] sm:$0xff] %v337
  %533 = vst [vmem:[#allocation2 + $0xe0] sm:$0xff] %v408
  %534 = vst [vmem:[#allocation2 + $0xe8] sm:$0xff] %v410
  %535 = vst [vmem:[#allocation2 + $0xf0] sm:$0xff] %v481
  %536 = vst [vmem:[#allocation2 + $0xf8] sm:$0xff] %v483
  %537 = vst [vmem:[#allocation2 + $0x100] sm:$0xff] %v268
  %538 = vst [vmem:[#allocation2 + $0x108] sm:$0xff] %v270
  %539 = vst [vmem:[#allocation2 + $0x110] sm:$0xff] %v341
  %540 = vst [vmem:[#allocation2 + $0x118] sm:$0xff] %v343
  %541 = vst [vmem:[#allocation2 + $0x120] sm:$0xff] %v414
  %542 = vst [vmem:[#allocation2 + $0x128] sm:$0xff] %v416
  %543 = vst [vmem:[#allocation2 + $0x130] sm:$0xff] %v487
  %544 = vst [vmem:[#allocation2 + $0x138] sm:$0xff] %v489
  %545 = vst [vmem:[#allocation2 + $0x140] sm:$0xff] %v272
  %546 = vst [vmem:[#allocation2 + $0x148] sm:$0xff] %v274
  %547 = vst [vmem:[#allocation2 + $0x150] sm:$0xff] %v345
  %548 = vst [vmem:[#allocation2 + $0x158] sm:$0xff] %v347
  %549 = vst [vmem:[#allocation2 + $0x160] sm:$0xff] %v418
  %550 = vst [vmem:[#allocation2 + $0x168] sm:$0xff] %v420
  %551 = vst [vmem:[#allocation2 + $0x170] sm:$0xff] %v491
  %552 = vst [vmem:[#allocation2 + $0x178] sm:$0xff] %v493
  %553 = vst [vmem:[#allocation2 + $0x180] sm:$0xff] %v278
  %554 = vst [vmem:[#allocation2 + $0x188] sm:$0xff] %v280
  %555 = vst [vmem:[#allocation2 + $0x190] sm:$0xff] %v351
  %556 = vst [vmem:[#allocation2 + $0x198] sm:$0xff] %v353
  %557 = vst [vmem:[#allocation2 + $0x1a0] sm:$0xff] %v424
  %558 = vst [vmem:[#allocation2 + $0x1a8] sm:$0xff] %v426
  %559 = vst [vmem:[#allocation2 + $0x1b0] sm:$0xff] %v497
  %560 = vst [vmem:[#allocation2 + $0x1b8] sm:$0xff] %v499
  %561 = vst [vmem:[#allocation2 + $0x1c0] sm:$0xff] %v282
  %562 = vst [vmem:[#allocation2 + $0x1c8] sm:$0xff] %v284
  %563 = vst [vmem:[#allocation2 + $0x1d0] sm:$0xff] %v355
  %564 = vst [vmem:[#allocation2 + $0x1d8] sm:$0xff] %v357
  %565 = vst [vmem:[#allocation2 + $0x1e0] sm:$0xff] %v428
  %566 = vst [vmem:[#allocation2 + $0x1e8] sm:$0xff] %v430
  %567 = vst [vmem:[#allocation2 + $0x1f0] sm:$0xff] %v501
  %568 = vst [vmem:[#allocation2 + $0x1f8] sm:$0xff] %v503
  %v569 = vld [vmem:[%s1] sm:$0xff]
  %v570 = vld [vmem:[%s1 + $0x8] sm:$0xff]
  %v571 = vld [vmem:[%s4] sm:$0xff]
  %v572 = vld [vmem:[%s4 + $0x8] sm:$0xff]
  %v573 = vld [vmem:[%s4 + $0x10] sm:$0xff]
  %v574 = vld [vmem:[%s4 + $0x18] sm:$0xff]
  %v575 = vmul.f32 %v571, 0.0
  %v576 = vmul.f32 %v572, 0.0
  %v577 = vmul.f32 %v573, 0.0
  %v578 = vmul.f32 %v574, 0.0
  %v579 = vpack.c.bf16 %v577, %v575
  %v580 = vpack.c.bf16 %v578, %v576
  %v581 = vld [vmem:[%s8] sm:$0xff]
  %v582 = vld [vmem:[%s8 + $0x8] sm:$0xff]
  %v583 = vld [vmem:[%s8 + $0x10] sm:$0xff]
  %v584 = vld [vmem:[%s8 + $0x18] sm:$0xff]
  %v585 = vld [vmem:[%s8 + $0x20] sm:$0xff]
  %v586 = vld [vmem:[%s8 + $0x28] sm:$0xff]
  %v587 = vld [vmem:[%s8 + $0x30] sm:$0xff]
  %v588 = vld [vmem:[%s8 + $0x38] sm:$0xff]
  %v589 = vld [vmem:[%s8 + $0x40] sm:$0xff]
  %v590 = vld [vmem:[%s8 + $0x48] sm:$0xff]
  %v591 = vld [vmem:[%s8 + $0x50] sm:$0xff]
  %v592 = vld [vmem:[%s8 + $0x58] sm:$0xff]
  %v593 = vld [vmem:[%s8 + $0x60] sm:$0xff]
  %v594 = vld [vmem:[%s8 + $0x68] sm:$0xff]
  %v595 = vld [vmem:[%s8 + $0x70] sm:$0xff]
  %v596 = vld [vmem:[%s8 + $0x78] sm:$0xff]
  %v597 = vld [vmem:[%s8 + $0x80] sm:$0xff]
  %v598 = vld [vmem:[%s8 + $0x88] sm:$0xff]
  %v599 = vld [vmem:[%s8 + $0x90] sm:$0xff]
  %v600 = vld [vmem:[%s8 + $0x98] sm:$0xff]
  %v601 = vld [vmem:[%s8 + $0xa0] sm:$0xff]
  %v602 = vld [vmem:[%s8 + $0xa8] sm:$0xff]
  %v603 = vld [vmem:[%s8 + $0xb0] sm:$0xff]
  %v604 = vld [vmem:[%s8 + $0xb8] sm:$0xff]
  %v605 = vld [vmem:[%s8 + $0xc0] sm:$0xff]
  %v606 = vld [vmem:[%s8 + $0xc8] sm:$0xff]
  %v607 = vld [vmem:[%s8 + $0xd0] sm:$0xff]
  %v608 = vld [vmem:[%s8 + $0xd8] sm:$0xff]
  %v609 = vld [vmem:[%s8 + $0xe0] sm:$0xff]
  %v610 = vld [vmem:[%s8 + $0xe8] sm:$0xff]
  %v611 = vld [vmem:[%s8 + $0xf0] sm:$0xff]
  %v612 = vld [vmem:[%s8 + $0xf8] sm:$0xff]
  %v613 = vld [vmem:[%s8 + $0x100] sm:$0xff]
  %v614 = vld [vmem:[%s8 + $0x108] sm:$0xff]
  %v615 = vld [vmem:[%s8 + $0x110] sm:$0xff]
  %v616 = vld [vmem:[%s8 + $0x118] sm:$0xff]
  %v617 = vld [vmem:[%s8 + $0x120] sm:$0xff]
  %v618 = vld [vmem:[%s8 + $0x128] sm:$0xff]
  %v619 = vld [vmem:[%s8 + $0x130] sm:$0xff]
  %v620 = vld [vmem:[%s8 + $0x138] sm:$0xff]
  %v621 = vld [vmem:[%s8 + $0x140] sm:$0xff]
  %v622 = vld [vmem:[%s8 + $0x148] sm:$0xff]
  %v623 = vld [vmem:[%s8 + $0x150] sm:$0xff]
  %v624 = vld [vmem:[%s8 + $0x158] sm:$0xff]
  %v625 = vld [vmem:[%s8 + $0x160] sm:$0xff]
  %v626 = vld [vmem:[%s8 + $0x168] sm:$0xff]
  %v627 = vld [vmem:[%s8 + $0x170] sm:$0xff]
  %v628 = vld [vmem:[%s8 + $0x178] sm:$0xff]
  %v629 = vld [vmem:[%s8 + $0x180] sm:$0xff]
  %v630 = vld [vmem:[%s8 + $0x188] sm:$0xff]
  %v631 = vld [vmem:[%s8 + $0x190] sm:$0xff]
  %v632 = vld [vmem:[%s8 + $0x198] sm:$0xff]
  %v633 = vld [vmem:[%s8 + $0x1a0] sm:$0xff]
  %v634 = vld [vmem:[%s8 + $0x1a8] sm:$0xff]
  %v635 = vld [vmem:[%s8 + $0x1b0] sm:$0xff]
  %v636 = vld [vmem:[%s8 + $0x1b8] sm:$0xff]
  %v637 = vld [vmem:[%s8 + $0x1c0] sm:$0xff]
  %v638 = vld [vmem:[%s8 + $0x1c8] sm:$0xff]
  %v639 = vld [vmem:[%s8 + $0x1d0] sm:$0xff]
  %v640 = vld [vmem:[%s8 + $0x1d8] sm:$0xff]
  %v641 = vld [vmem:[%s8 + $0x1e0] sm:$0xff]
  %v642 = vld [vmem:[%s8 + $0x1e8] sm:$0xff]
  %v643 = vld [vmem:[%s8 + $0x1f0] sm:$0xff]
  %v644 = vld [vmem:[%s8 + $0x1f8] sm:$0xff]
  %v645 = vld [vmem:[#allocation2] sm:$0xff]
  %v646 = vld [vmem:[#allocation2 + $0x8] sm:$0xff]
  %v647 = vld [vmem:[#allocation2 + $0x10] sm:$0xff]
  %v648 = vld [vmem:[#allocation2 + $0x18] sm:$0xff]
  %s649 = scalar_lea.vmem [#allocation2], 448
  %v650 = vld [vmem:[%s649 + $0x20] sm:$0xff]
  %v651 = vld [vmem:[%s649 + $0x28] sm:$0xff]
  %v652 = vld [vmem:[%s649 + $0x30] sm:$0xff]
  %v653 = vld [vmem:[%s649 + $0x38] sm:$0xff]
  %v718 = vunpack.c.l.b16 %v581
  %v719 = vunpack.c.h.b16 %v581
  %v720 = vunpack.c.l.b16 %v582
  %v721 = vunpack.c.h.b16 %v582
  %v722 = vunpack.c.l.b16 %v583
  %v723 = vunpack.c.h.b16 %v583
  %v724 = vunpack.c.l.b16 %v584
  %v725 = vunpack.c.h.b16 %v584
  %v726 = vunpack.c.l.b16 %v585
  %v727 = vunpack.c.h.b16 %v585
  %v728 = vunpack.c.l.b16 %v586
  %v729 = vunpack.c.h.b16 %v586
  %v730 = vunpack.c.l.b16 %v587
  %v731 = vunpack.c.h.b16 %v587
  %v732 = vunpack.c.l.b16 %v588
  %v733 = vunpack.c.h.b16 %v588
  %v734 = vunpack.c.l.b16 %v589
  %v735 = vunpack.c.h.b16 %v589
  %v736 = vunpack.c.l.b16 %v590
  %v737 = vunpack.c.h.b16 %v590
  %v738 = vunpack.c.l.b16 %v591
  %v739 = vunpack.c.h.b16 %v591
  %v740 = vunpack.c.l.b16 %v592
  %v741 = vunpack.c.h.b16 %v592
  %v742 = vunpack.c.l.b16 %v593
  %v743 = vunpack.c.h.b16 %v593
  %v744 = vunpack.c.l.b16 %v594
  %v745 = vunpack.c.h.b16 %v594
  %v746 = vunpack.c.l.b16 %v595
  %v747 = vunpack.c.h.b16 %v595
  %v748 = vunpack.c.l.b16 %v596
  %v749 = vunpack.c.h.b16 %v596
  %v750 = vunpack.c.l.b16 %v597
  %v751 = vunpack.c.h.b16 %v597
  %v752 = vunpack.c.l.b16 %v598
  %v753 = vunpack.c.h.b16 %v598
  %v754 = vunpack.c.l.b16 %v599
  %v755 = vunpack.c.h.b16 %v599
  %v756 = vunpack.c.l.b16 %v600
  %v757 = vunpack.c.h.b16 %v600
  %v758 = vunpack.c.l.b16 %v601
  %v759 = vunpack.c.h.b16 %v601
  %v760 = vunpack.c.l.b16 %v602
  %v761 = vunpack.c.h.b16 %v602
  %v762 = vunpack.c.l.b16 %v603
  %v763 = vunpack.c.h.b16 %v603
  %v764 = vunpack.c.l.b16 %v604
  %v765 = vunpack.c.h.b16 %v604
  %v766 = vunpack.c.l.b16 %v605
  %v767 = vunpack.c.h.b16 %v605
  %v768 = vunpack.c.l.b16 %v606
  %v769 = vunpack.c.h.b16 %v606
  %v770 = vunpack.c.l.b16 %v607
  %v771 = vunpack.c.h.b16 %v607
  %v772 = vunpack.c.l.b16 %v608
  %v773 = vunpack.c.h.b16 %v608
  %v774 = vunpack.c.l.b16 %v609
  %v775 = vunpack.c.h.b16 %v609
  %v776 = vunpack.c.l.b16 %v610
  %v777 = vunpack.c.h.b16 %v610
  %v778 = vunpack.c.l.b16 %v611
  %v779 = vunpack.c.h.b16 %v611
  %v780 = vunpack.c.l.b16 %v612
  %v781 = vunpack.c.h.b16 %v612
  %v782 = vunpack.c.l.b16 %v613
  %v783 = vunpack.c.h.b16 %v613
  %v784 = vunpack.c.l.b16 %v614
  %v785 = vunpack.c.h.b16 %v614
  %v786 = vunpack.c.l.b16 %v615
  %v787 = vunpack.c.h.b16 %v615
  %v788 = vunpack.c.l.b16 %v616
  %v789 = vunpack.c.h.b16 %v616
  %v790 = vunpack.c.l.b16 %v617
  %v791 = vunpack.c.h.b16 %v617
  %v792 = vunpack.c.l.b16 %v618
  %v793 = vunpack.c.h.b16 %v618
  %v794 = vunpack.c.l.b16 %v619
  %v795 = vunpack.c.h.b16 %v619
  %v796 = vunpack.c.l.b16 %v620
  %v797 = vunpack.c.h.b16 %v620
  %v798 = vunpack.c.l.b16 %v621
  %v799 = vunpack.c.h.b16 %v621
  %v800 = vunpack.c.l.b16 %v622
  %v801 = vunpack.c.h.b16 %v622
  %v802 = vunpack.c.l.b16 %v623
  %v803 = vunpack.c.h.b16 %v623
  %v804 = vunpack.c.l.b16 %v624
  %v805 = vunpack.c.h.b16 %v624
  %v806 = vunpack.c.l.b16 %v625
  %v807 = vunpack.c.h.b16 %v625
  %v808 = vunpack.c.l.b16 %v626
  %v809 = vunpack.c.h.b16 %v626
  %v810 = vunpack.c.l.b16 %v627
  %v811 = vunpack.c.h.b16 %v627
  %v812 = vunpack.c.l.b16 %v628
  %v813 = vunpack.c.h.b16 %v628
  %v814 = vunpack.c.l.b16 %v629
  %v815 = vunpack.c.h.b16 %v629
  %v816 = vunpack.c.l.b16 %v630
  %v817 = vunpack.c.h.b16 %v630
  %v818 = vunpack.c.l.b16 %v631
  %v819 = vunpack.c.h.b16 %v631
  %v820 = vunpack.c.l.b16 %v632
  %v821 = vunpack.c.h.b16 %v632
  %v822 = vunpack.c.l.b16 %v633
  %v823 = vunpack.c.h.b16 %v633
  %v824 = vunpack.c.l.b16 %v634
  %v825 = vunpack.c.h.b16 %v634
  %v826 = vunpack.c.l.b16 %v635
  %v827 = vunpack.c.h.b16 %v635
  %v828 = vunpack.c.l.b16 %v636
  %v829 = vunpack.c.h.b16 %v636
  %v830 = vunpack.c.l.b16 %v637
  %v831 = vunpack.c.h.b16 %v637
  %v832 = vunpack.c.l.b16 %v638
  %v833 = vunpack.c.h.b16 %v638
  %v834 = vunpack.c.l.b16 %v639
  %v835 = vunpack.c.h.b16 %v639
  %v836 = vunpack.c.l.b16 %v640
  %v837 = vunpack.c.h.b16 %v640
  %v838 = vunpack.c.l.b16 %v641
  %v839 = vunpack.c.h.b16 %v641
  %v840 = vunpack.c.l.b16 %v642
  %v841 = vunpack.c.h.b16 %v642
  %v842 = vunpack.c.l.b16 %v643
  %v843 = vunpack.c.h.b16 %v643
  %v844 = vunpack.c.l.b16 %v644
  %v845 = vunpack.c.h.b16 %v644
  %v846 = vpack.c.b16 %v722, %v718
  %v847 = vpack.c.b16 %v723, %v719
  %v848 = vpack.c.b16 %v724, %v720
  %v849 = vpack.c.b16 %v725, %v721
  %v850 = vpack.c.b16 %v730, %v726
  %v851 = vpack.c.b16 %v731, %v727
  %v852 = vpack.c.b16 %v732, %v728
  %v853 = vpack.c.b16 %v733, %v729
  %v854 = vpack.c.b16 %v738, %v734
  %v855 = vpack.c.b16 %v739, %v735
  %v856 = vpack.c.b16 %v740, %v736
  %v857 = vpack.c.b16 %v741, %v737
  %v858 = vpack.c.b16 %v746, %v742
  %v859 = vpack.c.b16 %v747, %v743
  %v860 = vpack.c.b16 %v748, %v744
  %v861 = vpack.c.b16 %v749, %v745
  %v862 = vpack.c.b16 %v754, %v750
  %v863 = vpack.c.b16 %v755, %v751
  %v864 = vpack.c.b16 %v756, %v752
  %v865 = vpack.c.b16 %v757, %v753
  %v866 = vpack.c.b16 %v762, %v758
  %v867 = vpack.c.b16 %v763, %v759
  %v868 = vpack.c.b16 %v764, %v760
  %v869 = vpack.c.b16 %v765, %v761
  %v870 = vpack.c.b16 %v770, %v766
  %v871 = vpack.c.b16 %v771, %v767
  %v872 = vpack.c.b16 %v772, %v768
  %v873 = vpack.c.b16 %v773, %v769
  %v874 = vpack.c.b16 %v778, %v774
  %v875 = vpack.c.b16 %v779, %v775
  %v876 = vpack.c.b16 %v780, %v776
  %v877 = vpack.c.b16 %v781, %v777
  %v878 = vpack.c.b16 %v786, %v782
  %v879 = vpack.c.b16 %v787, %v783
  %v880 = vpack.c.b16 %v788, %v784
  %v881 = vpack.c.b16 %v789, %v785
  %v882 = vpack.c.b16 %v794, %v790
  %v883 = vpack.c.b16 %v795, %v791
  %v884 = vpack.c.b16 %v796, %v792
  %v885 = vpack.c.b16 %v797, %v793
  %v886 = vpack.c.b16 %v802, %v798
  %v887 = vpack.c.b16 %v803, %v799
  %v888 = vpack.c.b16 %v804, %v800
  %v889 = vpack.c.b16 %v805, %v801
  %v890 = vpack.c.b16 %v810, %v806
  %v891 = vpack.c.b16 %v811, %v807
  %v892 = vpack.c.b16 %v812, %v808
  %v893 = vpack.c.b16 %v813, %v809
  %v894 = vpack.c.b16 %v818, %v814
  %v895 = vpack.c.b16 %v819, %v815
  %v896 = vpack.c.b16 %v820, %v816
  %v897 = vpack.c.b16 %v821, %v817
  %v898 = vpack.c.b16 %v826, %v822
  %v899 = vpack.c.b16 %v827, %v823
  %v900 = vpack.c.b16 %v828, %v824
  %v901 = vpack.c.b16 %v829, %v825
  %v902 = vpack.c.b16 %v834, %v830
  %v903 = vpack.c.b16 %v835, %v831
  %v904 = vpack.c.b16 %v836, %v832
  %v905 = vpack.c.b16 %v837, %v833
  %v906 = vpack.c.b16 %v842, %v838
  %v907 = vpack.c.b16 %v843, %v839
  %v908 = vpack.c.b16 %v844, %v840
  %v909 = vpack.c.b16 %v845, %v841
  %974 = vmatprep.subr.bf16.mxu0 %v847
  %975 = vmatpush1.bf16.msra.mxu0 %v846
  %976 = vmatprep.subr.bf16.mxu0 %v851
  %977 = vmatpush1.bf16.msra.mxu0 %v850
  %978 = vmatprep.subr.bf16.mxu0 %v855
  %979 = vmatpush1.bf16.msra.mxu0 %v854
  %980 = vmatprep.subr.bf16.mxu0 %v859
  %981 = vmatpush1.bf16.msra.mxu0 %v858
  %982 = vmatprep.subr.bf16.mxu0 %v863
  %983 = vmatpush1.bf16.msra.mxu0 %v862
  %984 = vmatprep.subr.bf16.mxu0 %v867
  %985 = vmatpush1.bf16.msra.mxu0 %v866
  %986 = vmatprep.subr.bf16.mxu0 %v871
  %987 = vmatpush1.bf16.msra.mxu0 %v870
  %988 = vmatprep.subr.bf16.mxu0 %v875
  %989 = vmatpush1.bf16.msra.mxu0 %v874
  %990 = vmatprep.subr.bf16.mxu0 %v879
  %991 = vmatpush1.bf16.msra.mxu0 %v878
  %992 = vmatprep.subr.bf16.mxu0 %v883
  %993 = vmatpush1.bf16.msra.mxu0 %v882
  %994 = vmatprep.subr.bf16.mxu0 %v887
  %995 = vmatpush1.bf16.msra.mxu0 %v886
  %996 = vmatprep.subr.bf16.mxu0 %v891
  %997 = vmatpush1.bf16.msra.mxu0 %v890
  %998 = vmatprep.subr.bf16.mxu0 %v895
  %999 = vmatpush1.bf16.msra.mxu0 %v894
  %1000 = vmatprep.subr.bf16.mxu0 %v899
  %1001 = vmatpush1.bf16.msra.mxu0 %v898
  %1002 = vmatprep.subr.bf16.mxu0 %v903
  %1003 = vmatpush1.bf16.msra.mxu0 %v902
  %1004 = vmatprep.subr.bf16.mxu0 %v907
  %1005 = vmatpush1.bf16.msra.mxu0 %v906
  %1006 = vmatprep.mubr.bf16.mxu0 %v580
  %1007 = vmatmul.mubr.bf16.gmra.mrb[0].mxu0 %v579
  %v1008 = vpop.f32.mrb[0].mxu0
  %v1009 = vadd.f32 %v645, %v1008
  %v1010 = vpop.f32.mrb[0].mxu0
  %v1011 = vadd.f32 %v646, %v1010
  %v1012 = vpop.f32.mrb[0].mxu0
  %v1013 = vadd.f32 %v650, %v1012
  %v1014 = vpop.f32.mrb[0].mxu0
  %v1015 = vadd.f32 %v651, %v1014
  %1016 = vdwg.mxu0
  %1017 = vmatprep.subr.bf16.mxu0 %v849
  %1018 = vmatpush1.bf16.msra.mxu0 %v848
  %1019 = vmatprep.subr.bf16.mxu0 %v853
  %1020 = vmatpush1.bf16.msra.mxu0 %v852
  %1021 = vmatprep.subr.bf16.mxu0 %v857
  %1022 = vmatpush1.bf16.msra.mxu0 %v856
  %1023 = vmatprep.subr.bf16.mxu0 %v861
  %1024 = vmatpush1.bf16.msra.mxu0 %v860
  %1025 = vmatprep.subr.bf16.mxu0 %v865
  %1026 = vmatpush1.bf16.msra.mxu0 %v864
  %1027 = vmatprep.subr.bf16.mxu0 %v869
  %1028 = vmatpush1.bf16.msra.mxu0 %v868
  %1029 = vmatprep.subr.bf16.mxu0 %v873
  %1030 = vmatpush1.bf16.msra.mxu0 %v872
  %1031 = vmatprep.subr.bf16.mxu0 %v877
  %1032 = vmatpush1.bf16.msra.mxu0 %v876
  %1033 = vmatprep.subr.bf16.mxu0 %v881
  %1034 = vmatpush1.bf16.msra.mxu0 %v880
  %1035 = vmatprep.subr.bf16.mxu0 %v885
  %1036 = vmatpush1.bf16.msra.mxu0 %v884
  %1037 = vmatprep.subr.bf16.mxu0 %v889
  %1038 = vmatpush1.bf16.msra.mxu0 %v888
  %1039 = vmatprep.subr.bf16.mxu0 %v893
  %1040 = vmatpush1.bf16.msra.mxu0 %v892
  %1041 = vmatprep.subr.bf16.mxu0 %v897
  %1042 = vmatpush1.bf16.msra.mxu0 %v896
  %1043 = vmatprep.subr.bf16.mxu0 %v901
  %1044 = vmatpush1.bf16.msra.mxu0 %v900
  %1045 = vmatprep.subr.bf16.mxu0 %v905
  %1046 = vmatpush1.bf16.msra.mxu0 %v904
  %1047 = vmatprep.subr.bf16.mxu0 %v909
  %1048 = vmatpush1.bf16.msra.mxu0 %v908
  %1049 = vmatprep.mubr.bf16.mxu0 %v580
  %1050 = vmatmul.mubr.bf16.gmra.mrb[0].mxu0 %v579
  %v1051 = vpop.f32.mrb[0].mxu0
  %v1052 = vadd.f32 %v647, %v1051
  %v1053 = vpop.f32.mrb[0].mxu0
  %v1054 = vadd.f32 %v648, %v1053
  %v1055 = vpop.f32.mrb[0].mxu0
  %v1056 = vadd.f32 %v652, %v1055
  %v1057 = vpop.f32.mrb[0].mxu0
  %v1058 = vadd.f32 %v653, %v1057
  %1059 = vdwg.mxu0
  %v1060 = vxor.u32 %v1009, 2147483648
  %v1061 = vxor.u32 %v1011, 2147483648
  %v1062 = vxor.u32 %v1052, 2147483648
  %v1063 = vxor.u32 %v1013, 2147483648
  %v1064 = vxor.u32 %v1015, 2147483648
  %v1065 = vxor.u32 %v1056, 2147483648
  %v1066 = vmul.f32 %v1060, 1.442695
  %v1067 = vpow.pop %v1066
  %v1068 = vmul.f32 %v1061, 1.442695
  %v1069 = vpow.pop %v1068
  %v1070 = vmul.f32 %v1062, 1.442695
  %v1071 = vpow.pop %v1070
  %v1072 = vmul.f32 %v1063, 1.442695
  %v1073 = vpow.pop %v1072
  %v1074 = vmul.f32 %v1064, 1.442695
  %v1075 = vpow.pop %v1074
  %v1076 = vmul.f32 %v1065, 1.442695
  %v1077 = vpow.pop %v1076
  %v1078 = vadd.f32 %v1067, 1.0
  %v1079 = vadd.f32 %v1069, 1.0
  %v1080 = vadd.f32 %v1071, 1.0
  %v1081 = vadd.f32 %v1073, 1.0
  %v1082 = vadd.f32 %v1075, 1.0
  %v1083 = vadd.f32 %v1077, 1.0
  %v1084 = vrcp.pop %v1078
  %v1085 = vmul.f32 1.0, %v1084
  %v1086 = vrcp.pop %v1079
  %v1087 = vmul.f32 1.0, %v1086
  %v1088 = vrcp.pop %v1080
  %v1089 = vmul.f32 1.0, %v1088
  %v1090 = vrcp.pop %v1081
  %v1091 = vmul.f32 1.0, %v1090
  %v1092 = vrcp.pop %v1082
  %v1093 = vmul.f32 1.0, %v1092
  %v1094 = vrcp.pop %v1083
  %v1095 = vmul.f32 1.0, %v1094
  %v1096 = vtanh.pop %v1054
  %v1097 = vtanh.pop %v1058
  %v1098 = vmul.f32 %v1087, 0.0
  %v1099 = vmul.f32 %v1093, 0.0
  %v1100 = vmul.f32 %v1085, %v1096
  %v1101 = vmul.f32 %v1091, %v1097
  %v1102 = vadd.f32 %v1098, %v1100
  %v1103 = vadd.f32 %v1099, %v1101
  %v1104 = vtanh.pop %v1102
  %v1105 = vtanh.pop %v1103
  %v1106 = vmul.f32 %v1089, %v1104
  %v1107 = vmul.f32 %v1095, %v1105
  %v1108 = vld [vmem:[%s3] sm:$0xff]
  %v1109 = vld [vmem:[%s3 + $0x8] sm:$0xff]
  %vm1110 = vcmp.gt.f32.partialorder %v569, %v1108
  %vm1111 = vcmp.gt.f32.partialorder %v570, %v1109
  %v1112 = vsel %vm1110, 1, 0
  %v1113 = vsel %vm1111, 1, 0
  %1114 = vset.pattern.permute.xlu0 0
  %1115 = vperm.xlu0 %1114, %v1112
  %v1116 = vpop.permute.xlu0 %1115
  %1117 = vset.pattern.permute.xlu0 0
  %1118 = vperm.xlu0 %1117, %v1113
  %v1119 = vpop.permute.xlu0 %1118
  %vm1120 = vcmp.eq.s32.totalorder %v1116, 1
  %vm1121 = vcmp.eq.s32.totalorder %v1119, 1
  %v1122 = vsel %vm1120, %v1106, 0.0
  %v1123 = vsel %vm1121, %v1107, 0.0
  %v1124 = vsel %vm1120, %v1102, 0.0
  %v1125 = vsel %vm1121, %v1103, 0.0
  %v1126 = vadd.f32 %v1122, 0.0
  %v1127 = vadd.f32 %v1123, 0.0
  %v1128 = vmul.f32 %v1122, %v571
  %v1129 = vmul.f32 %v1122, %v572
  %v1130 = vmul.f32 %v1123, %v573
  %v1131 = vmul.f32 %v1123, %v574
  %v1132 = vpack.c.bf16 %v1130, %v1128
  %v1133 = vpack.c.bf16 %v1131, %v1129
  %s1134 = scalar_lea.vmem [#allocation2], 64
  %v1135 = vld [vmem:[%s1134] sm:$0xff]
  %v1136 = vld [vmem:[%s1134 + $0x8] sm:$0xff]
  %v1137 = vld [vmem:[%s1134 + $0x10] sm:$0xff]
  %v1138 = vld [vmem:[%s1134 + $0x18] sm:$0xff]
  %s1139 = scalar_lea.vmem [#allocation2], 384
  %v1140 = vld [vmem:[%s1139 + $0x20] sm:$0xff]
  %v1141 = vld [vmem:[%s1139 + $0x28] sm:$0xff]
  %v1142 = vld [vmem:[%s1139 + $0x30] sm:$0xff]
  %v1143 = vld [vmem:[%s1139 + $0x38] sm:$0xff]
  %1144 = vmatprep.subr.bf16.mxu0 %v847
  %1145 = vmatpush1.bf16.msra.mxu0 %v846
  %1146 = vmatprep.subr.bf16.mxu0 %v851
  %1147 = vmatpush1.bf16.msra.mxu0 %v850
  %1148 = vmatprep.subr.bf16.mxu0 %v855
  %1149 = vmatpush1.bf16.msra.mxu0 %v854
  %1150 = vmatprep.subr.bf16.mxu0 %v859
  %1151 = vmatpush1.bf16.msra.mxu0 %v858
  %1152 = vmatprep.subr.bf16.mxu0 %v863
  %1153 = vmatpush1.bf16.msra.mxu0 %v862
  %1154 = vmatprep.subr.bf16.mxu0 %v867
  %1155 = vmatpush1.bf16.msra.mxu0 %v866
  %1156 = vmatprep.subr.bf16.mxu0 %v871
  %1157 = vmatpush1.bf16.msra.mxu0 %v870
  %1158 = vmatprep.subr.bf16.mxu0 %v875
  %1159 = vmatpush1.bf16.msra.mxu0 %v874
  %1160 = vmatprep.subr.bf16.mxu0 %v879
  %1161 = vmatpush1.bf16.msra.mxu0 %v878
  %1162 = vmatprep.subr.bf16.mxu0 %v883
  %1163 = vmatpush1.bf16.msra.mxu0 %v882
  %1164 = vmatprep.subr.bf16.mxu0 %v887
  %1165 = vmatpush1.bf16.msra.mxu0 %v886
  %1166 = vmatprep.subr.bf16.mxu0 %v891
  %1167 = vmatpush1.bf16.msra.mxu0 %v890
  %1168 = vmatprep.subr.bf16.mxu0 %v895
  %1169 = vmatpush1.bf16.msra.mxu0 %v894
  %1170 = vmatprep.subr.bf16.mxu0 %v899
  %1171 = vmatpush1.bf16.msra.mxu0 %v898
  %1172 = vmatprep.subr.bf16.mxu0 %v903
  %1173 = vmatpush1.bf16.msra.mxu0 %v902
  %1174 = vmatprep.subr.bf16.mxu0 %v907
  %1175 = vmatpush1.bf16.msra.mxu0 %v906
  %1176 = vmatprep.mubr.bf16.mxu0 %v1133
  %1177 = vmatmul.mubr.bf16.gmra.mrb[0].mxu0 %v1132
  %v1178 = vpop.f32.mrb[0].mxu0
  %v1179 = vadd.f32 %v1135, %v1178
  %v1180 = vpop.f32.mrb[0].mxu0
  %v1181 = vadd.f32 %v1136, %v1180
  %v1182 = vpop.f32.mrb[0].mxu0
  %v1183 = vadd.f32 %v1140, %v1182
  %v1184 = vpop.f32.mrb[0].mxu0
  %v1185 = vadd.f32 %v1141, %v1184
  %1186 = vdwg.mxu0
  %1187 = vmatprep.subr.bf16.mxu0 %v849
  %1188 = vmatpush1.bf16.msra.mxu0 %v848
  %1189 = vmatprep.subr.bf16.mxu0 %v853
  %1190 = vmatpush1.bf16.msra.mxu0 %v852
  %1191 = vmatprep.subr.bf16.mxu0 %v857
  %1192 = vmatpush1.bf16.msra.mxu0 %v856
  %1193 = vmatprep.subr.bf16.mxu0 %v861
  %1194 = vmatpush1.bf16.msra.mxu0 %v860
  %1195 = vmatprep.subr.bf16.mxu0 %v865
  %1196 = vmatpush1.bf16.msra.mxu0 %v864
  %1197 = vmatprep.subr.bf16.mxu0 %v869
  %1198 = vmatpush1.bf16.msra.mxu0 %v868
  %1199 = vmatprep.subr.bf16.mxu0 %v873
  %1200 = vmatpush1.bf16.msra.mxu0 %v872
  %1201 = vmatprep.subr.bf16.mxu0 %v877
  %1202 = vmatpush1.bf16.msra.mxu0 %v876
  %1203 = vmatprep.subr.bf16.mxu0 %v881
  %1204 = vmatpush1.bf16.msra.mxu0 %v880
  %1205 = vmatprep.subr.bf16.mxu0 %v885
  %1206 = vmatpush1.bf16.msra.mxu0 %v884
  %1207 = vmatprep.subr.bf16.mxu0 %v889
  %1208 = vmatpush1.bf16.msra.mxu0 %v888
  %1209 = vmatprep.subr.bf16.mxu0 %v893
  %1210 = vmatpush1.bf16.msra.mxu0 %v892
  %1211 = vmatprep.subr.bf16.mxu0 %v897
  %1212 = vmatpush1.bf16.msra.mxu0 %v896
  %1213 = vmatprep.subr.bf16.mxu0 %v901
  %1214 = vmatpush1.bf16.msra.mxu0 %v900
  %1215 = vmatprep.subr.bf16.mxu0 %v905
  %1216 = vmatpush1.bf16.msra.mxu0 %v904
  %1217 = vmatprep.subr.bf16.mxu0 %v909
  %1218 = vmatpush1.bf16.msra.mxu0 %v908
  %1219 = vmatprep.mubr.bf16.mxu0 %v1133
  %1220 = vmatmul.mubr.bf16.gmra.mrb[0].mxu0 %v1132
  %v1221 = vpop.f32.mrb[0].mxu0
  %v1222 = vadd.f32 %v1137, %v1221
  %v1223 = vpop.f32.mrb[0].mxu0
  %v1224 = vadd.f32 %v1138, %v1223
  %v1225 = vpop.f32.mrb[0].mxu0
  %v1226 = vadd.f32 %v1142, %v1225
  %v1227 = vpop.f32.mrb[0].mxu0
  %v1228 = vadd.f32 %v1143, %v1227
  %1229 = vdwg.mxu0
  %v1230 = vxor.u32 %v1179, 2147483648
  %v1231 = vxor.u32 %v1181, 2147483648
  %v1232 = vxor.u32 %v1222, 2147483648
  %v1233 = vxor.u32 %v1183, 2147483648
  %v1234 = vxor.u32 %v1185, 2147483648
  %v1235 = vxor.u32 %v1226, 2147483648
  %v1236 = vmul.f32 %v1230, 1.442695
  %v1237 = vpow.pop %v1236
  %v1238 = vmul.f32 %v1231, 1.442695
  %v1239 = vpow.pop %v1238
  %v1240 = vmul.f32 %v1232, 1.442695
  %v1241 = vpow.pop %v1240
  %v1242 = vmul.f32 %v1233, 1.442695
  %v1243 = vpow.pop %v1242
  %v1244 = vmul.f32 %v1234, 1.442695
  %v1245 = vpow.pop %v1244
  %v1246 = vmul.f32 %v1235, 1.442695
  %v1247 = vpow.pop %v1246
  %v1248 = vadd.f32 %v1237, 1.0
  %v1249 = vadd.f32 %v1239, 1.0
  %v1250 = vadd.f32 %v1241, 1.0
  %v1251 = vadd.f32 %v1243, 1.0
  %v1252 = vadd.f32 %v1245, 1.0
  %v1253 = vadd.f32 %v1247, 1.0
  %v1254 = vrcp.pop %v1248
  %v1255 = vmul.f32 1.0, %v1254
  %v1256 = vrcp.pop %v1249
  %v1257 = vmul.f32 1.0, %v1256
  %v1258 = vrcp.pop %v1250
  %v1259 = vmul.f32 1.0, %v1258
  %v1260 = vrcp.pop %v1251
  %v1261 = vmul.f32 1.0, %v1260
  %v1262 = vrcp.pop %v1252
  %v1263 = vmul.f32 1.0, %v1262
  %v1264 = vrcp.pop %v1253
  %v1265 = vmul.f32 1.0, %v1264
  %v1266 = vtanh.pop %v1224
  %v1267 = vtanh.pop %v1228
  %v1268 = vmul.f32 %v1257, %v1124
  %v1269 = vmul.f32 %v1263, %v1125
  %v1270 = vmul.f32 %v1255, %v1266
  %v1271 = vmul.f32 %v1261, %v1267
  %v1272 = vadd.f32 %v1268, %v1270
  %v1273 = vadd.f32 %v1269, %v1271
  %v1274 = vtanh.pop %v1272
  %v1275 = vtanh.pop %v1273
  %v1276 = vmul.f32 %v1259, %v1274
  %v1277 = vmul.f32 %v1265, %v1275
  %s1278 = scalar_lea.vmem %s3, 16
  %v1279 = vld [vmem:[%s1278] sm:$0xff]
  %v1280 = vld [vmem:[%s1278 + $0x8] sm:$0xff]
  %vm1281 = vcmp.gt.f32.partialorder %v569, %v1279
  %vm1282 = vcmp.gt.f32.partialorder %v570, %v1280
  %v1283 = vsel %vm1281, 1, 0
  %v1284 = vsel %vm1282, 1, 0
  %1285 = vset.pattern.permute.xlu0 0
  %1286 = vperm.xlu0 %1285, %v1283
  %v1287 = vpop.permute.xlu0 %1286
  %1288 = vset.pattern.permute.xlu0 0
  %1289 = vperm.xlu0 %1288, %v1284
  %v1290 = vpop.permute.xlu0 %1289
  %vm1291 = vcmp.eq.s32.totalorder %v1287, 1
  %vm1292 = vcmp.eq.s32.totalorder %v1290, 1
  %v1293 = vsel %vm1291, %v1276, %v1122
  %v1294 = vsel %vm1292, %v1277, %v1123
  %v1295 = vsel %vm1291, %v1272, %v1124
  %v1296 = vsel %vm1292, %v1273, %v1125
  %v1297 = vsel %vm1291, %v1276, 0.0
  %v1298 = vsel %vm1292, %v1277, 0.0
  %v1299 = vadd.f32 %v1126, %v1297
  %v1300 = vadd.f32 %v1127, %v1298
  %v1301 = vmul.f32 %v1293, %v571
  %v1302 = vmul.f32 %v1293, %v572
  %v1303 = vmul.f32 %v1294, %v573
  %v1304 = vmul.f32 %v1294, %v574
  %v1305 = vpack.c.bf16 %v1303, %v1301
  %v1306 = vpack.c.bf16 %v1304, %v1302
  %s1307 = scalar_lea.vmem [#allocation2], 128
  %v1308 = vld [vmem:[%s1307] sm:$0xff]
  %v1309 = vld [vmem:[%s1307 + $0x8] sm:$0xff]
  %v1310 = vld [vmem:[%s1307 + $0x10] sm:$0xff]
  %v1311 = vld [vmem:[%s1307 + $0x18] sm:$0xff]
  %s1312 = scalar_lea.vmem [#allocation2], 320
  %v1313 = vld [vmem:[%s1312 + $0x20] sm:$0xff]
  %v1314 = vld [vmem:[%s1312 + $0x28] sm:$0xff]
  %v1315 = vld [vmem:[%s1312 + $0x30] sm:$0xff]
  %v1316 = vld [vmem:[%s1312 + $0x38] sm:$0xff]
  %1317 = vmatprep.subr.bf16.mxu0 %v847
  %1318 = vmatpush1.bf16.msra.mxu0 %v846
  %1319 = vmatprep.subr.bf16.mxu0 %v851
  %1320 = vmatpush1.bf16.msra.mxu0 %v850
  %1321 = vmatprep.subr.bf16.mxu0 %v855
  %1322 = vmatpush1.bf16.msra.mxu0 %v854
  %1323 = vmatprep.subr.bf16.mxu0 %v859
  %1324 = vmatpush1.bf16.msra.mxu0 %v858
  %1325 = vmatprep.subr.bf16.mxu0 %v863
  %1326 = vmatpush1.bf16.msra.mxu0 %v862
  %1327 = vmatprep.subr.bf16.mxu0 %v867
  %1328 = vmatpush1.bf16.msra.mxu0 %v866
  %1329 = vmatprep.subr.bf16.mxu0 %v871
  %1330 = vmatpush1.bf16.msra.mxu0 %v870
  %1331 = vmatprep.subr.bf16.mxu0 %v875
  %1332 = vmatpush1.bf16.msra.mxu0 %v874
  %1333 = vmatprep.subr.bf16.mxu0 %v879
  %1334 = vmatpush1.bf16.msra.mxu0 %v878
  %1335 = vmatprep.subr.bf16.mxu0 %v883
  %1336 = vmatpush1.bf16.msra.mxu0 %v882
  %1337 = vmatprep.subr.bf16.mxu0 %v887
  %1338 = vmatpush1.bf16.msra.mxu0 %v886
  %1339 = vmatprep.subr.bf16.mxu0 %v891
  %1340 = vmatpush1.bf16.msra.mxu0 %v890
  %1341 = vmatprep.subr.bf16.mxu0 %v895
  %1342 = vmatpush1.bf16.msra.mxu0 %v894
  %1343 = vmatprep.subr.bf16.mxu0 %v899
  %1344 = vmatpush1.bf16.msra.mxu0 %v898
  %1345 = vmatprep.subr.bf16.mxu0 %v903
  %1346 = vmatpush1.bf16.msra.mxu0 %v902
  %1347 = vmatprep.subr.bf16.mxu0 %v907
  %1348 = vmatpush1.bf16.msra.mxu0 %v906
  %1349 = vmatprep.mubr.bf16.mxu0 %v1306
  %1350 = vmatmul.mubr.bf16.gmra.mrb[0].mxu0 %v1305
  %v1351 = vpop.f32.mrb[0].mxu0
  %v1352 = vadd.f32 %v1308, %v1351
  %v1353 = vpop.f32.mrb[0].mxu0
  %v1354 = vadd.f32 %v1309, %v1353
  %v1355 = vpop.f32.mrb[0].mxu0
  %v1356 = vadd.f32 %v1313, %v1355
  %v1357 = vpop.f32.mrb[0].mxu0
  %v1358 = vadd.f32 %v1314, %v1357
  %1359 = vdwg.mxu0
  %1360 = vmatprep.subr.bf16.mxu0 %v849
  %1361 = vmatpush1.bf16.msra.mxu0 %v848
  %1362 = vmatprep.subr.bf16.mxu0 %v853
  %1363 = vmatpush1.bf16.msra.mxu0 %v852
  %1364 = vmatprep.subr.bf16.mxu0 %v857
  %1365 = vmatpush1.bf16.msra.mxu0 %v856
  %1366 = vmatprep.subr.bf16.mxu0 %v861
  %1367 = vmatpush1.bf16.msra.mxu0 %v860
  %1368 = vmatprep.subr.bf16.mxu0 %v865
  %1369 = vmatpush1.bf16.msra.mxu0 %v864
  %1370 = vmatprep.subr.bf16.mxu0 %v869
  %1371 = vmatpush1.bf16.msra.mxu0 %v868
  %1372 = vmatprep.subr.bf16.mxu0 %v873
  %1373 = vmatpush1.bf16.msra.mxu0 %v872
  %1374 = vmatprep.subr.bf16.mxu0 %v877
  %1375 = vmatpush1.bf16.msra.mxu0 %v876
  %1376 = vmatprep.subr.bf16.mxu0 %v881
  %1377 = vmatpush1.bf16.msra.mxu0 %v880
  %1378 = vmatprep.subr.bf16.mxu0 %v885
  %1379 = vmatpush1.bf16.msra.mxu0 %v884
  %1380 = vmatprep.subr.bf16.mxu0 %v889
  %1381 = vmatpush1.bf16.msra.mxu0 %v888
  %1382 = vmatprep.subr.bf16.mxu0 %v893
  %1383 = vmatpush1.bf16.msra.mxu0 %v892
  %1384 = vmatprep.subr.bf16.mxu0 %v897
  %1385 = vmatpush1.bf16.msra.mxu0 %v896
  %1386 = vmatprep.subr.bf16.mxu0 %v901
  %1387 = vmatpush1.bf16.msra.mxu0 %v900
  %1388 = vmatprep.subr.bf16.mxu0 %v905
  %1389 = vmatpush1.bf16.msra.mxu0 %v904
  %1390 = vmatprep.subr.bf16.mxu0 %v909
  %1391 = vmatpush1.bf16.msra.mxu0 %v908
  %1392 = vmatprep.mubr.bf16.mxu0 %v1306
  %1393 = vmatmul.mubr.bf16.gmra.mrb[0].mxu0 %v1305
  %v1394 = vpop.f32.mrb[0].mxu0
  %v1395 = vadd.f32 %v1310, %v1394
  %v1396 = vpop.f32.mrb[0].mxu0
  %v1397 = vadd.f32 %v1311, %v1396
  %v1398 = vpop.f32.mrb[0].mxu0
  %v1399 = vadd.f32 %v1315, %v1398
  %v1400 = vpop.f32.mrb[0].mxu0
  %v1401 = vadd.f32 %v1316, %v1400
  %1402 = vdwg.mxu0
  %v1403 = vxor.u32 %v1352, 2147483648
  %v1404 = vxor.u32 %v1354, 2147483648
  %v1405 = vxor.u32 %v1395, 2147483648
  %v1406 = vxor.u32 %v1356, 2147483648
  %v1407 = vxor.u32 %v1358, 2147483648
  %v1408 = vxor.u32 %v1399, 2147483648
  %v1409 = vmul.f32 %v1403, 1.442695
  %v1410 = vpow.pop %v1409
  %v1411 = vmul.f32 %v1404, 1.442695
  %v1412 = vpow.pop %v1411
  %v1413 = vmul.f32 %v1405, 1.442695
  %v1414 = vpow.pop %v1413
  %v1415 = vmul.f32 %v1406, 1.442695
  %v1416 = vpow.pop %v1415
  %v1417 = vmul.f32 %v1407, 1.442695
  %v1418 = vpow.pop %v1417
  %v1419 = vmul.f32 %v1408, 1.442695
  %v1420 = vpow.pop %v1419
  %v1421 = vadd.f32 %v1410, 1.0
  %v1422 = vadd.f32 %v1412, 1.0
  %v1423 = vadd.f32 %v1414, 1.0
  %v1424 = vadd.f32 %v1416, 1.0
  %v1425 = vadd.f32 %v1418, 1.0
  %v1426 = vadd.f32 %v1420, 1.0
  %v1427 = vrcp.pop %v1421
  %v1428 = vmul.f32 1.0, %v1427
  %v1429 = vrcp.pop %v1422
  %v1430 = vmul.f32 1.0, %v1429
  %v1431 = vrcp.pop %v1423
  %v1432 = vmul.f32 1.0, %v1431
  %v1433 = vrcp.pop %v1424
  %v1434 = vmul.f32 1.0, %v1433
  %v1435 = vrcp.pop %v1425
  %v1436 = vmul.f32 1.0, %v1435
  %v1437 = vrcp.pop %v1426
  %v1438 = vmul.f32 1.0, %v1437
  %v1439 = vtanh.pop %v1397
  %v1440 = vtanh.pop %v1401
  %v1441 = vmul.f32 %v1430, %v1295
  %v1442 = vmul.f32 %v1436, %v1296
  %v1443 = vmul.f32 %v1428, %v1439
  %v1444 = vmul.f32 %v1434, %v1440
  %v1445 = vadd.f32 %v1441, %v1443
  %v1446 = vadd.f32 %v1442, %v1444
  %v1447 = vtanh.pop %v1445
  %v1448 = vtanh.pop %v1446
  %v1449 = vmul.f32 %v1432, %v1447
  %v1450 = vmul.f32 %v1438, %v1448
  %s1451 = scalar_lea.vmem %s3, 32
  %v1452 = vld [vmem:[%s1451] sm:$0xff]
  %v1453 = vld [vmem:[%s1451 + $0x8] sm:$0xff]
  %vm1454 = vcmp.gt.f32.partialorder %v569, %v1452
  %vm1455 = vcmp.gt.f32.partialorder %v570, %v1453
  %v1456 = vsel %vm1454, 1, 0
  %v1457 = vsel %vm1455, 1, 0
  %1458 = vset.pattern.permute.xlu0 0
  %1459 = vperm.xlu0 %1458, %v1456
  %v1460 = vpop.permute.xlu0 %1459
  %1461 = vset.pattern.permute.xlu0 0
  %1462 = vperm.xlu0 %1461, %v1457
  %v1463 = vpop.permute.xlu0 %1462
  %vm1464 = vcmp.eq.s32.totalorder %v1460, 1
  %vm1465 = vcmp.eq.s32.totalorder %v1463, 1
  %v1466 = vsel %vm1464, %v1449, %v1293
  %v1467 = vsel %vm1465, %v1450, %v1294
  %v1468 = vsel %vm1464, %v1445, %v1295
  %v1469 = vsel %vm1465, %v1446, %v1296
  %v1470 = vsel %vm1464, %v1449, 0.0
  %v1471 = vsel %vm1465, %v1450, 0.0
  %v1472 = vadd.f32 %v1299, %v1470
  %v1473 = vadd.f32 %v1300, %v1471
  %v1474 = vmul.f32 %v1466, %v571
  %v1475 = vmul.f32 %v1466, %v572
  %v1476 = vmul.f32 %v1467, %v573
  %v1477 = vmul.f32 %v1467, %v574
  %v1478 = vpack.c.bf16 %v1476, %v1474
  %v1479 = vpack.c.bf16 %v1477, %v1475
  %s1480 = scalar_lea.vmem [#allocation2], 192
  %v1481 = vld [vmem:[%s1480] sm:$0xff]
  %v1482 = vld [vmem:[%s1480 + $0x8] sm:$0xff]
  %v1483 = vld [vmem:[%s1480 + $0x10] sm:$0xff]
  %v1484 = vld [vmem:[%s1480 + $0x18] sm:$0xff]
  %s1485 = scalar_lea.vmem [#allocation2], 256
  %v1486 = vld [vmem:[%s1485 + $0x20] sm:$0xff]
  %v1487 = vld [vmem:[%s1485 + $0x28] sm:$0xff]
  %v1488 = vld [vmem:[%s1485 + $0x30] sm:$0xff]
  %v1489 = vld [vmem:[%s1485 + $0x38] sm:$0xff]
  %1490 = vmatprep.subr.bf16.mxu0 %v847
  %1491 = vmatpush1.bf16.msra.mxu0 %v846
  %1492 = vmatprep.subr.bf16.mxu0 %v851
  %1493 = vmatpush1.bf16.msra.mxu0 %v850
  %1494 = vmatprep.subr.bf16.mxu0 %v855
  %1495 = vmatpush1.bf16.msra.mxu0 %v854
  %1496 = vmatprep.subr.bf16.mxu0 %v859
  %1497 = vmatpush1.bf16.msra.mxu0 %v858
  %1498 = vmatprep.subr.bf16.mxu0 %v863
  %1499 = vmatpush1.bf16.msra.mxu0 %v862
  %1500 = vmatprep.subr.bf16.mxu0 %v867
  %1501 = vmatpush1.bf16.msra.mxu0 %v866
  %1502 = vmatprep.subr.bf16.mxu0 %v871
  %1503 = vmatpush1.bf16.msra.mxu0 %v870
  %1504 = vmatprep.subr.bf16.mxu0 %v875
  %1505 = vmatpush1.bf16.msra.mxu0 %v874
  %1506 = vmatprep.subr.bf16.mxu0 %v879
  %1507 = vmatpush1.bf16.msra.mxu0 %v878
  %1508 = vmatprep.subr.bf16.mxu0 %v883
  %1509 = vmatpush1.bf16.msra.mxu0 %v882
  %1510 = vmatprep.subr.bf16.mxu0 %v887
  %1511 = vmatpush1.bf16.msra.mxu0 %v886
  %1512 = vmatprep.subr.bf16.mxu0 %v891
  %1513 = vmatpush1.bf16.msra.mxu0 %v890
  %1514 = vmatprep.subr.bf16.mxu0 %v895
  %1515 = vmatpush1.bf16.msra.mxu0 %v894
  %1516 = vmatprep.subr.bf16.mxu0 %v899
  %1517 = vmatpush1.bf16.msra.mxu0 %v898
  %1518 = vmatprep.subr.bf16.mxu0 %v903
  %1519 = vmatpush1.bf16.msra.mxu0 %v902
  %1520 = vmatprep.subr.bf16.mxu0 %v907
  %1521 = vmatpush1.bf16.msra.mxu0 %v906
  %1522 = vmatprep.mubr.bf16.mxu0 %v1479
  %1523 = vmatmul.mubr.bf16.gmra.mrb[0].mxu0 %v1478
  %v1524 = vpop.f32.mrb[0].mxu0
  %v1525 = vadd.f32 %v1481, %v1524
  %v1526 = vpop.f32.mrb[0].mxu0
  %v1527 = vadd.f32 %v1482, %v1526
  %v1528 = vpop.f32.mrb[0].mxu0
  %v1529 = vadd.f32 %v1486, %v1528
  %v1530 = vpop.f32.mrb[0].mxu0
  %v1531 = vadd.f32 %v1487, %v1530
  %1532 = vdwg.mxu0
  %1533 = vmatprep.subr.bf16.mxu0 %v849
  %1534 = vmatpush1.bf16.msra.mxu0 %v848
  %1535 = vmatprep.subr.bf16.mxu0 %v853
  %1536 = vmatpush1.bf16.msra.mxu0 %v852
  %1537 = vmatprep.subr.bf16.mxu0 %v857
  %1538 = vmatpush1.bf16.msra.mxu0 %v856
  %1539 = vmatprep.subr.bf16.mxu0 %v861
  %1540 = vmatpush1.bf16.msra.mxu0 %v860
  %1541 = vmatprep.subr.bf16.mxu0 %v865
  %1542 = vmatpush1.bf16.msra.mxu0 %v864
  %1543 = vmatprep.subr.bf16.mxu0 %v869
  %1544 = vmatpush1.bf16.msra.mxu0 %v868
  %1545 = vmatprep.subr.bf16.mxu0 %v873
  %1546 = vmatpush1.bf16.msra.mxu0 %v872
  %1547 = vmatprep.subr.bf16.mxu0 %v877
  %1548 = vmatpush1.bf16.msra.mxu0 %v876
  %1549 = vmatprep.subr.bf16.mxu0 %v881
  %1550 = vmatpush1.bf16.msra.mxu0 %v880
  %1551 = vmatprep.subr.bf16.mxu0 %v885
  %1552 = vmatpush1.bf16.msra.mxu0 %v884
  %1553 = vmatprep.subr.bf16.mxu0 %v889
  %1554 = vmatpush1.bf16.msra.mxu0 %v888
  %1555 = vmatprep.subr.bf16.mxu0 %v893
  %1556 = vmatpush1.bf16.msra.mxu0 %v892
  %1557 = vmatprep.subr.bf16.mxu0 %v897
  %1558 = vmatpush1.bf16.msra.mxu0 %v896
  %1559 = vmatprep.subr.bf16.mxu0 %v901
  %1560 = vmatpush1.bf16.msra.mxu0 %v900
  %1561 = vmatprep.subr.bf16.mxu0 %v905
  %1562 = vmatpush1.bf16.msra.mxu0 %v904
  %1563 = vmatprep.subr.bf16.mxu0 %v909
  %1564 = vmatpush1.bf16.msra.mxu0 %v908
  %1565 = vmatprep.mubr.bf16.mxu0 %v1479
  %1566 = vmatmul.mubr.bf16.gmra.mrb[0].mxu0 %v1478
  %v1567 = vpop.f32.mrb[0].mxu0
  %v1568 = vadd.f32 %v1483, %v1567
  %v1569 = vpop.f32.mrb[0].mxu0
  %v1570 = vadd.f32 %v1484, %v1569
  %v1571 = vpop.f32.mrb[0].mxu0
  %v1572 = vadd.f32 %v1488, %v1571
  %v1573 = vpop.f32.mrb[0].mxu0
  %v1574 = vadd.f32 %v1489, %v1573
  %1575 = vdwg.mxu0
  %v1576 = vxor.u32 %v1525, 2147483648
  %v1577 = vxor.u32 %v1527, 2147483648
  %v1578 = vxor.u32 %v1568, 2147483648
  %v1579 = vxor.u32 %v1529, 2147483648
  %v1580 = vxor.u32 %v1531, 2147483648
  %v1581 = vxor.u32 %v1572, 2147483648
  %v1582 = vmul.f32 %v1576, 1.442695
  %v1583 = vpow.pop %v1582
  %v1584 = vmul.f32 %v1577, 1.442695
  %v1585 = vpow.pop %v1584
  %v1586 = vmul.f32 %v1578, 1.442695
  %v1587 = vpow.pop %v1586
  %v1588 = vmul.f32 %v1579, 1.442695
  %v1589 = vpow.pop %v1588
  %v1590 = vmul.f32 %v1580, 1.442695
  %v1591 = vpow.pop %v1590
  %v1592 = vmul.f32 %v1581, 1.442695
  %v1593 = vpow.pop %v1592
  %v1594 = vadd.f32 %v1583, 1.0
  %v1595 = vadd.f32 %v1585, 1.0
  %v1596 = vadd.f32 %v1587, 1.0
  %v1597 = vadd.f32 %v1589, 1.0
  %v1598 = vadd.f32 %v1591, 1.0
  %v1599 = vadd.f32 %v1593, 1.0
  %v1600 = vrcp.pop %v1594
  %v1601 = vmul.f32 1.0, %v1600
  %v1602 = vrcp.pop %v1595
  %v1603 = vmul.f32 1.0, %v1602
  %v1604 = vrcp.pop %v1596
  %v1605 = vmul.f32 1.0, %v1604
  %v1606 = vrcp.pop %v1597
  %v1607 = vmul.f32 1.0, %v1606
  %v1608 = vrcp.pop %v1598
  %v1609 = vmul.f32 1.0, %v1608
  %v1610 = vrcp.pop %v1599
  %v1611 = vmul.f32 1.0, %v1610
  %v1612 = vtanh.pop %v1570
  %v1613 = vtanh.pop %v1574
  %v1614 = vmul.f32 %v1603, %v1468
  %v1615 = vmul.f32 %v1609, %v1469
  %v1616 = vmul.f32 %v1601, %v1612
  %v1617 = vmul.f32 %v1607, %v1613
  %v1618 = vadd.f32 %v1614, %v1616
  %v1619 = vadd.f32 %v1615, %v1617
  %v1620 = vtanh.pop %v1618
  %v1621 = vtanh.pop %v1619
  %v1622 = vmul.f32 %v1605, %v1620
  %v1623 = vmul.f32 %v1611, %v1621
  %s1624 = scalar_lea.vmem %s3, 48
  %v1625 = vld [vmem:[%s1624] sm:$0xff]
  %v1626 = vld [vmem:[%s1624 + $0x8] sm:$0xff]
  %vm1627 = vcmp.gt.f32.partialorder %v569, %v1625
  %vm1628 = vcmp.gt.f32.partialorder %v570, %v1626
  %v1629 = vsel %vm1627, 1, 0
  %v1630 = vsel %vm1628, 1, 0
  %1631 = vset.pattern.permute.xlu0 0
  %1632 = vperm.xlu0 %1631, %v1629
  %v1633 = vpop.permute.xlu0 %1632
  %1634 = vset.pattern.permute.xlu0 0
  %1635 = vperm.xlu0 %1634, %v1630
  %v1636 = vpop.permute.xlu0 %1635
  %vm1637 = vcmp.eq.s32.totalorder %v1633, 1
  %vm1638 = vcmp.eq.s32.totalorder %v1636, 1
  %v1639 = vsel %vm1637, %v1622, %v1466
  %v1640 = vsel %vm1638, %v1623, %v1467
  %v1641 = vsel %vm1637, %v1618, %v1468
  %v1642 = vsel %vm1638, %v1619, %v1469
  %v1643 = vsel %vm1637, %v1622, 0.0
  %v1644 = vsel %vm1638, %v1623, 0.0
  %v1645 = vadd.f32 %v1472, %v1643
  %v1646 = vadd.f32 %v1473, %v1644
  %v1647 = vmul.f32 %v1639, %v571
  %v1648 = vmul.f32 %v1639, %v572
  %v1649 = vmul.f32 %v1640, %v573
  %v1650 = vmul.f32 %v1640, %v574
  %v1651 = vpack.c.bf16 %v1649, %v1647
  %v1652 = vpack.c.bf16 %v1650, %v1648
  %v1653 = vld [vmem:[%s1485] sm:$0xff]
  %v1654 = vld [vmem:[%s1485 + $0x8] sm:$0xff]
  %v1655 = vld [vmem:[%s1485 + $0x10] sm:$0xff]
  %v1656 = vld [vmem:[%s1485 + $0x18] sm:$0xff]
  %v1657 = vld [vmem:[%s1480 + $0x20] sm:$0xff]
  %v1658 = vld [vmem:[%s1480 + $0x28] sm:$0xff]
  %v1659 = vld [vmem:[%s1480 + $0x30] sm:$0xff]
  %v1660 = vld [vmem:[%s1480 + $0x38] sm:$0xff]
  %1661 = vmatprep.subr.bf16.mxu0 %v847
  %1662 = vmatpush1.bf16.msra.mxu0 %v846
  %1663 = vmatprep.subr.bf16.mxu0 %v851
  %1664 = vmatpush1.bf16.msra.mxu0 %v850
  %1665 = vmatprep.subr.bf16.mxu0 %v855
  %1666 = vmatpush1.bf16.msra.mxu0 %v854
  %1667 = vmatprep.subr.bf16.mxu0 %v859
  %1668 = vmatpush1.bf16.msra.mxu0 %v858
  %1669 = vmatprep.subr.bf16.mxu0 %v863
  %1670 = vmatpush1.bf16.msra.mxu0 %v862
  %1671 = vmatprep.subr.bf16.mxu0 %v867
  %1672 = vmatpush1.bf16.msra.mxu0 %v866
  %1673 = vmatprep.subr.bf16.mxu0 %v871
  %1674 = vmatpush1.bf16.msra.mxu0 %v870
  %1675 = vmatprep.subr.bf16.mxu0 %v875
  %1676 = vmatpush1.bf16.msra.mxu0 %v874
  %1677 = vmatprep.subr.bf16.mxu0 %v879
  %1678 = vmatpush1.bf16.msra.mxu0 %v878
  %1679 = vmatprep.subr.bf16.mxu0 %v883
  %1680 = vmatpush1.bf16.msra.mxu0 %v882
  %1681 = vmatprep.subr.bf16.mxu0 %v887
  %1682 = vmatpush1.bf16.msra.mxu0 %v886
  %1683 = vmatprep.subr.bf16.mxu0 %v891
  %1684 = vmatpush1.bf16.msra.mxu0 %v890
  %1685 = vmatprep.subr.bf16.mxu0 %v895
  %1686 = vmatpush1.bf16.msra.mxu0 %v894
  %1687 = vmatprep.subr.bf16.mxu0 %v899
  %1688 = vmatpush1.bf16.msra.mxu0 %v898
  %1689 = vmatprep.subr.bf16.mxu0 %v903
  %1690 = vmatpush1.bf16.msra.mxu0 %v902
  %1691 = vmatprep.subr.bf16.mxu0 %v907
  %1692 = vmatpush1.bf16.msra.mxu0 %v906
  %1693 = vmatprep.mubr.bf16.mxu0 %v1652
  %1694 = vmatmul.mubr.bf16.gmra.mrb[0].mxu0 %v1651
  %v1695 = vpop.f32.mrb[0].mxu0
  %v1696 = vadd.f32 %v1653, %v1695
  %v1697 = vpop.f32.mrb[0].mxu0
  %v1698 = vadd.f32 %v1654, %v1697
  %v1699 = vpop.f32.mrb[0].mxu0
  %v1700 = vadd.f32 %v1657, %v1699
  %v1701 = vpop.f32.mrb[0].mxu0
  %v1702 = vadd.f32 %v1658, %v1701
  %1703 = vdwg.mxu0
  %1704 = vmatprep.subr.bf16.mxu0 %v849
  %1705 = vmatpush1.bf16.msra.mxu0 %v848
  %1706 = vmatprep.subr.bf16.mxu0 %v853
  %1707 = vmatpush1.bf16.msra.mxu0 %v852
  %1708 = vmatprep.subr.bf16.mxu0 %v857
  %1709 = vmatpush1.bf16.msra.mxu0 %v856
  %1710 = vmatprep.subr.bf16.mxu0 %v861
  %1711 = vmatpush1.bf16.msra.mxu0 %v860
  %1712 = vmatprep.subr.bf16.mxu0 %v865
  %1713 = vmatpush1.bf16.msra.mxu0 %v864
  %1714 = vmatprep.subr.bf16.mxu0 %v869
  %1715 = vmatpush1.bf16.msra.mxu0 %v868
  %1716 = vmatprep.subr.bf16.mxu0 %v873
  %1717 = vmatpush1.bf16.msra.mxu0 %v872
  %1718 = vmatprep.subr.bf16.mxu0 %v877
  %1719 = vmatpush1.bf16.msra.mxu0 %v876
  %1720 = vmatprep.subr.bf16.mxu0 %v881
  %1721 = vmatpush1.bf16.msra.mxu0 %v880
  %1722 = vmatprep.subr.bf16.mxu0 %v885
  %1723 = vmatpush1.bf16.msra.mxu0 %v884
  %1724 = vmatprep.subr.bf16.mxu0 %v889
  %1725 = vmatpush1.bf16.msra.mxu0 %v888
  %1726 = vmatprep.subr.bf16.mxu0 %v893
  %1727 = vmatpush1.bf16.msra.mxu0 %v892
  %1728 = vmatprep.subr.bf16.mxu0 %v897
  %1729 = vmatpush1.bf16.msra.mxu0 %v896
  %1730 = vmatprep.subr.bf16.mxu0 %v901
  %1731 = vmatpush1.bf16.msra.mxu0 %v900
  %1732 = vmatprep.subr.bf16.mxu0 %v905
  %1733 = vmatpush1.bf16.msra.mxu0 %v904
  %1734 = vmatprep.subr.bf16.mxu0 %v909
  %1735 = vmatpush1.bf16.msra.mxu0 %v908
  %1736 = vmatprep.mubr.bf16.mxu0 %v1652
  %1737 = vmatmul.mubr.bf16.gmra.mrb[0].mxu0 %v1651
  %v1738 = vpop.f32.mrb[0].mxu0
  %v1739 = vadd.f32 %v1655, %v1738
  %v1740 = vpop.f32.mrb[0].mxu0
  %v1741 = vadd.f32 %v1656, %v1740
  %v1742 = vpop.f32.mrb[0].mxu0
  %v1743 = vadd.f32 %v1659, %v1742
  %v1744 = vpop.f32.mrb[0].mxu0
  %v1745 = vadd.f32 %v1660, %v1744
  %1746 = vdwg.mxu0
  %v1747 = vxor.u32 %v1696, 2147483648
  %v1748 = vxor.u32 %v1698, 2147483648
  %v1749 = vxor.u32 %v1739, 2147483648
  %v1750 = vxor.u32 %v1700, 2147483648
  %v1751 = vxor.u32 %v1702, 2147483648
  %v1752 = vxor.u32 %v1743, 2147483648
  %v1753 = vmul.f32 %v1747, 1.442695
  %v1754 = vpow.pop %v1753
  %v1755 = vmul.f32 %v1748, 1.442695
  %v1756 = vpow.pop %v1755
  %v1757 = vmul.f32 %v1749, 1.442695
  %v1758 = vpow.pop %v1757
  %v1759 = vmul.f32 %v1750, 1.442695
  %v1760 = vpow.pop %v1759
  %v1761 = vmul.f32 %v1751, 1.442695
  %v1762 = vpow.pop %v1761
  %v1763 = vmul.f32 %v1752, 1.442695
  %v1764 = vpow.pop %v1763
  %v1765 = vadd.f32 %v1754, 1.0
  %v1766 = vadd.f32 %v1756, 1.0
  %v1767 = vadd.f32 %v1758, 1.0
  %v1768 = vadd.f32 %v1760, 1.0
  %v1769 = vadd.f32 %v1762, 1.0
  %v1770 = vadd.f32 %v1764, 1.0
  %v1771 = vrcp.pop %v1765
  %v1772 = vmul.f32 1.0, %v1771
  %v1773 = vrcp.pop %v1766
  %v1774 = vmul.f32 1.0, %v1773
  %v1775 = vrcp.pop %v1767
  %v1776 = vmul.f32 1.0, %v1775
  %v1777 = vrcp.pop %v1768
  %v1778 = vmul.f32 1.0, %v1777
  %v1779 = vrcp.pop %v1769
  %v1780 = vmul.f32 1.0, %v1779
  %v1781 = vrcp.pop %v1770
  %v1782 = vmul.f32 1.0, %v1781
  %v1783 = vtanh.pop %v1741
  %v1784 = vtanh.pop %v1745
  %v1785 = vmul.f32 %v1774, %v1641
  %v1786 = vmul.f32 %v1780, %v1642
  %v1787 = vmul.f32 %v1772, %v1783
  %v1788 = vmul.f32 %v1778, %v1784
  %v1789 = vadd.f32 %v1785, %v1787
  %v1790 = vadd.f32 %v1786, %v1788
  %v1791 = vtanh.pop %v1789
  %v1792 = vtanh.pop %v1790
  %v1793 = vmul.f32 %v1776, %v1791
  %v1794 = vmul.f32 %v1782, %v1792
  %s1795 = scalar_lea.vmem %s3, 64
  %v1796 = vld [vmem:[%s1795] sm:$0xff]
  %v1797 = vld [vmem:[%s1795 + $0x8] sm:$0xff]
  %vm1798 = vcmp.gt.f32.partialorder %v569, %v1796
  %vm1799 = vcmp.gt.f32.partialorder %v570, %v1797
  %v1800 = vsel %vm1798, 1, 0
  %v1801 = vsel %vm1799, 1, 0
  %1802 = vset.pattern.permute.xlu0 0
  %1803 = vperm.xlu0 %1802, %v1800
  %v1804 = vpop.permute.xlu0 %1803
  %1805 = vset.pattern.permute.xlu0 0
  %1806 = vperm.xlu0 %1805, %v1801
  %v1807 = vpop.permute.xlu0 %1806
  %vm1808 = vcmp.eq.s32.totalorder %v1804, 1
  %vm1809 = vcmp.eq.s32.totalorder %v1807, 1
  %v1810 = vsel %vm1808, %v1793, %v1639
  %v1811 = vsel %vm1809, %v1794, %v1640
  %v1812 = vsel %vm1808, %v1789, %v1641
  %v1813 = vsel %vm1809, %v1790, %v1642
  %v1814 = vsel %vm1808, %v1793, 0.0
  %v1815 = vsel %vm1809, %v1794, 0.0
  %v1816 = vadd.f32 %v1645, %v1814
  %v1817 = vadd.f32 %v1646, %v1815
  %v1818 = vmul.f32 %v1810, %v571
  %v1819 = vmul.f32 %v1810, %v572
  %v1820 = vmul.f32 %v1811, %v573
  %v1821 = vmul.f32 %v1811, %v574
  %v1822 = vpack.c.bf16 %v1820, %v1818
  %v1823 = vpack.c.bf16 %v1821, %v1819
  %v1824 = vld [vmem:[%s1312] sm:$0xff]
  %v1825 = vld [vmem:[%s1312 + $0x8] sm:$0xff]
  %v1826 = vld [vmem:[%s1312 + $0x10] sm:$0xff]
  %v1827 = vld [vmem:[%s1312 + $0x18] sm:$0xff]
  %v1828 = vld [vmem:[%s1307 + $0x20] sm:$0xff]
  %v1829 = vld [vmem:[%s1307 + $0x28] sm:$0xff]
  %v1830 = vld [vmem:[%s1307 + $0x30] sm:$0xff]
  %v1831 = vld [vmem:[%s1307 + $0x38] sm:$0xff]
  %1832 = vmatprep.subr.bf16.mxu0 %v847
  %1833 = vmatpush1.bf16.msra.mxu0 %v846
  %1834 = vmatprep.subr.bf16.mxu0 %v851
  %1835 = vmatpush1.bf16.msra.mxu0 %v850
  %1836 = vmatprep.subr.bf16.mxu0 %v855
  %1837 = vmatpush1.bf16.msra.mxu0 %v854
  %1838 = vmatprep.subr.bf16.mxu0 %v859
  %1839 = vmatpush1.bf16.msra.mxu0 %v858
  %1840 = vmatprep.subr.bf16.mxu0 %v863
  %1841 = vmatpush1.bf16.msra.mxu0 %v862
  %1842 = vmatprep.subr.bf16.mxu0 %v867
  %1843 = vmatpush1.bf16.msra.mxu0 %v866
  %1844 = vmatprep.subr.bf16.mxu0 %v871
  %1845 = vmatpush1.bf16.msra.mxu0 %v870
  %1846 = vmatprep.subr.bf16.mxu0 %v875
  %1847 = vmatpush1.bf16.msra.mxu0 %v874
  %1848 = vmatprep.subr.bf16.mxu0 %v879
  %1849 = vmatpush1.bf16.msra.mxu0 %v878
  %1850 = vmatprep.subr.bf16.mxu0 %v883
  %1851 = vmatpush1.bf16.msra.mxu0 %v882
  %1852 = vmatprep.subr.bf16.mxu0 %v887
  %1853 = vmatpush1.bf16.msra.mxu0 %v886
  %1854 = vmatprep.subr.bf16.mxu0 %v891
  %1855 = vmatpush1.bf16.msra.mxu0 %v890
  %1856 = vmatprep.subr.bf16.mxu0 %v895
  %1857 = vmatpush1.bf16.msra.mxu0 %v894
  %1858 = vmatprep.subr.bf16.mxu0 %v899
  %1859 = vmatpush1.bf16.msra.mxu0 %v898
  %1860 = vmatprep.subr.bf16.mxu0 %v903
  %1861 = vmatpush1.bf16.msra.mxu0 %v902
  %1862 = vmatprep.subr.bf16.mxu0 %v907
  %1863 = vmatpush1.bf16.msra.mxu0 %v906
  %1864 = vmatprep.mubr.bf16.mxu0 %v1823
  %1865 = vmatmul.mubr.bf16.gmra.mrb[0].mxu0 %v1822
  %v1866 = vpop.f32.mrb[0].mxu0
  %v1867 = vadd.f32 %v1824, %v1866
  %v1868 = vpop.f32.mrb[0].mxu0
  %v1869 = vadd.f32 %v1825, %v1868
  %v1870 = vpop.f32.mrb[0].mxu0
  %v1871 = vadd.f32 %v1828, %v1870
  %v1872 = vpop.f32.mrb[0].mxu0
  %v1873 = vadd.f32 %v1829, %v1872
  %1874 = vdwg.mxu0
  %1875 = vmatprep.subr.bf16.mxu0 %v849
  %1876 = vmatpush1.bf16.msra.mxu0 %v848
  %1877 = vmatprep.subr.bf16.mxu0 %v853
  %1878 = vmatpush1.bf16.msra.mxu0 %v852
  %1879 = vmatprep.subr.bf16.mxu0 %v857
  %1880 = vmatpush1.bf16.msra.mxu0 %v856
  %1881 = vmatprep.subr.bf16.mxu0 %v861
  %1882 = vmatpush1.bf16.msra.mxu0 %v860
  %1883 = vmatprep.subr.bf16.mxu0 %v865
  %1884 = vmatpush1.bf16.msra.mxu0 %v864
  %1885 = vmatprep.subr.bf16.mxu0 %v869
  %1886 = vmatpush1.bf16.msra.mxu0 %v868
  %1887 = vmatprep.subr.bf16.mxu0 %v873
  %1888 = vmatpush1.bf16.msra.mxu0 %v872
  %1889 = vmatprep.subr.bf16.mxu0 %v877
  %1890 = vmatpush1.bf16.msra.mxu0 %v876
  %1891 = vmatprep.subr.bf16.mxu0 %v881
  %1892 = vmatpush1.bf16.msra.mxu0 %v880
  %1893 = vmatprep.subr.bf16.mxu0 %v885
  %1894 = vmatpush1.bf16.msra.mxu0 %v884
  %1895 = vmatprep.subr.bf16.mxu0 %v889
  %1896 = vmatpush1.bf16.msra.mxu0 %v888
  %1897 = vmatprep.subr.bf16.mxu0 %v893
  %1898 = vmatpush1.bf16.msra.mxu0 %v892
  %1899 = vmatprep.subr.bf16.mxu0 %v897
  %1900 = vmatpush1.bf16.msra.mxu0 %v896
  %1901 = vmatprep.subr.bf16.mxu0 %v901
  %1902 = vmatpush1.bf16.msra.mxu0 %v900
  %1903 = vmatprep.subr.bf16.mxu0 %v905
  %1904 = vmatpush1.bf16.msra.mxu0 %v904
  %1905 = vmatprep.subr.bf16.mxu0 %v909
  %1906 = vmatpush1.bf16.msra.mxu0 %v908
  %1907 = vmatprep.mubr.bf16.mxu0 %v1823
  %1908 = vmatmul.mubr.bf16.gmra.mrb[0].mxu0 %v1822
  %v1909 = vpop.f32.mrb[0].mxu0
  %v1910 = vadd.f32 %v1826, %v1909
  %v1911 = vpop.f32.mrb[0].mxu0
  %v1912 = vadd.f32 %v1827, %v1911
  %v1913 = vpop.f32.mrb[0].mxu0
  %v1914 = vadd.f32 %v1830, %v1913
  %v1915 = vpop.f32.mrb[0].mxu0
  %v1916 = vadd.f32 %v1831, %v1915
  %1917 = vdwg.mxu0
  %v1918 = vxor.u32 %v1867, 2147483648
  %v1919 = vxor.u32 %v1869, 2147483648
  %v1920 = vxor.u32 %v1910, 2147483648
  %v1921 = vxor.u32 %v1871, 2147483648
  %v1922 = vxor.u32 %v1873, 2147483648
  %v1923 = vxor.u32 %v1914, 2147483648
  %v1924 = vmul.f32 %v1918, 1.442695
  %v1925 = vpow.pop %v1924
  %v1926 = vmul.f32 %v1919, 1.442695
  %v1927 = vpow.pop %v1926
  %v1928 = vmul.f32 %v1920, 1.442695
  %v1929 = vpow.pop %v1928
  %v1930 = vmul.f32 %v1921, 1.442695
  %v1931 = vpow.pop %v1930
  %v1932 = vmul.f32 %v1922, 1.442695
  %v1933 = vpow.pop %v1932
  %v1934 = vmul.f32 %v1923, 1.442695
  %v1935 = vpow.pop %v1934
  %v1936 = vadd.f32 %v1925, 1.0
  %v1937 = vadd.f32 %v1927, 1.0
  %v1938 = vadd.f32 %v1929, 1.0
  %v1939 = vadd.f32 %v1931, 1.0
  %v1940 = vadd.f32 %v1933, 1.0
  %v1941 = vadd.f32 %v1935, 1.0
  %v1942 = vrcp.pop %v1936
  %v1943 = vmul.f32 1.0, %v1942
  %v1944 = vrcp.pop %v1937
  %v1945 = vmul.f32 1.0, %v1944
  %v1946 = vrcp.pop %v1938
  %v1947 = vmul.f32 1.0, %v1946
  %v1948 = vrcp.pop %v1939
  %v1949 = vmul.f32 1.0, %v1948
  %v1950 = vrcp.pop %v1940
  %v1951 = vmul.f32 1.0, %v1950
  %v1952 = vrcp.pop %v1941
  %v1953 = vmul.f32 1.0, %v1952
  %v1954 = vtanh.pop %v1912
  %v1955 = vtanh.pop %v1916
  %v1956 = vmul.f32 %v1945, %v1812
  %v1957 = vmul.f32 %v1951, %v1813
  %v1958 = vmul.f32 %v1943, %v1954
  %v1959 = vmul.f32 %v1949, %v1955
  %v1960 = vadd.f32 %v1956, %v1958
  %v1961 = vadd.f32 %v1957, %v1959
  %v1962 = vtanh.pop %v1960
  %v1963 = vtanh.pop %v1961
  %v1964 = vmul.f32 %v1947, %v1962
  %v1965 = vmul.f32 %v1953, %v1963
  %s1966 = scalar_lea.vmem %s3, 80
  %v1967 = vld [vmem:[%s1966] sm:$0xff]
  %v1968 = vld [vmem:[%s1966 + $0x8] sm:$0xff]
  %vm1969 = vcmp.gt.f32.partialorder %v569, %v1967
  %vm1970 = vcmp.gt.f32.partialorder %v570, %v1968
  %v1971 = vsel %vm1969, 1, 0
  %v1972 = vsel %vm1970, 1, 0
  %1973 = vset.pattern.permute.xlu0 0
  %1974 = vperm.xlu0 %1973, %v1971
  %v1975 = vpop.permute.xlu0 %1974
  %1976 = vset.pattern.permute.xlu0 0
  %1977 = vperm.xlu0 %1976, %v1972
  %v1978 = vpop.permute.xlu0 %1977
  %vm1979 = vcmp.eq.s32.totalorder %v1975, 1
  %vm1980 = vcmp.eq.s32.totalorder %v1978, 1
  %v1981 = vsel %vm1979, %v1964, %v1810
  %v1982 = vsel %vm1980, %v1965, %v1811
  %v1983 = vsel %vm1979, %v1960, %v1812
  %v1984 = vsel %vm1980, %v1961, %v1813
  %v1985 = vsel %vm1979, %v1964, 0.0
  %v1986 = vsel %vm1980, %v1965, 0.0
  %v1987 = vadd.f32 %v1816, %v1985
  %v1988 = vadd.f32 %v1817, %v1986
  %v1989 = vmul.f32 %v1981, %v571
  %v1990 = vmul.f32 %v1981, %v572
  %v1991 = vmul.f32 %v1982, %v573
  %v1992 = vmul.f32 %v1982, %v574
  %v1993 = vpack.c.bf16 %v1991, %v1989
  %v1994 = vpack.c.bf16 %v1992, %v1990
  %v1995 = vld [vmem:[%s1139] sm:$0xff]
  %v1996 = vld [vmem:[%s1139 + $0x8] sm:$0xff]
  %v1997 = vld [vmem:[%s1139 + $0x10] sm:$0xff]
  %v1998 = vld [vmem:[%s1139 + $0x18] sm:$0xff]
  %v1999 = vld [vmem:[%s1134 + $0x20] sm:$0xff]
  %v2000 = vld [vmem:[%s1134 + $0x28] sm:$0xff]
  %v2001 = vld [vmem:[%s1134 + $0x30] sm:$0xff]
  %v2002 = vld [vmem:[%s1134 + $0x38] sm:$0xff]
  %2003 = vmatprep.subr.bf16.mxu0 %v847
  %2004 = vmatpush1.bf16.msra.mxu0 %v846
  %2005 = vmatprep.subr.bf16.mxu0 %v851
  %2006 = vmatpush1.bf16.msra.mxu0 %v850
  %2007 = vmatprep.subr.bf16.mxu0 %v855
  %2008 = vmatpush1.bf16.msra.mxu0 %v854
  %2009 = vmatprep.subr.bf16.mxu0 %v859
  %2010 = vmatpush1.bf16.msra.mxu0 %v858
  %2011 = vmatprep.subr.bf16.mxu0 %v863
  %2012 = vmatpush1.bf16.msra.mxu0 %v862
  %2013 = vmatprep.subr.bf16.mxu0 %v867
  %2014 = vmatpush1.bf16.msra.mxu0 %v866
  %2015 = vmatprep.subr.bf16.mxu0 %v871
  %2016 = vmatpush1.bf16.msra.mxu0 %v870
  %2017 = vmatprep.subr.bf16.mxu0 %v875
  %2018 = vmatpush1.bf16.msra.mxu0 %v874
  %2019 = vmatprep.subr.bf16.mxu0 %v879
  %2020 = vmatpush1.bf16.msra.mxu0 %v878
  %2021 = vmatprep.subr.bf16.mxu0 %v883
  %2022 = vmatpush1.bf16.msra.mxu0 %v882
  %2023 = vmatprep.subr.bf16.mxu0 %v887
  %2024 = vmatpush1.bf16.msra.mxu0 %v886
  %2025 = vmatprep.subr.bf16.mxu0 %v891
  %2026 = vmatpush1.bf16.msra.mxu0 %v890
  %2027 = vmatprep.subr.bf16.mxu0 %v895
  %2028 = vmatpush1.bf16.msra.mxu0 %v894
  %2029 = vmatprep.subr.bf16.mxu0 %v899
  %2030 = vmatpush1.bf16.msra.mxu0 %v898
  %2031 = vmatprep.subr.bf16.mxu0 %v903
  %2032 = vmatpush1.bf16.msra.mxu0 %v902
  %2033 = vmatprep.subr.bf16.mxu0 %v907
  %2034 = vmatpush1.bf16.msra.mxu0 %v906
  %2035 = vmatprep.mubr.bf16.mxu0 %v1994
  %2036 = vmatmul.mubr.bf16.gmra.mrb[0].mxu0 %v1993
  %v2037 = vpop.f32.mrb[0].mxu0
  %v2038 = vadd.f32 %v1995, %v2037
  %v2039 = vpop.f32.mrb[0].mxu0
  %v2040 = vadd.f32 %v1996, %v2039
  %v2041 = vpop.f32.mrb[0].mxu0
  %v2042 = vadd.f32 %v1999, %v2041
  %v2043 = vpop.f32.mrb[0].mxu0
  %v2044 = vadd.f32 %v2000, %v2043
  %2045 = vdwg.mxu0
  %2046 = vmatprep.subr.bf16.mxu0 %v849
  %2047 = vmatpush1.bf16.msra.mxu0 %v848
  %2048 = vmatprep.subr.bf16.mxu0 %v853
  %2049 = vmatpush1.bf16.msra.mxu0 %v852
  %2050 = vmatprep.subr.bf16.mxu0 %v857
  %2051 = vmatpush1.bf16.msra.mxu0 %v856
  %2052 = vmatprep.subr.bf16.mxu0 %v861
  %2053 = vmatpush1.bf16.msra.mxu0 %v860
  %2054 = vmatprep.subr.bf16.mxu0 %v865
  %2055 = vmatpush1.bf16.msra.mxu0 %v864
  %2056 = vmatprep.subr.bf16.mxu0 %v869
  %2057 = vmatpush1.bf16.msra.mxu0 %v868
  %2058 = vmatprep.subr.bf16.mxu0 %v873
  %2059 = vmatpush1.bf16.msra.mxu0 %v872
  %2060 = vmatprep.subr.bf16.mxu0 %v877
  %2061 = vmatpush1.bf16.msra.mxu0 %v876
  %2062 = vmatprep.subr.bf16.mxu0 %v881
  %2063 = vmatpush1.bf16.msra.mxu0 %v880
  %2064 = vmatprep.subr.bf16.mxu0 %v885
  %2065 = vmatpush1.bf16.msra.mxu0 %v884
  %2066 = vmatprep.subr.bf16.mxu0 %v889
  %2067 = vmatpush1.bf16.msra.mxu0 %v888
  %2068 = vmatprep.subr.bf16.mxu0 %v893
  %2069 = vmatpush1.bf16.msra.mxu0 %v892
  %2070 = vmatprep.subr.bf16.mxu0 %v897
  %2071 = vmatpush1.bf16.msra.mxu0 %v896
  %2072 = vmatprep.subr.bf16.mxu0 %v901
  %2073 = vmatpush1.bf16.msra.mxu0 %v900
  %2074 = vmatprep.subr.bf16.mxu0 %v905
  %2075 = vmatpush1.bf16.msra.mxu0 %v904
  %2076 = vmatprep.subr.bf16.mxu0 %v909
  %2077 = vmatpush1.bf16.msra.mxu0 %v908
  %2078 = vmatprep.mubr.bf16.mxu0 %v1994
  %2079 = vmatmul.mubr.bf16.gmra.mrb[0].mxu0 %v1993
  %v2080 = vpop.f32.mrb[0].mxu0
  %v2081 = vadd.f32 %v1997, %v2080
  %v2082 = vpop.f32.mrb[0].mxu0
  %v2083 = vadd.f32 %v1998, %v2082
  %v2084 = vpop.f32.mrb[0].mxu0
  %v2085 = vadd.f32 %v2001, %v2084
  %v2086 = vpop.f32.mrb[0].mxu0
  %v2087 = vadd.f32 %v2002, %v2086
  %2088 = vdwg.mxu0
  %v2089 = vxor.u32 %v2038, 2147483648
  %v2090 = vxor.u32 %v2040, 2147483648
  %v2091 = vxor.u32 %v2081, 2147483648
  %v2092 = vxor.u32 %v2042, 2147483648
  %v2093 = vxor.u32 %v2044, 2147483648
  %v2094 = vxor.u32 %v2085, 2147483648
  %v2095 = vmul.f32 %v2089, 1.442695
  %v2096 = vpow.pop %v2095
  %v2097 = vmul.f32 %v2090, 1.442695
  %v2098 = vpow.pop %v2097
  %v2099 = vmul.f32 %v2091, 1.442695
  %v2100 = vpow.pop %v2099
  %v2101 = vmul.f32 %v2092, 1.442695
  %v2102 = vpow.pop %v2101
  %v2103 = vmul.f32 %v2093, 1.442695
  %v2104 = vpow.pop %v2103
  %v2105 = vmul.f32 %v2094, 1.442695
  %v2106 = vpow.pop %v2105
  %v2107 = vadd.f32 %v2096, 1.0
  %v2108 = vadd.f32 %v2098, 1.0
  %v2109 = vadd.f32 %v2100, 1.0
  %v2110 = vadd.f32 %v2102, 1.0
  %v2111 = vadd.f32 %v2104, 1.0
  %v2112 = vadd.f32 %v2106, 1.0
  %v2113 = vrcp.pop %v2107
  %v2114 = vmul.f32 1.0, %v2113
  %v2115 = vrcp.pop %v2108
  %v2116 = vmul.f32 1.0, %v2115
  %v2117 = vrcp.pop %v2109
  %v2118 = vmul.f32 1.0, %v2117
  %v2119 = vrcp.pop %v2110
  %v2120 = vmul.f32 1.0, %v2119
  %v2121 = vrcp.pop %v2111
  %v2122 = vmul.f32 1.0, %v2121
  %v2123 = vrcp.pop %v2112
  %v2124 = vmul.f32 1.0, %v2123
  %v2125 = vtanh.pop %v2083
  %v2126 = vtanh.pop %v2087
  %v2127 = vmul.f32 %v2116, %v1983
  %v2128 = vmul.f32 %v2122, %v1984
  %v2129 = vmul.f32 %v2114, %v2125
  %v2130 = vmul.f32 %v2120, %v2126
  %v2131 = vadd.f32 %v2127, %v2129
  %v2132 = vadd.f32 %v2128, %v2130
  %v2133 = vtanh.pop %v2131
  %v2134 = vtanh.pop %v2132
  %v2135 = vmul.f32 %v2118, %v2133
  %v2136 = vmul.f32 %v2124, %v2134
  %s2137 = scalar_lea.vmem %s3, 96
  %v2138 = vld [vmem:[%s2137] sm:$0xff]
  %v2139 = vld [vmem:[%s2137 + $0x8] sm:$0xff]
  %vm2140 = vcmp.gt.f32.partialorder %v569, %v2138
  %vm2141 = vcmp.gt.f32.partialorder %v570, %v2139
  %v2142 = vsel %vm2140, 1, 0
  %v2143 = vsel %vm2141, 1, 0
  %2144 = vset.pattern.permute.xlu0 0
  %2145 = vperm.xlu0 %2144, %v2142
  %v2146 = vpop.permute.xlu0 %2145
  %2147 = vset.pattern.permute.xlu0 0
  %2148 = vperm.xlu0 %2147, %v2143
  %v2149 = vpop.permute.xlu0 %2148
  %vm2150 = vcmp.eq.s32.totalorder %v2146, 1
  %vm2151 = vcmp.eq.s32.totalorder %v2149, 1
  %v2152 = vsel %vm2150, %v2135, %v1981
  %v2153 = vsel %vm2151, %v2136, %v1982
  %v2154 = vsel %vm2150, %v2131, %v1983
  %v2155 = vsel %vm2151, %v2132, %v1984
  %v2156 = vsel %vm2150, %v2135, 0.0
  %v2157 = vsel %vm2151, %v2136, 0.0
  %v2158 = vadd.f32 %v1987, %v2156
  %v2159 = vadd.f32 %v1988, %v2157
  %v2160 = vmul.f32 %v2152, %v571
  %v2161 = vmul.f32 %v2152, %v572
  %v2162 = vmul.f32 %v2153, %v573
  %v2163 = vmul.f32 %v2153, %v574
  %v2164 = vpack.c.bf16 %v2162, %v2160
  %v2165 = vpack.c.bf16 %v2163, %v2161
  %v2166 = vld [vmem:[%s649] sm:$0xff]
  %v2167 = vld [vmem:[%s649 + $0x8] sm:$0xff]
  %v2168 = vld [vmem:[%s649 + $0x10] sm:$0xff]
  %v2169 = vld [vmem:[%s649 + $0x18] sm:$0xff]
  %v2170 = vld [vmem:[#allocation2 + $0x20] sm:$0xff]
  %v2171 = vld [vmem:[#allocation2 + $0x28] sm:$0xff]
  %v2172 = vld [vmem:[#allocation2 + $0x30] sm:$0xff]
  %v2173 = vld [vmem:[#allocation2 + $0x38] sm:$0xff]
  %2174 = vmatprep.subr.bf16.mxu0 %v847
  %2175 = vmatpush1.bf16.msra.mxu0 %v846
  %2176 = vmatprep.subr.bf16.mxu0 %v851
  %2177 = vmatpush1.bf16.msra.mxu0 %v850
  %2178 = vmatprep.subr.bf16.mxu0 %v855
  %2179 = vmatpush1.bf16.msra.mxu0 %v854
  %2180 = vmatprep.subr.bf16.mxu0 %v859
  %2181 = vmatpush1.bf16.msra.mxu0 %v858
  %2182 = vmatprep.subr.bf16.mxu0 %v863
  %2183 = vmatpush1.bf16.msra.mxu0 %v862
  %2184 = vmatprep.subr.bf16.mxu0 %v867
  %2185 = vmatpush1.bf16.msra.mxu0 %v866
  %2186 = vmatprep.subr.bf16.mxu0 %v871
  %2187 = vmatpush1.bf16.msra.mxu0 %v870
  %2188 = vmatprep.subr.bf16.mxu0 %v875
  %2189 = vmatpush1.bf16.msra.mxu0 %v874
  %2190 = vmatprep.subr.bf16.mxu0 %v879
  %2191 = vmatpush1.bf16.msra.mxu0 %v878
  %2192 = vmatprep.subr.bf16.mxu0 %v883
  %2193 = vmatpush1.bf16.msra.mxu0 %v882
  %2194 = vmatprep.subr.bf16.mxu0 %v887
  %2195 = vmatpush1.bf16.msra.mxu0 %v886
  %2196 = vmatprep.subr.bf16.mxu0 %v891
  %2197 = vmatpush1.bf16.msra.mxu0 %v890
  %2198 = vmatprep.subr.bf16.mxu0 %v895
  %2199 = vmatpush1.bf16.msra.mxu0 %v894
  %2200 = vmatprep.subr.bf16.mxu0 %v899
  %2201 = vmatpush1.bf16.msra.mxu0 %v898
  %2202 = vmatprep.subr.bf16.mxu0 %v903
  %2203 = vmatpush1.bf16.msra.mxu0 %v902
  %2204 = vmatprep.subr.bf16.mxu0 %v907
  %2205 = vmatpush1.bf16.msra.mxu0 %v906
  %2206 = vmatprep.mubr.bf16.mxu0 %v2165
  %2207 = vmatmul.mubr.bf16.gmra.mrb[0].mxu0 %v2164
  %v2208 = vpop.f32.mrb[0].mxu0
  %v2209 = vadd.f32 %v2166, %v2208
  %v2210 = vpop.f32.mrb[0].mxu0
  %v2211 = vadd.f32 %v2167, %v2210
  %v2212 = vpop.f32.mrb[0].mxu0
  %v2213 = vadd.f32 %v2170, %v2212
  %v2214 = vpop.f32.mrb[0].mxu0
  %v2215 = vadd.f32 %v2171, %v2214
  %2216 = vdwg.mxu0
  %2217 = vmatprep.subr.bf16.mxu0 %v849
  %2218 = vmatpush1.bf16.msra.mxu0 %v848
  %2219 = vmatprep.subr.bf16.mxu0 %v853
  %2220 = vmatpush1.bf16.msra.mxu0 %v852
  %2221 = vmatprep.subr.bf16.mxu0 %v857
  %2222 = vmatpush1.bf16.msra.mxu0 %v856
  %2223 = vmatprep.subr.bf16.mxu0 %v861
  %2224 = vmatpush1.bf16.msra.mxu0 %v860
  %2225 = vmatprep.subr.bf16.mxu0 %v865
  %2226 = vmatpush1.bf16.msra.mxu0 %v864
  %2227 = vmatprep.subr.bf16.mxu0 %v869
  %2228 = vmatpush1.bf16.msra.mxu0 %v868
  %2229 = vmatprep.subr.bf16.mxu0 %v873
  %2230 = vmatpush1.bf16.msra.mxu0 %v872
  %2231 = vmatprep.subr.bf16.mxu0 %v877
  %2232 = vmatpush1.bf16.msra.mxu0 %v876
  %2233 = vmatprep.subr.bf16.mxu0 %v881
  %2234 = vmatpush1.bf16.msra.mxu0 %v880
  %2235 = vmatprep.subr.bf16.mxu0 %v885
  %2236 = vmatpush1.bf16.msra.mxu0 %v884
  %2237 = vmatprep.subr.bf16.mxu0 %v889
  %2238 = vmatpush1.bf16.msra.mxu0 %v888
  %2239 = vmatprep.subr.bf16.mxu0 %v893
  %2240 = vmatpush1.bf16.msra.mxu0 %v892
  %2241 = vmatprep.subr.bf16.mxu0 %v897
  %2242 = vmatpush1.bf16.msra.mxu0 %v896
  %2243 = vmatprep.subr.bf16.mxu0 %v901
  %2244 = vmatpush1.bf16.msra.mxu0 %v900
  %2245 = vmatprep.subr.bf16.mxu0 %v905
  %2246 = vmatpush1.bf16.msra.mxu0 %v904
  %2247 = vmatprep.subr.bf16.mxu0 %v909
  %2248 = vmatpush1.bf16.msra.mxu0 %v908
  %2249 = vmatprep.mubr.bf16.mxu0 %v2165
  %2250 = vmatmul.mubr.bf16.gmra.mrb[0].mxu0 %v2164
  %v2251 = vpop.f32.mrb[0].mxu0
  %v2252 = vadd.f32 %v2168, %v2251
  %v2253 = vpop.f32.mrb[0].mxu0
  %v2254 = vadd.f32 %v2169, %v2253
  %v2255 = vpop.f32.mrb[0].mxu0
  %v2256 = vadd.f32 %v2172, %v2255
  %v2257 = vpop.f32.mrb[0].mxu0
  %v2258 = vadd.f32 %v2173, %v2257
  %2259 = vdwg.mxu0
  %v2260 = vxor.u32 %v2209, 2147483648
  %v2261 = vxor.u32 %v2211, 2147483648
  %v2262 = vxor.u32 %v2252, 2147483648
  %v2263 = vxor.u32 %v2213, 2147483648
  %v2264 = vxor.u32 %v2215, 2147483648
  %v2265 = vxor.u32 %v2256, 2147483648
  %v2266 = vmul.f32 %v2260, 1.442695
  %v2267 = vpow.pop %v2266
  %v2268 = vmul.f32 %v2261, 1.442695
  %v2269 = vpow.pop %v2268
  %v2270 = vmul.f32 %v2262, 1.442695
  %v2271 = vpow.pop %v2270
  %v2272 = vmul.f32 %v2263, 1.442695
  %v2273 = vpow.pop %v2272
  %v2274 = vmul.f32 %v2264, 1.442695
  %v2275 = vpow.pop %v2274
  %v2276 = vmul.f32 %v2265, 1.442695
  %v2277 = vpow.pop %v2276
  %v2278 = vadd.f32 %v2267, 1.0
  %v2279 = vadd.f32 %v2269, 1.0
  %v2280 = vadd.f32 %v2271, 1.0
  %v2281 = vadd.f32 %v2273, 1.0
  %v2282 = vadd.f32 %v2275, 1.0
  %v2283 = vadd.f32 %v2277, 1.0
  %v2284 = vrcp.pop %v2278
  %v2285 = vmul.f32 1.0, %v2284
  %v2286 = vrcp.pop %v2279
  %v2287 = vmul.f32 1.0, %v2286
  %v2288 = vrcp.pop %v2280
  %v2289 = vmul.f32 1.0, %v2288
  %v2290 = vrcp.pop %v2281
  %v2291 = vmul.f32 1.0, %v2290
  %v2292 = vrcp.pop %v2282
  %v2293 = vmul.f32 1.0, %v2292
  %v2294 = vrcp.pop %v2283
  %v2295 = vmul.f32 1.0, %v2294
  %v2296 = vtanh.pop %v2254
  %v2297 = vtanh.pop %v2258
  %v2298 = vmul.f32 %v2287, %v2154
  %v2299 = vmul.f32 %v2293, %v2155
  %v2300 = vmul.f32 %v2285, %v2296
  %v2301 = vmul.f32 %v2291, %v2297
  %v2302 = vadd.f32 %v2298, %v2300
  %v2303 = vadd.f32 %v2299, %v2301
  %v2304 = vtanh.pop %v2302
  %v2305 = vtanh.pop %v2303
  %v2306 = vmul.f32 %v2289, %v2304
  %v2307 = vmul.f32 %v2295, %v2305
  %s2308 = scalar_lea.vmem %s3, 112
  %v2309 = vld [vmem:[%s2308] sm:$0xff]
  %v2310 = vld [vmem:[%s2308 + $0x8] sm:$0xff]
  %vm2311 = vcmp.gt.f32.partialorder %v569, %v2309
  %vm2312 = vcmp.gt.f32.partialorder %v570, %v2310
  %v2313 = vsel %vm2311, 1, 0
  %v2314 = vsel %vm2312, 1, 0
  %2315 = vset.pattern.permute.xlu0 0
  %2316 = vperm.xlu0 %2315, %v2313
  %v2317 = vpop.permute.xlu0 %2316
  %2318 = vset.pattern.permute.xlu0 0
  %2319 = vperm.xlu0 %2318, %v2314
  %v2320 = vpop.permute.xlu0 %2319
  %vm2321 = vcmp.eq.s32.totalorder %v2317, 1
  %vm2322 = vcmp.eq.s32.totalorder %v2320, 1
  %v2323 = vsel %vm2321, %v2306, 0.0
  %v2324 = vsel %vm2322, %v2307, 0.0
  %v2325 = vadd.f32 %v2158, %v2323
  %v2326 = vadd.f32 %v2159, %v2324
  %v2327 = vld [vmem:[#allocation3] sm:$0x1]
  %v2329 = vlaneseq
  %v2330 = vshrl.u32 %v2329, 7
  %v2331 = vsub.s32 0, %v2330
  %v2332 = vrot.slane %v2327, %v2331
  %2333 = vset.pattern.permute.xlu0 0
  %2334 = vperm.xlu0 %2333, %v2332
  %v2335 = vpop.permute.xlu0 %2334
  %v2337 = vmul.f32 %v2325, %v2335
  %v2338 = vmul.f32 %v2326, %v2335
  %v2339 = vpack.c.bf16 %v2337, %v2337
  %v2340 = vpack.c.bf16 %v2338, %v2338
  %v2341 = vld [vmem:[%s9] sm:$0xf]
  %v2342 = vld [vmem:[%s9 + $0x4] sm:$0xf]
  %v2343 = vld [vmem:[%s9 + $0x8] sm:$0xf]
  %v2344 = vld [vmem:[%s9 + $0xc] sm:$0xf]
  %v2345 = vld [vmem:[%s9 + $0x10] sm:$0xf]
  %v2346 = vld [vmem:[%s9 + $0x14] sm:$0xf]
  %v2347 = vld [vmem:[%s9 + $0x18] sm:$0xf]
  %v2348 = vld [vmem:[%s9 + $0x1c] sm:$0xf]
  %v2349 = vld [vmem:[%s9 + $0x20] sm:$0xf]
  %v2350 = vld [vmem:[%s9 + $0x24] sm:$0xf]
  %v2351 = vld [vmem:[%s9 + $0x28] sm:$0xf]
  %v2352 = vld [vmem:[%s9 + $0x2c] sm:$0xf]
  %v2353 = vld [vmem:[%s9 + $0x30] sm:$0xf]
  %v2354 = vld [vmem:[%s9 + $0x34] sm:$0xf]
  %v2355 = vld [vmem:[%s9 + $0x38] sm:$0xf]
  %v2356 = vld [vmem:[%s9 + $0x3c] sm:$0xf]
  %v2357 = vld [vmem:[%s9 + $0x40] sm:$0xf]
  %v2358 = vld [vmem:[%s9 + $0x44] sm:$0xf]
  %v2359 = vld [vmem:[%s9 + $0x48] sm:$0xf]
  %v2360 = vld [vmem:[%s9 + $0x4c] sm:$0xf]
  %v2361 = vld [vmem:[%s9 + $0x50] sm:$0xf]
  %v2362 = vld [vmem:[%s9 + $0x54] sm:$0xf]
  %v2363 = vld [vmem:[%s9 + $0x58] sm:$0xf]
  %v2364 = vld [vmem:[%s9 + $0x5c] sm:$0xf]
  %v2365 = vld [vmem:[%s9 + $0x60] sm:$0xf]
  %v2366 = vld [vmem:[%s9 + $0x64] sm:$0xf]
  %v2367 = vld [vmem:[%s9 + $0x68] sm:$0xf]
  %v2368 = vld [vmem:[%s9 + $0x6c] sm:$0xf]
  %v2369 = vld [vmem:[%s9 + $0x70] sm:$0xf]
  %v2370 = vld [vmem:[%s9 + $0x74] sm:$0xf]
  %v2371 = vld [vmem:[%s9 + $0x78] sm:$0xf]
  %v2372 = vld [vmem:[%s9 + $0x7c] sm:$0xf]
  %v2373 = vld [vmem:[%s5] sm:$0xff]
  %v2374 = vld [vmem:[%s10] sm:$0xff]
  %v2375 = vld [vmem:[%s10 + $0x8] sm:$0xff]
  %v2376 = vld [vmem:[%s10 + $0x10] sm:$0xff]
  %v2377 = vld [vmem:[%s10 + $0x18] sm:$0xff]
  %v2378 = vld [vmem:[%s10 + $0x20] sm:$0x3]
  %vm2379 = vcmask 277504
  %v2381 = vsel %vm2379, %v2373, 0
  %vm2383 = vcmask 1041408
  %v2385 = vsel %vm2383, %v2378, 0
  %2387 = vmatprep.subr.mxu0 0.0
  %2388 = vmatpush1.msra.mxu0 %v2374
  %2389 = vmatprep.subr.mxu0 0.0
  %2390 = vmatpush1.msra.mxu0 %v2375
  %2391 = vmatprep.subr.mxu0 0.0
  %2392 = vmatpush1.msra.mxu0 %v2376
  %2393 = vmatprep.subr.mxu0 0.0
  %2394 = vmatpush1.msra.mxu0 %v2377
  %2395 = vmatprep.subr.mxu0 0.0
  %2396 = vmatpush1.msra.mxu0 %v2385
  %2397 = vmatprep.subr.mxu0 0.0
  %2398 = vmatpush1.msra.mxu0 0.0
  %2399 = vmatprep.subr.mxu0 0.0
  %2400 = vmatpush1.msra.mxu0 0.0
  %2401 = vmatprep.subr.mxu0 0.0
  %2402 = vmatpush1.msra.mxu0 0.0
  %2403 = vmatprep.subr.mxu0 0.0
  %2404 = vmatpush1.msra.mxu0 0.0
  %2405 = vmatprep.subr.mxu0 0.0
  %2406 = vmatpush1.msra.mxu0 0.0
  %2407 = vmatprep.subr.mxu0 0.0
  %2408 = vmatpush1.msra.mxu0 0.0
  %2409 = vmatprep.subr.mxu0 0.0
  %2410 = vmatpush1.msra.mxu0 0.0
  %2411 = vmatprep.subr.mxu0 0.0
  %2412 = vmatpush1.msra.mxu0 0.0
  %2413 = vmatprep.subr.mxu0 0.0
  %2414 = vmatpush1.msra.mxu0 0.0
  %2415 = vmatprep.subr.mxu0 0.0
  %2416 = vmatpush1.msra.mxu0 0.0
  %2417 = vmatprep.subr.mxu0 0.0
  %2418 = vmatpush1.msra.mxu0 0.0
  %2419 = vmatprep.subr.mxu0 0.0
  %2420 = vmatpush1.msra.mxu0 0.0
  %2421 = vmatprep.subr.mxu0 0.0
  %2422 = vmatpush1.msra.mxu0 0.0
  %2423 = vmatprep.subr.mxu0 0.0
  %2424 = vmatpush1.msra.mxu0 0.0
  %2425 = vmatprep.subr.mxu0 0.0
  %2426 = vmatpush1.msra.mxu0 0.0
  %2427 = vmatprep.subr.mxu0 0.0
  %2428 = vmatpush1.msra.mxu0 0.0
  %2429 = vmatprep.subr.mxu0 0.0
  %2430 = vmatpush1.msra.mxu0 0.0
  %2431 = vmatprep.subr.mxu0 0.0
  %2432 = vmatpush1.msra.mxu0 0.0
  %2433 = vmatprep.subr.mxu0 0.0
  %2434 = vmatpush1.msra.mxu0 0.0
  %2435 = vmatprep.subr.mxu0 0.0
  %2436 = vmatpush1.msra.mxu0 0.0
  %2437 = vmatprep.subr.mxu0 0.0
  %2438 = vmatpush1.msra.mxu0 0.0
  %2439 = vmatprep.subr.mxu0 0.0
  %2440 = vmatpush1.msra.mxu0 0.0
  %2441 = vmatprep.subr.mxu0 0.0
  %2442 = vmatpush1.msra.mxu0 0.0
  %2443 = vmatprep.subr.mxu0 0.0
  %2444 = vmatpush1.msra.mxu0 0.0
  %2445 = vmatprep.subr.mxu0 0.0
  %2446 = vmatpush1.msra.mxu0 0.0
  %2447 = vmatprep.subr.mxu0 0.0
  %2448 = vmatpush1.msra.mxu0 0.0
  %2449 = vmatprep.subr.mxu0 0.0
  %2450 = vmatpush1.msra.mxu0 0.0
  %2451 = vmatprep.mubr.f32.mxu0 0.0
  %2452 = vmatmul.mubr.f32.gmra.mrb[0].mxu0 %v2381
  %v2453 = vpop.f32.mrb[0].mxu0
  %v2454 = vadd.f32 0.0, %v2453
  %v2455 = vpop.f32.mrb[0].mxu0
  %2456 = vdwg.mxu0
  %v2489 = vunpack.c.l.b16 %v2341
  %v2490 = vunpack.c.l.b16 %v2342
  %v2491 = vunpack.c.l.b16 %v2343
  %v2492 = vunpack.c.l.b16 %v2344
  %v2493 = vunpack.c.l.b16 %v2345
  %v2494 = vunpack.c.l.b16 %v2346
  %v2495 = vunpack.c.l.b16 %v2347
  %v2496 = vunpack.c.l.b16 %v2348
  %v2497 = vunpack.c.l.b16 %v2349
  %v2498 = vunpack.c.l.b16 %v2350
  %v2499 = vunpack.c.l.b16 %v2351
  %v2500 = vunpack.c.l.b16 %v2352
  %v2501 = vunpack.c.l.b16 %v2353
  %v2502 = vunpack.c.l.b16 %v2354
  %v2503 = vunpack.c.l.b16 %v2355
  %v2504 = vunpack.c.l.b16 %v2356
  %v2505 = vunpack.c.l.b16 %v2357
  %v2506 = vunpack.c.l.b16 %v2358
  %v2507 = vunpack.c.l.b16 %v2359
  %v2508 = vunpack.c.l.b16 %v2360
  %v2509 = vunpack.c.l.b16 %v2361
  %v2510 = vunpack.c.l.b16 %v2362
  %v2511 = vunpack.c.l.b16 %v2363
  %v2512 = vunpack.c.l.b16 %v2364
  %v2513 = vunpack.c.l.b16 %v2365
  %v2514 = vunpack.c.l.b16 %v2366
  %v2515 = vunpack.c.l.b16 %v2367
  %v2516 = vunpack.c.l.b16 %v2368
  %v2517 = vunpack.c.l.b16 %v2369
  %v2518 = vunpack.c.l.b16 %v2370
  %v2519 = vunpack.c.l.b16 %v2371
  %v2520 = vunpack.c.l.b16 %v2372
  %v2521 = vpack.c.b16 %v2490, %v2489
  %v2522 = vpack.c.b16 %v2492, %v2491
  %v2523 = vpack.c.b16 %v2494, %v2493
  %v2524 = vpack.c.b16 %v2496, %v2495
  %v2525 = vpack.c.b16 %v2498, %v2497
  %v2526 = vpack.c.b16 %v2500, %v2499
  %v2527 = vpack.c.b16 %v2502, %v2501
  %v2528 = vpack.c.b16 %v2504, %v2503
  %v2529 = vpack.c.b16 %v2506, %v2505
  %v2530 = vpack.c.b16 %v2508, %v2507
  %v2531 = vpack.c.b16 %v2510, %v2509
  %v2532 = vpack.c.b16 %v2512, %v2511
  %v2533 = vpack.c.b16 %v2514, %v2513
  %v2534 = vpack.c.b16 %v2516, %v2515
  %v2535 = vpack.c.b16 %v2518, %v2517
  %v2536 = vpack.c.b16 %v2520, %v2519
  %2553 = vmatprep.subr.bf16.mxu0 0
  %2554 = vmatpush1.bf16.msra.mxu0 %v2521
  %2555 = vmatprep.subr.bf16.mxu0 0
  %2556 = vmatpush1.bf16.msra.mxu0 %v2522
  %2557 = vmatprep.subr.bf16.mxu0 0
  %2558 = vmatpush1.bf16.msra.mxu0 %v2523
  %2559 = vmatprep.subr.bf16.mxu0 0
  %2560 = vmatpush1.bf16.msra.mxu0 %v2524
  %2561 = vmatprep.subr.bf16.mxu0 0
  %2562 = vmatpush1.bf16.msra.mxu0 %v2525
  %2563 = vmatprep.subr.bf16.mxu0 0
  %2564 = vmatpush1.bf16.msra.mxu0 %v2526
  %2565 = vmatprep.subr.bf16.mxu0 0
  %2566 = vmatpush1.bf16.msra.mxu0 %v2527
  %2567 = vmatprep.subr.bf16.mxu0 0
  %2568 = vmatpush1.bf16.msra.mxu0 %v2528
  %2569 = vmatprep.subr.bf16.mxu0 0
  %2570 = vmatpush1.bf16.msra.mxu0 %v2529
  %2571 = vmatprep.subr.bf16.mxu0 0
  %2572 = vmatpush1.bf16.msra.mxu0 %v2530
  %2573 = vmatprep.subr.bf16.mxu0 0
  %2574 = vmatpush1.bf16.msra.mxu0 %v2531
  %2575 = vmatprep.subr.bf16.mxu0 0
  %2576 = vmatpush1.bf16.msra.mxu0 %v2532
  %2577 = vmatprep.subr.bf16.mxu0 0
  %2578 = vmatpush1.bf16.msra.mxu0 %v2533
  %2579 = vmatprep.subr.bf16.mxu0 0
  %2580 = vmatpush1.bf16.msra.mxu0 %v2534
  %2581 = vmatprep.subr.bf16.mxu0 0
  %2582 = vmatpush1.bf16.msra.mxu0 %v2535
  %2583 = vmatprep.subr.bf16.mxu0 0
  %2584 = vmatpush1.bf16.msra.mxu0 %v2536
  %2585 = vmatprep.mubr.bf16.mxu0 %v2340
  %2586 = vmatmul.mubr.bf16.gmra.mrb[0].mxu0 %v2339
  %v2587 = vpop.f32.mrb[0].mxu0
  %v2588 = vadd.f32 %v2454, %v2587
  %v2589 = vpop.f32.mrb[0].mxu0
  %v2590 = vpop.f32.mrb[0].mxu0
  %v2591 = vpop.f32.mrb[0].mxu0
  %2592 = vdwg.mxu0
  %v2593 = vld [vmem:[%s11] sm:$0x1]
  %v2595 = vlaneseq
  %v2596 = vshrl.u32 %v2595, 7
  %v2597 = vsub.s32 0, %v2596
  %v2598 = vrot.slane %v2593, %v2597
  %v2600 = vadd.f32 %v2588, %v2598
  %v2601 = vmax.f32 %v2600, 0.0
  %v2602 = vld [vmem:[%s13] sm:$0xff]
  %v2603 = vadd.f32 %v2601, %v2602
  %v2604 = vld [vmem:[%s12] sm:$0xff]
  %v2605 = vsub.f32 %v2603, %v2604
  %v2606 = vand.u32 2147483647, %v2605
  %v2607 = vsel %vm200, %v2606, 0.0
  %2608 = vadd.xlane.f32.xlu0 %v2607
  %v2609 = vpop.xlane.xlu0 %2608
  %v2610 = vsub.f32 12.0, %v2609
  %vm2611 = vcmask 7168
  %2612 = vst.msk [vmem:[%s14] sm:$0xff] %vm2611, %v2610
  // Predicated region
  $region58: #{kge_forward_single.1} parent=0 // pred_check
    _
  $region59: #{kge_forward_single.1} parent=0 // pred_check_branch
    %2614 = sbr.rel (0) target = $region61
  $region60: #{kge_forward_single.1} parent=0 // pred_region
    _
  $region61: #{kge_forward_single.1} parent=0 // pred_fallthru
    _
  // Predicated region
  $region62: #{kge_forward_single.1} parent=0 // pred_check
    _
  $region63: #{kge_forward_single.1} parent=0 // pred_check_branch
    %2616 = sbr.rel (0) target = $region65
  $region64: #{kge_forward_single.1} parent=0 // pred_region
    _
  $region65: #{kge_forward_single.1} parent=0 // pred_fallthru
    _

</llo_original>
